<compile_context>
chip_gen: v7x
topology: tpu7x:2x2x1
jax: 0.10.0
libtpu: 0.0.40
codegen_flags: <defaults>
</compile_context>

<pallas_src>
import functools
import math

import jax
import jax.numpy as jnp
import numpy as np
from jax.experimental import pallas as pl
from jax.experimental.pallas import tpu as pltpu


# ---------------------------------------------------------------------------
# Tiled linear kernel (embedding "norm" Linear and output Linear)
# ---------------------------------------------------------------------------

def _linear_kernel(*refs, has_bias, has_add):
    x_ref, w_ref = refs[0], refs[1]
    idx = 2
    b_ref = add_ref = None
    if has_bias:
        b_ref = refs[idx]; idx += 1
    if has_add:
        add_ref = refs[idx]; idx += 1
    o_ref = refs[idx]
    y = jnp.dot(x_ref[...].astype(jnp.bfloat16), w_ref[...],
                preferred_element_type=jnp.float32)
    if has_bias:
        y = y + b_ref[...]
    if has_add:
        y = y + add_ref[...]
    o_ref[...] = y


def _pick_block_m(M, target=256):
    """Largest row block <= target that divides M and respects the 8-sublane rule."""
    bm = min(target, M)
    bm -= bm % 8
    while bm >= 8 and M % bm:
        bm -= 8
    if bm < 8:
        return M                      # ragged / tiny M: single full block
    if bm == M and M >= 16 and M % 16 == 0:
        bm = M // 2                   # >= 2 parallel blocks (2 TensorCores on v7x)
    return bm


def linear_pallas(x, w, b=None, add=None, block_m=256):
    """y = x @ w + b + add; x f32 (M,K), w bf16 (K,N).  N is padded to 128 lanes."""
    M, K = x.shape
    N = w.shape[1]
    Np = ((N + 127) // 128) * 128      # lane-dense output stores
    if Np != N:
        w = jnp.pad(w, ((0, 0), (0, Np - N)))
        if b is not None:
            b = jnp.pad(b, (0, Np - N))
        if add is not None:
            add = jnp.pad(add, ((0, 0), (0, Np - N)))
    bm = _pick_block_m(M, block_m)
    in_specs = [pl.BlockSpec((bm, K), lambda i: (i, 0)),
                pl.BlockSpec((K, Np), lambda i: (0, 0))]
    args = [x, w]
    if b is not None:
        in_specs.append(pl.BlockSpec((1, Np), lambda i: (0, 0)))
        args.append(b.reshape(1, Np))
    if add is not None:
        in_specs.append(pl.BlockSpec((bm, Np), lambda i: (i, 0)))
        args.append(add)
    y = pl.pallas_call(
        functools.partial(_linear_kernel, has_bias=b is not None,
                          has_add=add is not None),
        out_shape=jax.ShapeDtypeStruct((M, Np), jnp.float32),
        grid=(M // bm,),
        in_specs=in_specs,
        out_specs=pl.BlockSpec((bm, Np), lambda i: (i, 0)),
        compiler_params=pltpu.CompilerParams(dimension_semantics=("parallel",)),
    )(*args)
    return y[:, :N] if Np != N else y


# ---------------------------------------------------------------------------
# Fused decoder-stack kernel: grid = (batch, layer), layers innermost.
# One grid step = one full decoder block (self-attn -> cross-attn -> FFN)
# for one batch element; the activation lives in the revisited output block.
# ---------------------------------------------------------------------------

def _decoder_layer_kernel(
    dec_ref, mem_ref,
    # self-attention (head-major weights)
    wq_s, wk_s, wv_s, wfx_s, wfc_s, bf_s, g1, be1,
    # cross-attention
    wq_c, wk_c, wv_c, wfx_c, wfc_c, bf_c, g2, be2,
    # FFN
    w1, c1, w2, c2, g3, be3,
    # outputs
    out_ref, attn_dec_ref, attn_dot_ref,
    *, heads, eps, ffn_chunk):
    bf16 = jnp.bfloat16
    Sd, E = out_ref.shape[1], out_ref.shape[2]
    d = E // heads
    scale = 1.0 / math.sqrt(d)
    neg_fill = jnp.float32(-2.0 ** 32 + 1)          # torch masked_fill value

    def layer_norm(y, g_ref, b_ref):
        mu = jnp.mean(y, axis=-1, keepdims=True)
        var = jnp.mean(jnp.square(y - mu), axis=-1, keepdims=True)
        return (y - mu) * jax.lax.rsqrt(var + eps) * g_ref[0] + b_ref[0]

    def attention(x16, src16, wq, wk, wv, wfx, wfc, bf, attn_ref, causal):
        # cat([x, ctx]) @ Wf  ==  x @ Wf[:E]  +  sum_h ctx_h @ Wf[E + h*d : ...]
        proj0 = jnp.dot(x16, wfx[0], preferred_element_type=jnp.float32)

        def head_body(h, proj):
            qh = jnp.dot(x16, wq[0, h], preferred_element_type=jnp.float32).astype(bf16)
            kh = jnp.dot(src16, wk[0, h], preferred_element_type=jnp.float32).astype(bf16)
            vh = jnp.dot(src16, wv[0, h], preferred_element_type=jnp.float32).astype(bf16)
            s = jax.lax.dot_general(qh, kh, (((1,), (1,)), ((), ())),
                                    preferred_element_type=jnp.float32) * scale
            if causal:   # strictly-upper-triangular mask, generated in-kernel
                row = jax.lax.broadcasted_iota(jnp.int32, s.shape, 0)
                col = jax.lax.broadcasted_iota(jnp.int32, s.shape, 1)
                s = jnp.where(col > row, neg_fill, s)
            s = s - jnp.max(s, axis=-1, keepdims=True)
            e = jnp.exp(s)
            pr = e * pl.reciprocal(jnp.sum(e, axis=-1, keepdims=True), approx=True)
            p16 = pr.astype(bf16)
            attn_ref[0, h, 0] = p16                  # bf16 attention map, head h
            ctx = jnp.dot(p16, vh, preferred_element_type=jnp.float32).astype(bf16)
            return proj + jnp.dot(ctx, wfc[0, h], preferred_element_type=jnp.float32)

        proj = jax.lax.fori_loop(0, heads, head_body, proj0)
        return proj + bf[0]

    # Layer 0: load this batch element's input activation into the resident
    # output block; subsequent layers read the previous layer's result from it.
    @pl.when(pl.program_id(1) == 0)
    def _():
        out_ref[...] = dec_ref[...]

    x = out_ref[0]                                   # (Sd, E) float32

    # ---------------- masked self-attention ----------------
    x16 = x.astype(bf16)
    proj = attention(x16, x16, wq_s, wk_s, wv_s, wfx_s, wfc_s, bf_s,
                     attn_dec_ref, causal=True)
    x = layer_norm(proj + x, g1, be1)

    # ------------- cross-attention (K/V from memory, Q from x) -------------
    x16 = x.astype(bf16)
    m16 = mem_ref[0].astype(bf16)
    proj = attention(x16, m16, wq_c, wk_c, wv_c, wfx_c, wfc_c, bf_c,
                     attn_dot_ref, causal=False)
    x = layer_norm(proj + x, g2, be2)

    # ---------------- position-wise FFN (row-tiled) ----------------
    out_ref[0] = x                                   # stage pre-FFN activation
    n_chunks = Sd // ffn_chunk

    def ffn_body(i, carry):
        r0 = pl.multiple_of(i * ffn_chunk, ffn_chunk)
        xr = out_ref[0, pl.ds(r0, ffn_chunk), :]
        h1 = jnp.maximum(
            jnp.dot(xr.astype(bf16), w1[0], preferred_element_type=jnp.float32)
            + c1[0], 0.0)
        y = (jnp.dot(h1.astype(bf16), w2[0], preferred_element_type=jnp.float32)
             + c2[0] + xr)
        out_ref[0, pl.ds(r0, ffn_chunk), :] = layer_norm(y, g3, be3)
        return carry

    jax.lax.fori_loop(0, n_chunks, ffn_body, 0)


def _pick_ffn_chunk(S, target=256):
    c = min(target, S)
    c -= c % 8
    while c >= 8 and S % c:
        c -= 8
    return c if (c >= 8 and S % c == 0) else S


def decoder_stack_pallas(dec, memory, params, *, heads, eps=1e-5):
    B, Sd, E = dec.shape
    Sm = memory.shape[1]
    L = params["wq_s"].shape[0]
    ffn_chunk = _pick_ffn_chunk(Sd)

    weight_names = ["wq_s", "wk_s", "wv_s", "wfx_s", "wfc_s", "bf_s", "g1", "be1",
                    "wq_c", "wk_c", "wv_c", "wfx_c", "wfc_c", "bf_c", "g2", "be2",
                    "w1", "c1", "w2", "c2", "g3", "be3"]
    weights = [params[n] for n in weight_names]

    def wspec(arr):
        nd = arr.ndim
        return pl.BlockSpec((1,) + arr.shape[1:],
                            lambda b, l, _nd=nd: (l,) + (0,) * (_nd - 1))

    in_specs = ([pl.BlockSpec((1, Sd, E), lambda b, l: (b, 0, 0)),
                 pl.BlockSpec((1, Sm, E), lambda b, l: (b, 0, 0))]
                + [wspec(w) for w in weights])

    out_shape = (
        jax.ShapeDtypeStruct((B, Sd, E), jnp.float32),
        jax.ShapeDtypeStruct((L, heads, B, Sd, Sd), jnp.bfloat16),  # head-major attn
        jax.ShapeDtypeStruct((L, heads, B, Sd, Sm), jnp.bfloat16),
    )
    out_specs = (
        pl.BlockSpec((1, Sd, E), lambda b, l: (b, 0, 0)),           # resident over l
        pl.BlockSpec((1, heads, 1, Sd, Sd), lambda b, l: (l, 0, b, 0, 0)),
        pl.BlockSpec((1, heads, 1, Sd, Sm), lambda b, l: (l, 0, b, 0, 0)),
    )

    # Scoped-VMEM budget from the actual per-step block footprint (double-buffered),
    # clamped to [32 MiB, 64 MiB] so it is valid on v5e/v6e/v7x.
    weight_block_bytes = sum(int(np.prod(w.shape[1:])) * w.dtype.itemsize
                             for w in weights)
    act_bytes = Sd * E * 4 + Sm * E * memory.dtype.itemsize + Sd * E * 4
    attn_bytes = heads * Sd * (Sd + Sm) * 2
    est = 2 * (weight_block_bytes + act_bytes + attn_bytes)
    vmem_limit = int(min(max(2 * est, 32 * 1024 * 1024), 64 * 1024 * 1024))

    out, attn_dec, attn_dot = pl.pallas_call(
        functools.partial(_decoder_layer_kernel, heads=heads, eps=eps,
                          ffn_chunk=ffn_chunk),
        out_shape=out_shape,
        grid=(B, L),
        in_specs=in_specs,
        out_specs=out_specs,
        compiler_params=pltpu.CompilerParams(
            dimension_semantics=("parallel", "arbitrary"),
            vmem_limit_bytes=vmem_limit),
    )(dec, memory, *weights)
    return out, attn_dec, attn_dot


# ---------------------------------------------------------------------------
# Module-level forward (gathers in XLA, everything else in Pallas)
# ---------------------------------------------------------------------------

def get_sinusoid_encoding_table(n_position, d_hid, padding_idx=0):
    pos = np.arange(n_position, dtype=np.float64)[:, None]
    idx = np.arange(d_hid)[None, :]
    angle = pos / np.power(10000.0, 2.0 * (idx // 2) / d_hid)
    table = np.zeros((n_position, d_hid), dtype=np.float64)
    table[:, 0::2] = np.sin(angle[:, 0::2])
    table[:, 1::2] = np.cos(angle[:, 1::2])
    if padding_idx is not None:
        table[padding_idx] = 0.0
    return jnp.asarray(table, jnp.float32)


def decoder_forward(params, memory, decoder_tokens, c_mask, pos, *, heads):
    """Eval-mode forward of the PyTorch Decoder (c_mask/m_mask only matter in training)."""
    B, Sd = decoder_tokens.shape
    Sm = memory.shape[1]
    E = params["embed"].shape[1]

    # TODO(synk): embedding / positional-table lookups are data-dependent gathers;
    # they stay in XLA (jnp.take) rather than a Pallas kernel.
    dec = jnp.take(params["embed"], decoder_tokens, axis=0)        # (B,Sd,E)
    pos_e = jnp.take(params["pos_emb"], pos, axis=0)               # (B,Sd,E)

    # fused "norm" Linear + bias + positional add (pos_dropout identity in eval)
    dec = linear_pallas(dec.reshape(B * Sd, E), params["norm_w"], params["norm_b"],
                        add=pos_e.reshape(B * Sd, E)).reshape(B, Sd, E)

    # memory is only ever consumed as bf16 K/V source -> cast once here
    mem16 = memory.astype(jnp.bfloat16)

    out_act, attn_dec_all, attn_dot_all = decoder_stack_pallas(
        dec, mem16, params, heads=heads)

    L = attn_dec_all.shape[0]
    # (heads, B, Sq, Sk) -> (heads*B, Sq, Sk): contiguous reshape, matches the
    # torch head-major (permute(2,0,1,3).view(-1, ...)) attention layout.
    attn_dec_list = [attn_dec_all[l].reshape(heads * B, Sd, Sd) for l in range(L)]
    attn_dot_list = [attn_dot_all[l].reshape(heads * B, Sd, Sm) for l in range(L)]

    out = linear_pallas(out_act.reshape(B * Sd, E), params["out_w"],
                        params["out_b"]).reshape(B, Sd, -1)
    return out, attn_dot_list, attn_dec_list


# ---------------------------------------------------------------------------
# Deterministic parameter init (shapes per the PyTorch __init__, but stacked
# over layers with a leading L axis and head-major attention weights)
# ---------------------------------------------------------------------------

def init_params(key, vocab_size, E, heads, num_block, output_size):
    d = E // heads
    L = num_block
    keys = iter(jax.random.split(key, 24))
    bf16 = jnp.bfloat16

    def nrm(shape, scale=0.1, dtype=bf16):
        return (scale * jax.random.normal(next(keys), shape, jnp.float32)).astype(dtype)

    def zeros(shape):
        return jnp.zeros(shape, jnp.float32)

    def ones(shape):
        return jnp.ones(shape, jnp.float32)

    embed = 0.1 * jax.random.normal(next(keys), (vocab_size, E), jnp.float32)
    embed = embed.at[0].set(0.0)                                   # padding_idx=0

    params = {
        "embed": embed,
        "pos_emb": get_sinusoid_encoding_table(1024, E, padding_idx=0),
        "norm_w": nrm((E, E)), "norm_b": zeros((E,)),
        "out_w": nrm((E, output_size)), "out_b": zeros((output_size,)),
        # ---- self-attention (per-layer, head-major, bias-free Q/K/V) ----
        "wq_s": nrm((L, heads, E, d)), "wk_s": nrm((L, heads, E, d)),
        "wv_s": nrm((L, heads, E, d)),
        "wfx_s": nrm((L, E, E)), "wfc_s": nrm((L, heads, d, E)),   # Linear(2E,E) split
        "bf_s": zeros((L, 1, E)),
        "g1": ones((L, 1, E)), "be1": zeros((L, 1, E)),
        # ---- cross-attention ----
        "wq_c": nrm((L, heads, E, d)), "wk_c": nrm((L, heads, E, d)),
        "wv_c": nrm((L, heads, E, d)),
        "wfx_c": nrm((L, E, E)), "wfc_c": nrm((L, heads, d, E)),
        "bf_c": zeros((L, 1, E)),
        "g2": ones((L, 1, E)), "be2": zeros((L, 1, E)),
        # ---- FFN ----
        "w1": nrm((L, E, 4 * E)), "c1": zeros((L, 1, 4 * E)),
        "w2": nrm((L, 4 * E, E)), "c2": zeros((L, 1, E)),
        "g3": ones((L, 1, E)), "be3": zeros((L, 1, E)),
    }
    return params


# ---------------------------------------------------------------------------

if __name__ == "__main__":
    VOCAB, E, HEADS, NUM_BLOCK, OUT_SIZE = 20, 32, 4, 2, 16
    B, S_DEC, S_MEM = 2, 8, 8

    root = jax.random.PRNGKey(0)
    k_param, k_mem, k_tok = jax.random.split(root, 3)

    params = init_params(k_param, VOCAB, E, HEADS, NUM_BLOCK, OUT_SIZE)

    memory = jax.random.normal(k_mem, (B, S_MEM, E), jnp.float32)
    decoder_tokens = jax.random.randint(k_tok, (B, S_DEC), 1, VOCAB)
    c_mask = jnp.ones((B, S_MEM), jnp.float32)                     # unused in eval
    pos = jnp.broadcast_to(jnp.arange(1, S_DEC + 1), (B, S_DEC))

    fwd = jax.jit(functools.partial(decoder_forward, heads=HEADS))
    out, attn_dot_list, attn_dec_list = fwd(params, memory, decoder_tokens, c_mask, pos)

    jax.block_until_ready(out)
    for a in attn_dot_list + attn_dec_list:
        jax.block_until_ready(a)

    assert out.shape == (B, S_DEC, OUT_SIZE)
    assert len(attn_dot_list) == NUM_BLOCK and len(attn_dec_list) == NUM_BLOCK
    assert attn_dec_list[0].shape == (HEADS * B, S_DEC, S_DEC)
    assert attn_dot_list[0].shape == (HEADS * B, S_DEC, S_MEM)
    assert bool(jnp.all(jnp.isfinite(out)))
    assert bool(jnp.all(jnp.isfinite(attn_dec_list[0].astype(jnp.float32))))
    print("KERNEL_OK")
</pallas_src>

<mosaic_0001>
module attributes {stable_mosaic.version = 11 : i64} {
  func.func @_linear_kernel(%arg0: i32, %arg1: memref<8x32xf32, #tpu.memory_space<vmem>>, %arg2: memref<32x128xbf16, #tpu.memory_space<vmem>>, %arg3: memref<1x128xf32, #tpu.memory_space<vmem>>, %arg4: memref<8x128xf32, #tpu.memory_space<vmem>>, %arg5: memref<8x128xf32, #tpu.memory_space<vmem>>) attributes {dimension_semantics = [#tpu.dimension_semantics<parallel>], iteration_bounds = array<i64: 2>, scalar_prefetch = 0 : i64, scratch_operands = 0 : i64, tpu.core_type = #tpu.core_type<tc>, window_params = [{transform_indices = @transform_0, window_bounds = array<i64: 8, 32>}, {pipeline_mode = #tpu.pipeline_mode<synchronous>, transform_indices = @transform_1, window_bounds = array<i64: 32, 128>}, {pipeline_mode = #tpu.pipeline_mode<synchronous>, transform_indices = @transform_2, window_bounds = array<i64: 1, 128>}, {transform_indices = @transform_3, window_bounds = array<i64: 8, 128>}, {transform_indices = @transform_4, window_bounds = array<i64: 8, 128>}]} {
    %c0 = arith.constant 0 : index
    %c0_0 = arith.constant 0 : index
    %0 = vector.load %arg1[%c0, %c0_0] : memref<8x32xf32, #tpu.memory_space<vmem>>, vector<8x32xf32>
    %1 = arith.truncf %0 : vector<8x32xf32> to vector<8x32xbf16>
    %c0_1 = arith.constant 0 : index
    %c0_2 = arith.constant 0 : index
    %2 = vector.load %arg2[%c0_1, %c0_2] : memref<32x128xbf16, #tpu.memory_space<vmem>>, vector<32x128xbf16>
    %cst = arith.constant dense<0.000000e+00> : vector<8x128xf32>
    %3 = tpu.matmul %1, %2, %cst {dimension_numbers = #tpu.dot_dimension_numbers<[1], [0], [0], [1], [0, 0, 1, 1], [], []>} : vector<8x32xbf16>, vector<32x128xbf16>, vector<8x128xf32> -> vector<8x128xf32>
    %c0_3 = arith.constant 0 : index
    %c0_4 = arith.constant 0 : index
    %4 = vector.load %arg3[%c0_3, %c0_4] : memref<1x128xf32, #tpu.memory_space<vmem>>, vector<1x128xf32>
    %5 = vector.broadcast %4 : vector<1x128xf32> to vector<8x128xf32>
    %6 = arith.addf %3, %5 : vector<8x128xf32>
    %c0_5 = arith.constant 0 : index
    %c0_6 = arith.constant 0 : index
    %7 = vector.load %arg4[%c0_5, %c0_6] : memref<8x128xf32, #tpu.memory_space<vmem>>, vector<8x128xf32>
    %8 = arith.addf %6, %7 : vector<8x128xf32>
    %c0_7 = arith.constant 0 : index
    %c0_8 = arith.constant 0 : index
    %9 = vector.load %arg5[%c0_7, %c0_8] : memref<8x128xf32, #tpu.memory_space<vmem>>, vector<8x128xf32>
    tpu.vector_store %arg5[%c0_7, %c0_8], %8 {strides = array<i32>} : memref<8x128xf32, #tpu.memory_space<vmem>>, vector<8x128xf32>,
    return
  }
  func.func @transform_0(%arg0: i32) -> (i32, i32) {
    %c0_i32 = arith.constant 0 : i32
    %c0_i32_0 = arith.constant 0 : i32
    return %arg0, %c0_i32 : i32, i32
  }
  func.func @transform_1(%arg0: i32) -> (i32, i32) {
    %c0_i32 = arith.constant 0 : i32
    %c0_i32_0 = arith.constant 0 : i32
    %c0_i32_1 = arith.constant 0 : i32
    return %c0_i32, %c0_i32_0 : i32, i32
  }
  func.func @transform_2(%arg0: i32) -> (i32, i32) {
    %c0_i32 = arith.constant 0 : i32
    %c0_i32_0 = arith.constant 0 : i32
    %c0_i32_1 = arith.constant 0 : i32
    return %c0_i32, %c0_i32_0 : i32, i32
  }
  func.func @transform_3(%arg0: i32) -> (i32, i32) {
    %c0_i32 = arith.constant 0 : i32
    %c0_i32_0 = arith.constant 0 : i32
    return %arg0, %c0_i32 : i32, i32
  }
  func.func @transform_4(%arg0: i32) -> (i32, i32) {
    %c0_i32 = arith.constant 0 : i32
    %c0_i32_0 = arith.constant 0 : i32
    return %arg0, %c0_i32 : i32, i32
  }
}

module attributes {stable_mosaic.version = 11 : i64} {
  func.func @_linear_kernel(%arg0: i32, %arg1: memref<8x32xf32, #tpu.memory_space<vmem>>, %arg2: memref<32x128xbf16, #tpu.memory_space<vmem>>, %arg3: memref<1x128xf32, #tpu.memory_space<vmem>>, %arg4: memref<8x128xf32, #tpu.memory_space<vmem>>) attributes {dimension_semantics = [#tpu.dimension_semantics<parallel>], iteration_bounds = array<i64: 2>, scalar_prefetch = 0 : i64, scratch_operands = 0 : i64, tpu.core_type = #tpu.core_type<tc>, window_params = [{transform_indices = @transform_0, window_bounds = array<i64: 8, 32>}, {pipeline_mode = #tpu.pipeline_mode<synchronous>, transform_indices = @transform_1, window_bounds = array<i64: 32, 128>}, {pipeline_mode = #tpu.pipeline_mode<synchronous>, transform_indices = @transform_2, window_bounds = array<i64: 1, 128>}, {transform_indices = @transform_3, window_bounds = array<i64: 8, 128>}]} {
    %c0 = arith.constant 0 : index
    %c0_0 = arith.constant 0 : index
    %0 = vector.load %arg1[%c0, %c0_0] : memref<8x32xf32, #tpu.memory_space<vmem>>, vector<8x32xf32>
    %1 = arith.truncf %0 : vector<8x32xf32> to vector<8x32xbf16>
    %c0_1 = arith.constant 0 : index
    %c0_2 = arith.constant 0 : index
    %2 = vector.load %arg2[%c0_1, %c0_2] : memref<32x128xbf16, #tpu.memory_space<vmem>>, vector<32x128xbf16>
    %cst = arith.constant dense<0.000000e+00> : vector<8x128xf32>
    %3 = tpu.matmul %1, %2, %cst {dimension_numbers = #tpu.dot_dimension_numbers<[1], [0], [0], [1], [0, 0, 1, 1], [], []>} : vector<8x32xbf16>, vector<32x128xbf16>, vector<8x128xf32> -> vector<8x128xf32>
    %c0_3 = arith.constant 0 : index
    %c0_4 = arith.constant 0 : index
    %4 = vector.load %arg3[%c0_3, %c0_4] : memref<1x128xf32, #tpu.memory_space<vmem>>, vector<1x128xf32>
    %5 = vector.broadcast %4 : vector<1x128xf32> to vector<8x128xf32>
    %6 = arith.addf %3, %5 : vector<8x128xf32>
    %c0_5 = arith.constant 0 : index
    %c0_6 = arith.constant 0 : index
    %7 = vector.load %arg4[%c0_5, %c0_6] : memref<8x128xf32, #tpu.memory_space<vmem>>, vector<8x128xf32>
    tpu.vector_store %arg4[%c0_5, %c0_6], %6 {strides = array<i32>} : memref<8x128xf32, #tpu.memory_space<vmem>>, vector<8x128xf32>,
    return
  }
  func.func @transform_0(%arg0: i32) -> (i32, i32) {
    %c0_i32 = arith.constant 0 : i32
    %c0_i32_0 = arith.constant 0 : i32
    return %arg0, %c0_i32 : i32, i32
  }
  func.func @transform_1(%arg0: i32) -> (i32, i32) {
    %c0_i32 = arith.constant 0 : i32
    %c0_i32_0 = arith.constant 0 : i32
    %c0_i32_1 = arith.constant 0 : i32
    return %c0_i32, %c0_i32_0 : i32, i32
  }
  func.func @transform_2(%arg0: i32) -> (i32, i32) {
    %c0_i32 = arith.constant 0 : i32
    %c0_i32_0 = arith.constant 0 : i32
    %c0_i32_1 = arith.constant 0 : i32
    return %c0_i32, %c0_i32_0 : i32, i32
  }
  func.func @transform_3(%arg0: i32) -> (i32, i32) {
    %c0_i32 = arith.constant 0 : i32
    %c0_i32_0 = arith.constant 0 : i32
    return %arg0, %c0_i32 : i32, i32
  }
}

module attributes {stable_mosaic.version = 11 : i64} {
  func.func @_decoder_layer_kernel(%arg0: i32, %arg1: i32, %arg2: memref<1x8x32xf32, #tpu.memory_space<vmem>>, %arg3: memref<1x8x32xbf16, #tpu.memory_space<vmem>>, %arg4: memref<1x4x32x8xbf16, #tpu.memory_space<vmem>>, %arg5: memref<1x4x32x8xbf16, #tpu.memory_space<vmem>>, %arg6: memref<1x4x32x8xbf16, #tpu.memory_space<vmem>>, %arg7: memref<1x32x32xbf16, #tpu.memory_space<vmem>>, %arg8: memref<1x4x8x32xbf16, #tpu.memory_space<vmem>>, %arg9: memref<1x1x32xf32, #tpu.memory_space<vmem>>, %arg10: memref<1x1x32xf32, #tpu.memory_space<vmem>>, %arg11: memref<1x1x32xf32, #tpu.memory_space<vmem>>, %arg12: memref<1x4x32x8xbf16, #tpu.memory_space<vmem>>, %arg13: memref<1x4x32x8xbf16, #tpu.memory_space<vmem>>, %arg14: memref<1x4x32x8xbf16, #tpu.memory_space<vmem>>, %arg15: memref<1x32x32xbf16, #tpu.memory_space<vmem>>, %arg16: memref<1x4x8x32xbf16, #tpu.memory_space<vmem>>, %arg17: memref<1x1x32xf32, #tpu.memory_space<vmem>>, %arg18: memref<1x1x32xf32, #tpu.memory_space<vmem>>, %arg19: memref<1x1x32xf32, #tpu.memory_space<vmem>>, %arg20: memref<1x32x128xbf16, #tpu.memory_space<vmem>>, %arg21: memref<1x1x128xf32, #tpu.memory_space<vmem>>, %arg22: memref<1x128x32xbf16, #tpu.memory_space<vmem>>, %arg23: memref<1x1x32xf32, #tpu.memory_space<vmem>>, %arg24: memref<1x1x32xf32, #tpu.memory_space<vmem>>, %arg25: memref<1x1x32xf32, #tpu.memory_space<vmem>>, %arg26: memref<1x8x32xf32, #tpu.memory_space<vmem>>, %arg27: memref<1x4x1x8x8xbf16, #tpu.memory_space<vmem>>, %arg28: memref<1x4x1x8x8xbf16, #tpu.memory_space<vmem>>) attributes {dimension_semantics = [#tpu.dimension_semantics<parallel>, #tpu.dimension_semantics<arbitrary>], iteration_bounds = array<i64: 2, 2>, scalar_prefetch = 0 : i64, scratch_operands = 0 : i64, tpu.core_type = #tpu.core_type<tc>, window_params = [{transform_indices = @transform_0, window_bounds = array<i64: 1, 8, 32>}, {transform_indices = @transform_1, window_bounds = array<i64: 1, 8, 32>}, {transform_indices = @transform_2, window_bounds = array<i64: 1, 4, 32, 8>}, {transform_indices = @transform_3, window_bounds = array<i64: 1, 4, 32, 8>}, {transform_indices = @transform_4, window_bounds = array<i64: 1, 4, 32, 8>}, {transform_indices = @transform_5, window_bounds = array<i64: 1, 32, 32>}, {transform_indices = @transform_6, window_bounds = array<i64: 1, 4, 8, 32>}, {transform_indices = @transform_7, window_bounds = array<i64: 1, 1, 32>}, {transform_indices = @transform_8, window_bounds = array<i64: 1, 1, 32>}, {transform_indices = @transform_9, window_bounds = array<i64: 1, 1, 32>}, {transform_indices = @transform_10, window_bounds = array<i64: 1, 4, 32, 8>}, {transform_indices = @transform_11, window_bounds = array<i64: 1, 4, 32, 8>}, {transform_indices = @transform_12, window_bounds = array<i64: 1, 4, 32, 8>}, {transform_indices = @transform_13, window_bounds = array<i64: 1, 32, 32>}, {transform_indices = @transform_14, window_bounds = array<i64: 1, 4, 8, 32>}, {transform_indices = @transform_15, window_bounds = array<i64: 1, 1, 32>}, {transform_indices = @transform_16, window_bounds = array<i64: 1, 1, 32>}, {transform_indices = @transform_17, window_bounds = array<i64: 1, 1, 32>}, {transform_indices = @transform_18, window_bounds = array<i64: 1, 32, 128>}, {transform_indices = @transform_19, window_bounds = array<i64: 1, 1, 128>}, {transform_indices = @transform_20, window_bounds = array<i64: 1, 128, 32>}, {transform_indices = @transform_21, window_bounds = array<i64: 1, 1, 32>}, {transform_indices = @transform_22, window_bounds = array<i64: 1, 1, 32>}, {transform_indices = @transform_23, window_bounds = array<i64: 1, 1, 32>}, {transform_indices = @transform_24, window_bounds = array<i64: 1, 8, 32>}, {transform_indices = @transform_25, window_bounds = array<i64: 1, 4, 1, 8, 8>}, {transform_indices = @transform_26, window_bounds = array<i64: 1, 4, 1, 8, 8>}]} {
    %c0_i32 = arith.constant 0 : i32
    %0 = arith.cmpi eq, %arg1, %c0_i32 : i32
    %1 = arith.extui %0 : i1 to i32
    %c0_i32_0 = arith.constant 0 : i32
    %2 = arith.cmpi ne, %1, %c0_i32_0 : i32
    scf.if %2 {
      %c0_83 = arith.constant 0 : index
      %c0_84 = arith.constant 0 : index
      %c0_85 = arith.constant 0 : index
      %138 = vector.load %arg2[%c0_83, %c0_84, %c0_85] : memref<1x8x32xf32, #tpu.memory_space<vmem>>, vector<1x8x32xf32>
      %c0_86 = arith.constant 0 : index
      %c0_87 = arith.constant 0 : index
      %c0_88 = arith.constant 0 : index
      %139 = vector.load %arg26[%c0_86, %c0_87, %c0_88] : memref<1x8x32xf32, #tpu.memory_space<vmem>>, vector<1x8x32xf32>
      tpu.vector_store %arg26[%c0_86, %c0_87, %c0_88], %138 {strides = array<i32>} : memref<1x8x32xf32, #tpu.memory_space<vmem>>, vector<1x8x32xf32>,
    } else {
    }
    %c0 = arith.constant 0 : index
    %c0_1 = arith.constant 0 : index
    %c0_2 = arith.constant 0 : index
    %3 = vector.load %arg26[%c0, %c0_1, %c0_2] : memref<1x8x32xf32, #tpu.memory_space<vmem>>, vector<1x8x32xf32>
    %4 = vector.shape_cast %3 : vector<1x8x32xf32> to vector<8x32xf32>
    %5 = arith.truncf %4 : vector<8x32xf32> to vector<8x32xbf16>
    %c0_3 = arith.constant 0 : index
    %c0_4 = arith.constant 0 : index
    %c0_5 = arith.constant 0 : index
    %6 = vector.load %arg7[%c0_3, %c0_4, %c0_5] : memref<1x32x32xbf16, #tpu.memory_space<vmem>>, vector<1x32x32xbf16>
    %7 = vector.shape_cast %6 : vector<1x32x32xbf16> to vector<32x32xbf16>
    %cst = arith.constant dense<0.000000e+00> : vector<8x32xf32>
    %8 = tpu.matmul %5, %7, %cst {dimension_numbers = #tpu.dot_dimension_numbers<[1], [0], [0], [1], [0, 0, 1, 1], [], []>} : vector<8x32xbf16>, vector<32x32xbf16>, vector<8x32xf32> -> vector<8x32xf32>
    %cst_6 = arith.constant -4.2949673E+9 : f32
    %c0_i32_7 = arith.constant 0 : i32
    %c4_i32 = arith.constant 4 : i32
    %9 = arith.addi %c0_i32_7, %c4_i32 : i32
    %c1_i32 = arith.constant 1 : i32
    %10 = scf.for %arg29 = %c0_i32_7 to %9 step %c1_i32 iter_args(%arg30 = %8) -> (vector<8x32xf32>)  : i32 {
      %c0_83 = arith.constant 0 : index
      %138 = arith.index_cast %arg29 : i32 to index
      %c0_84 = arith.constant 0 : index
      %c0_85 = arith.constant 0 : index
      %139 = vector.load %arg4[%c0_83, %138, %c0_84, %c0_85] : memref<1x4x32x8xbf16, #tpu.memory_space<vmem>>, vector<1x1x32x8xbf16>
      %140 = vector.shape_cast %139 : vector<1x1x32x8xbf16> to vector<32x8xbf16>
      %cst_86 = arith.constant dense<0.000000e+00> : vector<8x8xf32>
      %141 = tpu.matmul %5, %140, %cst_86 {dimension_numbers = #tpu.dot_dimension_numbers<[1], [0], [0], [1], [0, 0, 1, 1], [], []>} : vector<8x32xbf16>, vector<32x8xbf16>, vector<8x8xf32> -> vector<8x8xf32>
      %142 = arith.truncf %141 : vector<8x8xf32> to vector<8x8xbf16>
      %c0_87 = arith.constant 0 : index
      %143 = arith.index_cast %arg29 : i32 to index
      %c0_88 = arith.constant 0 : index
      %c0_89 = arith.constant 0 : index
      %144 = vector.load %arg5[%c0_87, %143, %c0_88, %c0_89] : memref<1x4x32x8xbf16, #tpu.memory_space<vmem>>, vector<1x1x32x8xbf16>
      %145 = vector.shape_cast %144 : vector<1x1x32x8xbf16> to vector<32x8xbf16>
      %cst_90 = arith.constant dense<0.000000e+00> : vector<8x8xf32>
      %146 = tpu.matmul %5, %145, %cst_90 {dimension_numbers = #tpu.dot_dimension_numbers<[1], [0], [0], [1], [0, 0, 1, 1], [], []>} : vector<8x32xbf16>, vector<32x8xbf16>, vector<8x8xf32> -> vector<8x8xf32>
      %147 = arith.truncf %146 : vector<8x8xf32> to vector<8x8xbf16>
      %c0_91 = arith.constant 0 : index
      %148 = arith.index_cast %arg29 : i32 to index
      %c0_92 = arith.constant 0 : index
      %c0_93 = arith.constant 0 : index
      %149 = vector.load %arg6[%c0_91, %148, %c0_92, %c0_93] : memref<1x4x32x8xbf16, #tpu.memory_space<vmem>>, vector<1x1x32x8xbf16>
      %150 = vector.shape_cast %149 : vector<1x1x32x8xbf16> to vector<32x8xbf16>
      %cst_94 = arith.constant dense<0.000000e+00> : vector<8x8xf32>
      %151 = tpu.matmul %5, %150, %cst_94 {dimension_numbers = #tpu.dot_dimension_numbers<[1], [0], [0], [1], [0, 0, 1, 1], [], []>} : vector<8x32xbf16>, vector<32x8xbf16>, vector<8x8xf32> -> vector<8x8xf32>
      %152 = arith.truncf %151 : vector<8x8xf32> to vector<8x8xbf16>
      %cst_95 = arith.constant dense<0.000000e+00> : vector<8x8xf32>
      %153 = tpu.matmul %142, %147, %cst_95 {dimension_numbers = #tpu.dot_dimension_numbers<[1], [1], [0], [0], [0, 0, 1, 0], [], []>} : vector<8x8xbf16>, vector<8x8xbf16>, vector<8x8xf32> -> vector<8x8xf32>
      %cst_96 = arith.constant 0.353553385 : f32
      %154 = vector.broadcast %cst_96 : f32 to vector<8x8xf32>
      %155 = arith.mulf %153, %154 : vector<8x8xf32>
      %156 = tpu.iota {dimensions = array<i32: 0>} : vector<8x8xi32>
      %157 = tpu.iota {dimensions = array<i32: 1>} : vector<8x8xi32>
      %158 = arith.cmpi sgt, %157, %156 : vector<8x8xi32>
      %159 = vector.broadcast %cst_6 : f32 to vector<8x8xf32>
      %160 = arith.select %158, %159, %155 : vector<8x8xi1>, vector<8x8xf32>
      %cst_97 = arith.constant dense<0xFF800000> : vector<8xf32>
      %161 = vector.multi_reduction <maximumf>, %160, %cst_97 [1] : vector<8x8xf32> to vector<8xf32>
      %162 = vector.shape_cast %161 : vector<8xf32> to vector<8x1xf32>
      %163 = vector.broadcast %162 : vector<8x1xf32> to vector<8x8xf32>
      %164 = arith.subf %160, %163 : vector<8x8xf32>
      %165 = math.exp %164 : vector<8x8xf32>
      %cst_98 = arith.constant dense<0.000000e+00> : vector<8xf32>
      %166 = vector.multi_reduction <add>, %165, %cst_98 [1] : vector<8x8xf32> to vector<8xf32>
      %167 = vector.shape_cast %166 : vector<8xf32> to vector<8x1xf32>
      %168 = tpu.reciprocal %167 {approx = true} : vector<8x1xf32> -> vector<8x1xf32>
      %169 = vector.broadcast %168 : vector<8x1xf32> to vector<8x8xf32>
      %170 = arith.mulf %165, %169 : vector<8x8xf32>
      %171 = arith.truncf %170 : vector<8x8xf32> to vector<8x8xbf16>
      %c0_99 = arith.constant 0 : index
      %172 = arith.index_cast %arg29 : i32 to index
      %c0_100 = arith.constant 0 : index
      %c0_101 = arith.constant 0 : index
      %c0_102 = arith.constant 0 : index
      %173 = vector.load %arg27[%c0_99, %172, %c0_100, %c0_101, %c0_102] : memref<1x4x1x8x8xbf16, #tpu.memory_space<vmem>>, vector<1x1x1x8x8xbf16>
      %174 = vector.shape_cast %173 : vector<1x1x1x8x8xbf16> to vector<8x8xbf16>
      %175 = vector.shape_cast %171 : vector<8x8xbf16> to vector<1x1x1x8x8xbf16>
      tpu.vector_store %arg27[%c0_99, %172, %c0_100, %c0_101, %c0_102], %175 {strides = array<i32>} : memref<1x4x1x8x8xbf16, #tpu.memory_space<vmem>>, vector<1x1x1x8x8xbf16>,
      %cst_103 = arith.constant dense<0.000000e+00> : vector<8x8xf32>
      %176 = tpu.matmul %171, %152, %cst_103 {dimension_numbers = #tpu.dot_dimension_numbers<[1], [0], [0], [1], [0, 0, 1, 1], [], []>} : vector<8x8xbf16>, vector<8x8xbf16>, vector<8x8xf32> -> vector<8x8xf32>
      %177 = arith.truncf %176 : vector<8x8xf32> to vector<8x8xbf16>
      %c0_104 = arith.constant 0 : index
      %178 = arith.index_cast %arg29 : i32 to index
      %c0_105 = arith.constant 0 : index
      %c0_106 = arith.constant 0 : index
      %179 = vector.load %arg8[%c0_104, %178, %c0_105, %c0_106] : memref<1x4x8x32xbf16, #tpu.memory_space<vmem>>, vector<1x1x8x32xbf16>
      %180 = vector.shape_cast %179 : vector<1x1x8x32xbf16> to vector<8x32xbf16>
      %cst_107 = arith.constant dense<0.000000e+00> : vector<8x32xf32>
      %181 = tpu.matmul %177, %180, %cst_107 {dimension_numbers = #tpu.dot_dimension_numbers<[1], [0], [0], [1], [0, 0, 1, 1], [], []>} : vector<8x8xbf16>, vector<8x32xbf16>, vector<8x32xf32> -> vector<8x32xf32>
      %182 = arith.addf %arg30, %181 : vector<8x32xf32>
      scf.yield %182 : vector<8x32xf32>
    }
    %c4_i32_8 = arith.constant 4 : i32
    %c0_9 = arith.constant 0 : index
    %c0_10 = arith.constant 0 : index
    %c0_11 = arith.constant 0 : index
    %11 = vector.load %arg9[%c0_9, %c0_10, %c0_11] : memref<1x1x32xf32, #tpu.memory_space<vmem>>, vector<1x1x32xf32>
    %12 = vector.shape_cast %11 : vector<1x1x32xf32> to vector<1x32xf32>
    %13 = vector.broadcast %12 : vector<1x32xf32> to vector<8x32xf32>
    %14 = arith.addf %10, %13 : vector<8x32xf32>
    %15 = arith.addf %14, %4 : vector<8x32xf32>
    %cst_12 = arith.constant dense<0.000000e+00> : vector<8xf32>
    %16 = vector.multi_reduction <add>, %15, %cst_12 [1] : vector<8x32xf32> to vector<8xf32>
    %17 = vector.shape_cast %16 : vector<8xf32> to vector<8x1xf32>
    %cst_13 = arith.constant 3.200000e+01 : f32
    %18 = vector.broadcast %cst_13 : f32 to vector<8x1xf32>
    %19 = arith.divf %17, %18 : vector<8x1xf32>
    %20 = vector.broadcast %19 : vector<8x1xf32> to vector<8x32xf32>
    %21 = arith.subf %15, %20 : vector<8x32xf32>
    %22 = arith.mulf %21, %21 : vector<8x32xf32>
    %cst_14 = arith.constant dense<0.000000e+00> : vector<8xf32>
    %23 = vector.multi_reduction <add>, %22, %cst_14 [1] : vector<8x32xf32> to vector<8xf32>
    %24 = vector.shape_cast %23 : vector<8xf32> to vector<8x1xf32>
    %cst_15 = arith.constant 3.200000e+01 : f32
    %25 = vector.broadcast %cst_15 : f32 to vector<8x1xf32>
    %26 = arith.divf %24, %25 : vector<8x1xf32>
    %27 = vector.broadcast %19 : vector<8x1xf32> to vector<8x32xf32>
    %28 = arith.subf %15, %27 : vector<8x32xf32>
    %cst_16 = arith.constant 9.99999974E-6 : f32
    %29 = vector.broadcast %cst_16 : f32 to vector<8x1xf32>
    %30 = arith.addf %26, %29 : vector<8x1xf32>
    %31 = math.rsqrt %30 : vector<8x1xf32>
    %32 = vector.broadcast %31 : vector<8x1xf32> to vector<8x32xf32>
    %33 = arith.mulf %28, %32 : vector<8x32xf32>
    %c0_17 = arith.constant 0 : index
    %c0_18 = arith.constant 0 : index
    %c0_19 = arith.constant 0 : index
    %34 = vector.load %arg10[%c0_17, %c0_18, %c0_19] : memref<1x1x32xf32, #tpu.memory_space<vmem>>, vector<1x1x32xf32>
    %35 = vector.shape_cast %34 : vector<1x1x32xf32> to vector<1x32xf32>
    %36 = vector.broadcast %35 : vector<1x32xf32> to vector<8x32xf32>
    %37 = arith.mulf %33, %36 : vector<8x32xf32>
    %c0_20 = arith.constant 0 : index
    %c0_21 = arith.constant 0 : index
    %c0_22 = arith.constant 0 : index
    %38 = vector.load %arg11[%c0_20, %c0_21, %c0_22] : memref<1x1x32xf32, #tpu.memory_space<vmem>>, vector<1x1x32xf32>
    %39 = vector.shape_cast %38 : vector<1x1x32xf32> to vector<1x32xf32>
    %40 = vector.broadcast %39 : vector<1x32xf32> to vector<8x32xf32>
    %41 = arith.addf %37, %40 : vector<8x32xf32>
    %42 = arith.truncf %41 : vector<8x32xf32> to vector<8x32xbf16>
    %c0_23 = arith.constant 0 : index
    %c0_24 = arith.constant 0 : index
    %c0_25 = arith.constant 0 : index
    %43 = vector.load %arg3[%c0_23, %c0_24, %c0_25] : memref<1x8x32xbf16, #tpu.memory_space<vmem>>, vector<1x8x32xbf16>
    %44 = vector.shape_cast %43 : vector<1x8x32xbf16> to vector<8x32xbf16>
    %c0_26 = arith.constant 0 : index
    %c0_27 = arith.constant 0 : index
    %c0_28 = arith.constant 0 : index
    %45 = vector.load %arg15[%c0_26, %c0_27, %c0_28] : memref<1x32x32xbf16, #tpu.memory_space<vmem>>, vector<1x32x32xbf16>
    %46 = vector.shape_cast %45 : vector<1x32x32xbf16> to vector<32x32xbf16>
    %cst_29 = arith.constant dense<0.000000e+00> : vector<8x32xf32>
    %47 = tpu.matmul %42, %46, %cst_29 {dimension_numbers = #tpu.dot_dimension_numbers<[1], [0], [0], [1], [0, 0, 1, 1], [], []>} : vector<8x32xbf16>, vector<32x32xbf16>, vector<8x32xf32> -> vector<8x32xf32>
    %c0_i32_30 = arith.constant 0 : i32
    %c4_i32_31 = arith.constant 4 : i32
    %48 = arith.addi %c0_i32_30, %c4_i32_31 : i32
    %c1_i32_32 = arith.constant 1 : i32
    %49 = scf.for %arg29 = %c0_i32_30 to %48 step %c1_i32_32 iter_args(%arg30 = %47) -> (vector<8x32xf32>)  : i32 {
      %c0_83 = arith.constant 0 : index
      %138 = arith.index_cast %arg29 : i32 to index
      %c0_84 = arith.constant 0 : index
      %c0_85 = arith.constant 0 : index
      %139 = vector.load %arg12[%c0_83, %138, %c0_84, %c0_85] : memref<1x4x32x8xbf16, #tpu.memory_space<vmem>>, vector<1x1x32x8xbf16>
      %140 = vector.shape_cast %139 : vector<1x1x32x8xbf16> to vector<32x8xbf16>
      %cst_86 = arith.constant dense<0.000000e+00> : vector<8x8xf32>
      %141 = tpu.matmul %42, %140, %cst_86 {dimension_numbers = #tpu.dot_dimension_numbers<[1], [0], [0], [1], [0, 0, 1, 1], [], []>} : vector<8x32xbf16>, vector<32x8xbf16>, vector<8x8xf32> -> vector<8x8xf32>
      %142 = arith.truncf %141 : vector<8x8xf32> to vector<8x8xbf16>
      %c0_87 = arith.constant 0 : index
      %143 = arith.index_cast %arg29 : i32 to index
      %c0_88 = arith.constant 0 : index
      %c0_89 = arith.constant 0 : index
      %144 = vector.load %arg13[%c0_87, %143, %c0_88, %c0_89] : memref<1x4x32x8xbf16, #tpu.memory_space<vmem>>, vector<1x1x32x8xbf16>
      %145 = vector.shape_cast %144 : vector<1x1x32x8xbf16> to vector<32x8xbf16>
      %cst_90 = arith.constant dense<0.000000e+00> : vector<8x8xf32>
      %146 = tpu.matmul %44, %145, %cst_90 {dimension_numbers = #tpu.dot_dimension_numbers<[1], [0], [0], [1], [0, 0, 1, 1], [], []>} : vector<8x32xbf16>, vector<32x8xbf16>, vector<8x8xf32> -> vector<8x8xf32>
      %147 = arith.truncf %146 : vector<8x8xf32> to vector<8x8xbf16>
      %c0_91 = arith.constant 0 : index
      %148 = arith.index_cast %arg29 : i32 to index
      %c0_92 = arith.constant 0 : index
      %c0_93 = arith.constant 0 : index
      %149 = vector.load %arg14[%c0_91, %148, %c0_92, %c0_93] : memref<1x4x32x8xbf16, #tpu.memory_space<vmem>>, vector<1x1x32x8xbf16>
      %150 = vector.shape_cast %149 : vector<1x1x32x8xbf16> to vector<32x8xbf16>
      %cst_94 = arith.constant dense<0.000000e+00> : vector<8x8xf32>
      %151 = tpu.matmul %44, %150, %cst_94 {dimension_numbers = #tpu.dot_dimension_numbers<[1], [0], [0], [1], [0, 0, 1, 1], [], []>} : vector<8x32xbf16>, vector<32x8xbf16>, vector<8x8xf32> -> vector<8x8xf32>
      %152 = arith.truncf %151 : vector<8x8xf32> to vector<8x8xbf16>
      %cst_95 = arith.constant dense<0.000000e+00> : vector<8x8xf32>
      %153 = tpu.matmul %142, %147, %cst_95 {dimension_numbers = #tpu.dot_dimension_numbers<[1], [1], [0], [0], [0, 0, 1, 0], [], []>} : vector<8x8xbf16>, vector<8x8xbf16>, vector<8x8xf32> -> vector<8x8xf32>
      %cst_96 = arith.constant 0.353553385 : f32
      %154 = vector.broadcast %cst_96 : f32 to vector<8x8xf32>
      %155 = arith.mulf %153, %154 : vector<8x8xf32>
      %cst_97 = arith.constant dense<0xFF800000> : vector<8xf32>
      %156 = vector.multi_reduction <maximumf>, %155, %cst_97 [1] : vector<8x8xf32> to vector<8xf32>
      %157 = vector.shape_cast %156 : vector<8xf32> to vector<8x1xf32>
      %158 = vector.broadcast %157 : vector<8x1xf32> to vector<8x8xf32>
      %159 = arith.subf %155, %158 : vector<8x8xf32>
      %160 = math.exp %159 : vector<8x8xf32>
      %cst_98 = arith.constant dense<0.000000e+00> : vector<8xf32>
      %161 = vector.multi_reduction <add>, %160, %cst_98 [1] : vector<8x8xf32> to vector<8xf32>
      %162 = vector.shape_cast %161 : vector<8xf32> to vector<8x1xf32>
      %163 = tpu.reciprocal %162 {approx = true} : vector<8x1xf32> -> vector<8x1xf32>
      %164 = vector.broadcast %163 : vector<8x1xf32> to vector<8x8xf32>
      %165 = arith.mulf %160, %164 : vector<8x8xf32>
      %166 = arith.truncf %165 : vector<8x8xf32> to vector<8x8xbf16>
      %c0_99 = arith.constant 0 : index
      %167 = arith.index_cast %arg29 : i32 to index
      %c0_100 = arith.constant 0 : index
      %c0_101 = arith.constant 0 : index
      %c0_102 = arith.constant 0 : index
      %168 = vector.load %arg28[%c0_99, %167, %c0_100, %c0_101, %c0_102] : memref<1x4x1x8x8xbf16, #tpu.memory_space<vmem>>, vector<1x1x1x8x8xbf16>
      %169 = vector.shape_cast %168 : vector<1x1x1x8x8xbf16> to vector<8x8xbf16>
      %170 = vector.shape_cast %166 : vector<8x8xbf16> to vector<1x1x1x8x8xbf16>
      tpu.vector_store %arg28[%c0_99, %167, %c0_100, %c0_101, %c0_102], %170 {strides = array<i32>} : memref<1x4x1x8x8xbf16, #tpu.memory_space<vmem>>, vector<1x1x1x8x8xbf16>,
      %cst_103 = arith.constant dense<0.000000e+00> : vector<8x8xf32>
      %171 = tpu.matmul %166, %152, %cst_103 {dimension_numbers = #tpu.dot_dimension_numbers<[1], [0], [0], [1], [0, 0, 1, 1], [], []>} : vector<8x8xbf16>, vector<8x8xbf16>, vector<8x8xf32> -> vector<8x8xf32>
      %172 = arith.truncf %171 : vector<8x8xf32> to vector<8x8xbf16>
      %c0_104 = arith.constant 0 : index
      %173 = arith.index_cast %arg29 : i32 to index
      %c0_105 = arith.constant 0 : index
      %c0_106 = arith.constant 0 : index
      %174 = vector.load %arg16[%c0_104, %173, %c0_105, %c0_106] : memref<1x4x8x32xbf16, #tpu.memory_space<vmem>>, vector<1x1x8x32xbf16>
      %175 = vector.shape_cast %174 : vector<1x1x8x32xbf16> to vector<8x32xbf16>
      %cst_107 = arith.constant dense<0.000000e+00> : vector<8x32xf32>
      %176 = tpu.matmul %172, %175, %cst_107 {dimension_numbers = #tpu.dot_dimension_numbers<[1], [0], [0], [1], [0, 0, 1, 1], [], []>} : vector<8x8xbf16>, vector<8x32xbf16>, vector<8x32xf32> -> vector<8x32xf32>
      %177 = arith.addf %arg30, %176 : vector<8x32xf32>
      scf.yield %177 : vector<8x32xf32>
    }
    %c4_i32_33 = arith.constant 4 : i32
    %c0_34 = arith.constant 0 : index
    %c0_35 = arith.constant 0 : index
    %c0_36 = arith.constant 0 : index
    %50 = vector.load %arg17[%c0_34, %c0_35, %c0_36] : memref<1x1x32xf32, #tpu.memory_space<vmem>>, vector<1x1x32xf32>
    %51 = vector.shape_cast %50 : vector<1x1x32xf32> to vector<1x32xf32>
    %52 = vector.broadcast %51 : vector<1x32xf32> to vector<8x32xf32>
    %53 = arith.addf %49, %52 : vector<8x32xf32>
    %54 = arith.addf %53, %41 : vector<8x32xf32>
    %cst_37 = arith.constant dense<0.000000e+00> : vector<8xf32>
    %55 = vector.multi_reduction <add>, %54, %cst_37 [1] : vector<8x32xf32> to vector<8xf32>
    %56 = vector.shape_cast %55 : vector<8xf32> to vector<8x1xf32>
    %cst_38 = arith.constant 3.200000e+01 : f32
    %57 = vector.broadcast %cst_38 : f32 to vector<8x1xf32>
    %58 = arith.divf %56, %57 : vector<8x1xf32>
    %59 = vector.broadcast %58 : vector<8x1xf32> to vector<8x32xf32>
    %60 = arith.subf %54, %59 : vector<8x32xf32>
    %61 = arith.mulf %60, %60 : vector<8x32xf32>
    %cst_39 = arith.constant dense<0.000000e+00> : vector<8xf32>
    %62 = vector.multi_reduction <add>, %61, %cst_39 [1] : vector<8x32xf32> to vector<8xf32>
    %63 = vector.shape_cast %62 : vector<8xf32> to vector<8x1xf32>
    %cst_40 = arith.constant 3.200000e+01 : f32
    %64 = vector.broadcast %cst_40 : f32 to vector<8x1xf32>
    %65 = arith.divf %63, %64 : vector<8x1xf32>
    %66 = vector.broadcast %58 : vector<8x1xf32> to vector<8x32xf32>
    %67 = arith.subf %54, %66 : vector<8x32xf32>
    %cst_41 = arith.constant 9.99999974E-6 : f32
    %68 = vector.broadcast %cst_41 : f32 to vector<8x1xf32>
    %69 = arith.addf %65, %68 : vector<8x1xf32>
    %70 = math.rsqrt %69 : vector<8x1xf32>
    %71 = vector.broadcast %70 : vector<8x1xf32> to vector<8x32xf32>
    %72 = arith.mulf %67, %71 : vector<8x32xf32>
    %c0_42 = arith.constant 0 : index
    %c0_43 = arith.constant 0 : index
    %c0_44 = arith.constant 0 : index
    %73 = vector.load %arg18[%c0_42, %c0_43, %c0_44] : memref<1x1x32xf32, #tpu.memory_space<vmem>>, vector<1x1x32xf32>
    %74 = vector.shape_cast %73 : vector<1x1x32xf32> to vector<1x32xf32>
    %75 = vector.broadcast %74 : vector<1x32xf32> to vector<8x32xf32>
    %76 = arith.mulf %72, %75 : vector<8x32xf32>
    %c0_45 = arith.constant 0 : index
    %c0_46 = arith.constant 0 : index
    %c0_47 = arith.constant 0 : index
    %77 = vector.load %arg19[%c0_45, %c0_46, %c0_47] : memref<1x1x32xf32, #tpu.memory_space<vmem>>, vector<1x1x32xf32>
    %78 = vector.shape_cast %77 : vector<1x1x32xf32> to vector<1x32xf32>
    %79 = vector.broadcast %78 : vector<1x32xf32> to vector<8x32xf32>
    %80 = arith.addf %76, %79 : vector<8x32xf32>
    %c0_48 = arith.constant 0 : index
    %c0_49 = arith.constant 0 : index
    %c0_50 = arith.constant 0 : index
    %81 = vector.load %arg26[%c0_48, %c0_49, %c0_50] : memref<1x8x32xf32, #tpu.memory_space<vmem>>, vector<1x8x32xf32>
    %82 = vector.shape_cast %81 : vector<1x8x32xf32> to vector<8x32xf32>
    %83 = vector.shape_cast %80 : vector<8x32xf32> to vector<1x8x32xf32>
    tpu.vector_store %arg26[%c0_48, %c0_49, %c0_50], %83 {strides = array<i32>} : memref<1x8x32xf32, #tpu.memory_space<vmem>>, vector<1x8x32xf32>,
    %c0_i32_51 = arith.constant 0 : i32
    %c8_i32 = arith.constant 8 : i32
    %84 = arith.muli %c0_i32_51, %c8_i32 : i32
    %85 = tpu.assume_multiple %84, 8 : i32
    %c0_52 = arith.constant 0 : index
    %86 = arith.index_cast %85 : i32 to index
    %c0_53 = arith.constant 0 : index
    %87 = vector.load %arg26[%c0_52, %86, %c0_53] : memref<1x8x32xf32, #tpu.memory_space<vmem>>, vector<1x8x32xf32>
    %88 = vector.shape_cast %87 : vector<1x8x32xf32> to vector<8x32xf32>
    %89 = arith.truncf %88 : vector<8x32xf32> to vector<8x32xbf16>
    %c0_54 = arith.constant 0 : index
    %c0_55 = arith.constant 0 : index
    %c0_56 = arith.constant 0 : index
    %90 = vector.load %arg20[%c0_54, %c0_55, %c0_56] : memref<1x32x128xbf16, #tpu.memory_space<vmem>>, vector<1x32x128xbf16>
    %91 = vector.shape_cast %90 : vector<1x32x128xbf16> to vector<32x128xbf16>
    %cst_57 = arith.constant dense<0.000000e+00> : vector<8x128xf32>
    %92 = tpu.matmul %89, %91, %cst_57 {dimension_numbers = #tpu.dot_dimension_numbers<[1], [0], [0], [1], [0, 0, 1, 1], [], []>} : vector<8x32xbf16>, vector<32x128xbf16>, vector<8x128xf32> -> vector<8x128xf32>
    %c0_58 = arith.constant 0 : index
    %c0_59 = arith.constant 0 : index
    %c0_60 = arith.constant 0 : index
    %93 = vector.load %arg21[%c0_58, %c0_59, %c0_60] : memref<1x1x128xf32, #tpu.memory_space<vmem>>, vector<1x1x128xf32>
    %94 = vector.shape_cast %93 : vector<1x1x128xf32> to vector<1x128xf32>
    %95 = vector.broadcast %94 : vector<1x128xf32> to vector<8x128xf32>
    %96 = arith.addf %92, %95 : vector<8x128xf32>
    %cst_61 = arith.constant 0.000000e+00 : f32
    %97 = vector.broadcast %cst_61 : f32 to vector<8x128xf32>
    %98 = arith.maximumf %96, %97 : vector<8x128xf32>
    %99 = arith.truncf %98 : vector<8x128xf32> to vector<8x128xbf16>
    %c0_62 = arith.constant 0 : index
    %c0_63 = arith.constant 0 : index
    %c0_64 = arith.constant 0 : index
    %100 = vector.load %arg22[%c0_62, %c0_63, %c0_64] : memref<1x128x32xbf16, #tpu.memory_space<vmem>>, vector<1x128x32xbf16>
    %101 = vector.shape_cast %100 : vector<1x128x32xbf16> to vector<128x32xbf16>
    %cst_65 = arith.constant dense<0.000000e+00> : vector<8x32xf32>
    %102 = tpu.matmul %99, %101, %cst_65 {dimension_numbers = #tpu.dot_dimension_numbers<[1], [0], [0], [1], [0, 0, 1, 1], [], []>} : vector<8x128xbf16>, vector<128x32xbf16>, vector<8x32xf32> -> vector<8x32xf32>
    %c0_66 = arith.constant 0 : index
    %c0_67 = arith.constant 0 : index
    %c0_68 = arith.constant 0 : index
    %103 = vector.load %arg23[%c0_66, %c0_67, %c0_68] : memref<1x1x32xf32, #tpu.memory_space<vmem>>, vector<1x1x32xf32>
    %104 = vector.shape_cast %103 : vector<1x1x32xf32> to vector<1x32xf32>
    %105 = vector.broadcast %104 : vector<1x32xf32> to vector<8x32xf32>
    %106 = arith.addf %102, %105 : vector<8x32xf32>
    %107 = arith.addf %106, %88 : vector<8x32xf32>
    %cst_69 = arith.constant dense<0.000000e+00> : vector<8xf32>
    %108 = vector.multi_reduction <add>, %107, %cst_69 [1] : vector<8x32xf32> to vector<8xf32>
    %109 = vector.shape_cast %108 : vector<8xf32> to vector<8x1xf32>
    %cst_70 = arith.constant 3.200000e+01 : f32
    %110 = vector.broadcast %cst_70 : f32 to vector<8x1xf32>
    %111 = arith.divf %109, %110 : vector<8x1xf32>
    %112 = vector.broadcast %111 : vector<8x1xf32> to vector<8x32xf32>
    %113 = arith.subf %107, %112 : vector<8x32xf32>
    %114 = arith.mulf %113, %113 : vector<8x32xf32>
    %cst_71 = arith.constant dense<0.000000e+00> : vector<8xf32>
    %115 = vector.multi_reduction <add>, %114, %cst_71 [1] : vector<8x32xf32> to vector<8xf32>
    %116 = vector.shape_cast %115 : vector<8xf32> to vector<8x1xf32>
    %cst_72 = arith.constant 3.200000e+01 : f32
    %117 = vector.broadcast %cst_72 : f32 to vector<8x1xf32>
    %118 = arith.divf %116, %117 : vector<8x1xf32>
    %119 = vector.broadcast %111 : vector<8x1xf32> to vector<8x32xf32>
    %120 = arith.subf %107, %119 : vector<8x32xf32>
    %cst_73 = arith.constant 9.99999974E-6 : f32
    %121 = vector.broadcast %cst_73 : f32 to vector<8x1xf32>
    %122 = arith.addf %118, %121 : vector<8x1xf32>
    %123 = math.rsqrt %122 : vector<8x1xf32>
    %124 = vector.broadcast %123 : vector<8x1xf32> to vector<8x32xf32>
    %125 = arith.mulf %120, %124 : vector<8x32xf32>
    %c0_74 = arith.constant 0 : index
    %c0_75 = arith.constant 0 : index
    %c0_76 = arith.constant 0 : index
    %126 = vector.load %arg24[%c0_74, %c0_75, %c0_76] : memref<1x1x32xf32, #tpu.memory_space<vmem>>, vector<1x1x32xf32>
    %127 = vector.shape_cast %126 : vector<1x1x32xf32> to vector<1x32xf32>
    %128 = vector.broadcast %127 : vector<1x32xf32> to vector<8x32xf32>
    %129 = arith.mulf %125, %128 : vector<8x32xf32>
    %c0_77 = arith.constant 0 : index
    %c0_78 = arith.constant 0 : index
    %c0_79 = arith.constant 0 : index
    %130 = vector.load %arg25[%c0_77, %c0_78, %c0_79] : memref<1x1x32xf32, #tpu.memory_space<vmem>>, vector<1x1x32xf32>
    %131 = vector.shape_cast %130 : vector<1x1x32xf32> to vector<1x32xf32>
    %132 = vector.broadcast %131 : vector<1x32xf32> to vector<8x32xf32>
    %133 = arith.addf %129, %132 : vector<8x32xf32>
    %c0_80 = arith.constant 0 : index
    %134 = arith.index_cast %85 : i32 to index
    %c0_81 = arith.constant 0 : index
    %135 = vector.load %arg26[%c0_80, %134, %c0_81] : memref<1x8x32xf32, #tpu.memory_space<vmem>>, vector<1x8x32xf32>
    %136 = vector.shape_cast %135 : vector<1x8x32xf32> to vector<8x32xf32>
    %137 = vector.shape_cast %133 : vector<8x32xf32> to vector<1x8x32xf32>
    tpu.vector_store %arg26[%c0_80, %134, %c0_81], %137 {strides = array<i32>} : memref<1x8x32xf32, #tpu.memory_space<vmem>>, vector<1x8x32xf32>,
    %c1_i32_82 = arith.constant 1 : i32
    return
  }
  func.func @transform_0(%arg0: i32, %arg1: i32) -> (i32, i32, i32) {
    %c0_i32 = arith.constant 0 : i32
    %c0_i32_0 = arith.constant 0 : i32
    %c0_i32_1 = arith.constant 0 : i32
    return %arg0, %c0_i32, %c0_i32_0 : i32, i32, i32
  }
  func.func @transform_1(%arg0: i32, %arg1: i32) -> (i32, i32, i32) {
    %c0_i32 = arith.constant 0 : i32
    %c0_i32_0 = arith.constant 0 : i32
    %c0_i32_1 = arith.constant 0 : i32
    return %arg0, %c0_i32, %c0_i32_0 : i32, i32, i32
  }
  func.func @transform_2(%arg0: i32, %arg1: i32) -> (i32, i32, i32, i32) {
    %c0_i32 = arith.constant 0 : i32
    %c0_i32_0 = arith.constant 0 : i32
    %c0_i32_1 = arith.constant 0 : i32
    %c0_i32_2 = arith.constant 0 : i32
    return %arg1, %c0_i32, %c0_i32_0, %c0_i32_1 : i32, i32, i32, i32
  }
  func.func @transform_3(%arg0: i32, %arg1: i32) -> (i32, i32, i32, i32) {
    %c0_i32 = arith.constant 0 : i32
    %c0_i32_0 = arith.constant 0 : i32
    %c0_i32_1 = arith.constant 0 : i32
    %c0_i32_2 = arith.constant 0 : i32
    return %arg1, %c0_i32, %c0_i32_0, %c0_i32_1 : i32, i32, i32, i32
  }
  func.func @transform_4(%arg0: i32, %arg1: i32) -> (i32, i32, i32, i32) {
    %c0_i32 = arith.constant 0 : i32
    %c0_i32_0 = arith.constant 0 : i32
    %c0_i32_1 = arith.constant 0 : i32
    %c0_i32_2 = arith.constant 0 : i32
    return %arg1, %c0_i32, %c0_i32_0, %c0_i32_1 : i32, i32, i32, i32
  }
  func.func @transform_5(%arg0: i32, %arg1: i32) -> (i32, i32, i32) {
    %c0_i32 = arith.constant 0 : i32
    %c0_i32_0 = arith.constant 0 : i32
    %c0_i32_1 = arith.constant 0 : i32
    return %arg1, %c0_i32, %c0_i32_0 : i32, i32, i32
  }
  func.func @transform_6(%arg0: i32, %arg1: i32) -> (i32, i32, i32, i32) {
    %c0_i32 = arith.constant 0 : i32
    %c0_i32_0 = arith.constant 0 : i32
    %c0_i32_1 = arith.constant 0 : i32
    %c0_i32_2 = arith.constant 0 : i32
    return %arg1, %c0_i32, %c0_i32_0, %c0_i32_1 : i32, i32, i32, i32
  }
  func.func @transform_7(%arg0: i32, %arg1: i32) -> (i32, i32, i32) {
    %c0_i32 = arith.constant 0 : i32
    %c0_i32_0 = arith.constant 0 : i32
    %c0_i32_1 = arith.constant 0 : i32
    return %arg1, %c0_i32, %c0_i32_0 : i32, i32, i32
  }
  func.func @transform_8(%arg0: i32, %arg1: i32) -> (i32, i32, i32) {
    %c0_i32 = arith.constant 0 : i32
    %c0_i32_0 = arith.constant 0 : i32
    %c0_i32_1 = arith.constant 0 : i32
    return %arg1, %c0_i32, %c0_i32_0 : i32, i32, i32
  }
  func.func @transform_9(%arg0: i32, %arg1: i32) -> (i32, i32, i32) {
    %c0_i32 = arith.constant 0 : i32
    %c0_i32_0 = arith.constant 0 : i32
    %c0_i32_1 = arith.constant 0 : i32
    return %arg1, %c0_i32, %c0_i32_0 : i32, i32, i32
  }
  func.func @transform_10(%arg0: i32, %arg1: i32) -> (i32, i32, i32, i32) {
    %c0_i32 = arith.constant 0 : i32
    %c0_i32_0 = arith.constant 0 : i32
    %c0_i32_1 = arith.constant 0 : i32
    %c0_i32_2 = arith.constant 0 : i32
    return %arg1, %c0_i32, %c0_i32_0, %c0_i32_1 : i32, i32, i32, i32
  }
  func.func @transform_11(%arg0: i32, %arg1: i32) -> (i32, i32, i32, i32) {
    %c0_i32 = arith.constant 0 : i32
    %c0_i32_0 = arith.constant 0 : i32
    %c0_i32_1 = arith.constant 0 : i32
    %c0_i32_2 = arith.constant 0 : i32
    return %arg1, %c0_i32, %c0_i32_0, %c0_i32_1 : i32, i32, i32, i32
  }
  func.func @transform_12(%arg0: i32, %arg1: i32) -> (i32, i32, i32, i32) {
    %c0_i32 = arith.constant 0 : i32
    %c0_i32_0 = arith.constant 0 : i32
    %c0_i32_1 = arith.constant 0 : i32
    %c0_i32_2 = arith.constant 0 : i32
    return %arg1, %c0_i32, %c0_i32_0, %c0_i32_1 : i32, i32, i32, i32
  }
  func.func @transform_13(%arg0: i32, %arg1: i32) -> (i32, i32, i32) {
    %c0_i32 = arith.constant 0 : i32
    %c0_i32_0 = arith.constant 0 : i32
    %c0_i32_1 = arith.constant 0 : i32
    return %arg1, %c0_i32, %c0_i32_0 : i32, i32, i32
  }
  func.func @transform_14(%arg0: i32, %arg1: i32) -> (i32, i32, i32, i32) {
    %c0_i32 = arith.constant 0 : i32
    %c0_i32_0 = arith.constant 0 : i32
    %c0_i32_1 = arith.constant 0 : i32
    %c0_i32_2 = arith.constant 0 : i32
    return %arg1, %c0_i32, %c0_i32_0, %c0_i32_1 : i32, i32, i32, i32
  }
  func.func @transform_15(%arg0: i32, %arg1: i32) -> (i32, i32, i32) {
    %c0_i32 = arith.constant 0 : i32
    %c0_i32_0 = arith.constant 0 : i32
    %c0_i32_1 = arith.constant 0 : i32
    return %arg1, %c0_i32, %c0_i32_0 : i32, i32, i32
  }
  func.func @transform_16(%arg0: i32, %arg1: i32) -> (i32, i32, i32) {
    %c0_i32 = arith.constant 0 : i32
    %c0_i32_0 = arith.constant 0 : i32
    %c0_i32_1 = arith.constant 0 : i32
    return %arg1, %c0_i32, %c0_i32_0 : i32, i32, i32
  }
  func.func @transform_17(%arg0: i32, %arg1: i32) -> (i32, i32, i32) {
    %c0_i32 = arith.constant 0 : i32
    %c0_i32_0 = arith.constant 0 : i32
    %c0_i32_1 = arith.constant 0 : i32
    return %arg1, %c0_i32, %c0_i32_0 : i32, i32, i32
  }
  func.func @transform_18(%arg0: i32, %arg1: i32) -> (i32, i32, i32) {
    %c0_i32 = arith.constant 0 : i32
    %c0_i32_0 = arith.constant 0 : i32
    %c0_i32_1 = arith.constant 0 : i32
    return %arg1, %c0_i32, %c0_i32_0 : i32, i32, i32
  }
  func.func @transform_19(%arg0: i32, %arg1: i32) -> (i32, i32, i32) {
    %c0_i32 = arith.constant 0 : i32
    %c0_i32_0 = arith.constant 0 : i32
    %c0_i32_1 = arith.constant 0 : i32
    return %arg1, %c0_i32, %c0_i32_0 : i32, i32, i32
  }
  func.func @transform_20(%arg0: i32, %arg1: i32) -> (i32, i32, i32) {
    %c0_i32 = arith.constant 0 : i32
    %c0_i32_0 = arith.constant 0 : i32
    %c0_i32_1 = arith.constant 0 : i32
    return %arg1, %c0_i32, %c0_i32_0 : i32, i32, i32
  }
  func.func @transform_21(%arg0: i32, %arg1: i32) -> (i32, i32, i32) {
    %c0_i32 = arith.constant 0 : i32
    %c0_i32_0 = arith.constant 0 : i32
    %c0_i32_1 = arith.constant 0 : i32
    return %arg1, %c0_i32, %c0_i32_0 : i32, i32, i32
  }
  func.func @transform_22(%arg0: i32, %arg1: i32) -> (i32, i32, i32) {
    %c0_i32 = arith.constant 0 : i32
    %c0_i32_0 = arith.constant 0 : i32
    %c0_i32_1 = arith.constant 0 : i32
    return %arg1, %c0_i32, %c0_i32_0 : i32, i32, i32
  }
  func.func @transform_23(%arg0: i32, %arg1: i32) -> (i32, i32, i32) {
    %c0_i32 = arith.constant 0 : i32
    %c0_i32_0 = arith.constant 0 : i32
    %c0_i32_1 = arith.constant 0 : i32
    return %arg1, %c0_i32, %c0_i32_0 : i32, i32, i32
  }
  func.func @transform_24(%arg0: i32, %arg1: i32) -> (i32, i32, i32) {
    %c0_i32 = arith.constant 0 : i32
    %c0_i32_0 = arith.constant 0 : i32
    %c0_i32_1 = arith.constant 0 : i32
    return %arg0, %c0_i32, %c0_i32_0 : i32, i32, i32
  }
  func.func @transform_25(%arg0: i32, %arg1: i32) -> (i32, i32, i32, i32, i32) {
    %c0_i32 = arith.constant 0 : i32
    %c0_i32_0 = arith.constant 0 : i32
    %c0_i32_1 = arith.constant 0 : i32
    %c0_i32_2 = arith.constant 0 : i32
    return %arg1, %c0_i32, %arg0, %c0_i32_0, %c0_i32_1 : i32, i32, i32, i32, i32
  }
  func.func @transform_26(%arg0: i32, %arg1: i32) -> (i32, i32, i32, i32, i32) {
    %c0_i32 = arith.constant 0 : i32
    %c0_i32_0 = arith.constant 0 : i32
    %c0_i32_1 = arith.constant 0 : i32
    %c0_i32_2 = arith.constant 0 : i32
    return %arg1, %c0_i32, %arg0, %c0_i32_0, %c0_i32_1 : i32, i32, i32, i32, i32
  }
}

</mosaic_0001>

<llo_original>
// kernel: decoder_forward.3
$region0: #{decoder_forward.3}
  #allocation0 [shape = 'u32[]', space=smem, size = 0x4, offset = 0x4, fixed_abs, tag = 'smem constant byte address 0x4 - core index']
  #allocation1 [shape = 'u32[144,128]{1,0:T(1,128)}', space=vmem, size = 0x12000, scoped, tag = 'internal scratch']
  %s0 = inlined_call_operand.vmem [shape: f32[16,32], index: 0, kind: input, shape index: {}]
  %s1 = inlined_call_operand.vmem [shape: bf16[32,128], index: 1, kind: input, shape index: {}]
  %s2 = inlined_call_operand.vmem [shape: f32[1,128], index: 2, kind: input, shape index: {}]
  %s3 = inlined_call_operand.vmem [shape: f32[16,128], index: 3, kind: input, shape index: {}]
  %s4 = inlined_call_operand.vmem [shape: f32[16,128], index: 4, kind: output, shape index: {}]
  %s5 = sld [smem:[#allocation0]]
  $region49: #{decoder_forward.3} parent=0
    _
  %s7 = ssub.s32 1, %s5
  %s8 = scalar_select 0, %s7, %s5
  loop: start=0, step=1, limit=4
  $region2: #{decoder_forward.3} parent=0 // loop_pre_header
    _
  $region3: #{decoder_forward.3} parent=0 // loop_header
    %s10 = sphi 0, %s14
    %p11 = scmp.ge.s32.totalorder %s10, 4
    %s20 = sphi 0, %s22
    %s23 = sphi 0, %s20
    %s24 = sphi 0, %s23
    %s40 = sphi 0, %s24
    %s44 = sphi 0, %s44
    %s46 = sphi 0, %s44
    %s47 = sphi 0, %s46
    %s61 = sphi 0, %s47
    %s65 = sphi 0, %s65
    %s67 = sphi 0, %s65
    %s68 = sphi 0, %s67
    %s82 = sphi 0, %s68
    %s88 = sphi 0, %s90
    %s91 = sphi 0, %s88
    %s92 = sphi 0, %s91
    %s108 = sphi 0, %s92
    %s114 = sphi 0, %s116
    %s117 = sphi 0, %s114
    %s118 = sphi 0, %s117
    %s134 = sphi 0, %s118
  $region4: #{decoder_forward.3} parent=0 // loop_header_branch
    %13 = sbr.rel (%p11) target = $region8
  $region5: #{decoder_forward.3} parent=0 // loop_body
    %s15 = ssub.s32 %s10, 1
    %s16 = ssub.s32 %s10, 2
    %s17 = sadd.s32 %s10, 1
    %s18 = ssub.s32 %s10, %s17
    %p19 = scmp.eq.s32.totalorder %s18, 0
    %s21 = sadd.s32 %s20, 1
    %s22 = scalar_select %p19, %s20, %s21
    %p25 = pneg %p19
    %p26 = scmp.eq.s32.totalorder %s10, 1
    %p27 = por %p25, %p26
    %p28 = scmp.ne.s32.totalorder %s20, %s23
    %p29 = scmp.eq.s32.totalorder %s10, 0
    %p30 = por %p28, %p29
    %p31 = scmp.ne.s32.totalorder %s20, %s23
    %p32 = scmp.eq.s32.totalorder %s15, 1
    %p33 = por %p31, %p32
    %p34 = scmp.ne.s32.totalorder %s23, %s24
    %p35 = scmp.eq.s32.totalorder %s15, 0
    %p36 = por %p34, %p35
    %p37 = scmp.ne.s32.totalorder %s23, %s24
    %p38 = scmp.eq.s32.totalorder %s16, 1
    %p39 = por %p37, %p38
    %p41 = scmp.ne.s32.totalorder %s24, %s40
    %p42 = scmp.eq.s32.totalorder %s16, 0
    %p43 = por %p41, %p42
    %s45 = sadd.s32 %s44, 1
    %p48 = scmp.eq.s32.totalorder %s10, 1
    %p49 = scmp.ne.s32.totalorder %s44, %s46
    %p50 = scmp.eq.s32.totalorder %s10, 0
    %p51 = por %p49, %p50
    %p52 = scmp.ne.s32.totalorder %s44, %s46
    %p53 = scmp.eq.s32.totalorder %s15, 1
    %p54 = por %p52, %p53
    %p55 = scmp.ne.s32.totalorder %s46, %s47
    %p56 = scmp.eq.s32.totalorder %s15, 0
    %p57 = por %p55, %p56
    %p58 = scmp.ne.s32.totalorder %s46, %s47
    %p59 = scmp.eq.s32.totalorder %s16, 1
    %p60 = por %p58, %p59
    %p62 = scmp.ne.s32.totalorder %s47, %s61
    %p63 = scmp.eq.s32.totalorder %s16, 0
    %p64 = por %p62, %p63
    %s66 = sadd.s32 %s65, 1
    %p69 = scmp.eq.s32.totalorder %s10, 1
    %p70 = scmp.ne.s32.totalorder %s65, %s67
    %p71 = scmp.eq.s32.totalorder %s10, 0
    %p72 = por %p70, %p71
    %p73 = scmp.ne.s32.totalorder %s65, %s67
    %p74 = scmp.eq.s32.totalorder %s15, 1
    %p75 = por %p73, %p74
    %p76 = scmp.ne.s32.totalorder %s67, %s68
    %p77 = scmp.eq.s32.totalorder %s15, 0
    %p78 = por %p76, %p77
    %p79 = scmp.ne.s32.totalorder %s67, %s68
    %p80 = scmp.eq.s32.totalorder %s16, 1
    %p81 = por %p79, %p80
    %p83 = scmp.ne.s32.totalorder %s68, %s82
    %p84 = scmp.eq.s32.totalorder %s16, 0
    %p85 = por %p83, %p84
    %s86 = ssub.s32 %s10, %s17
    %p87 = scmp.eq.s32.totalorder %s86, 0
    %s89 = sadd.s32 %s88, 1
    %s90 = scalar_select %p87, %s88, %s89
    %p93 = pneg %p87
    %p94 = scmp.eq.s32.totalorder %s10, 1
    %p95 = por %p93, %p94
    %p96 = scmp.ne.s32.totalorder %s88, %s91
    %p97 = scmp.eq.s32.totalorder %s10, 0
    %p98 = por %p96, %p97
    %p99 = scmp.ne.s32.totalorder %s88, %s91
    %p100 = scmp.eq.s32.totalorder %s15, 1
    %p101 = por %p99, %p100
    %p102 = scmp.ne.s32.totalorder %s91, %s92
    %p103 = scmp.eq.s32.totalorder %s15, 0
    %p104 = por %p102, %p103
    %p105 = scmp.ne.s32.totalorder %s91, %s92
    %p106 = scmp.eq.s32.totalorder %s16, 1
    %p107 = por %p105, %p106
    %p109 = scmp.ne.s32.totalorder %s92, %s108
    %p110 = scmp.eq.s32.totalorder %s16, 0
    %p111 = por %p109, %p110
    %s112 = ssub.s32 %s10, %s17
    %p113 = scmp.eq.s32.totalorder %s112, 0
    %s115 = sadd.s32 %s114, 1
    %s116 = scalar_select %p113, %s114, %s115
    %p119 = pneg %p113
    %p120 = scmp.eq.s32.totalorder %s10, 1
    %p121 = por %p119, %p120
    %p122 = scmp.ne.s32.totalorder %s114, %s117
    %p123 = scmp.eq.s32.totalorder %s10, 0
    %p124 = por %p122, %p123
    %p125 = scmp.ne.s32.totalorder %s114, %s117
    %p126 = scmp.eq.s32.totalorder %s15, 1
    %p127 = por %p125, %p126
    %p128 = scmp.ne.s32.totalorder %s117, %s118
    %p129 = scmp.eq.s32.totalorder %s15, 0
    %p130 = por %p128, %p129
    %p131 = scmp.ne.s32.totalorder %s117, %s118
    %p132 = scmp.eq.s32.totalorder %s16, 1
    %p133 = por %p131, %p132
    %p135 = scmp.ne.s32.totalorder %s118, %s134
    %p136 = scmp.eq.s32.totalorder %s16, 0
    %p137 = por %p135, %p136
    %p138 = scmp.le.s32.totalorder 1, %s10
    %p139 = scmp.lt.s32.totalorder %s10, 3
    %p140 = pnand %p138, %p139
    %p141 = pneg %p140
    // Predicated region
    $region9: #{decoder_forward.3} parent=5 // pred_check
      _
    $region10: #{decoder_forward.3} parent=5 // pred_check_branch
      %143 = sbr.rel (%p140) target = $region12
    $region11: #{decoder_forward.3} parent=5 // pred_region
      %s144 = ssub.s32 %s10, 1
      // Predicated region
      $region13: #{decoder_forward.3} parent=11 // pred_check
        %p145 = pneg %p57
      $region14: #{decoder_forward.3} parent=11 // pred_check_branch
        %147 = sbr.rel (%p145) target = $region16
      $region15: #{decoder_forward.3} parent=11 // pred_region
        _
      $region16: #{decoder_forward.3} parent=11 // pred_fallthru
        _
      // Predicated region
      $region17: #{decoder_forward.3} parent=11 // pred_check
        %p148 = pneg %p78
      $region18: #{decoder_forward.3} parent=11 // pred_check_branch
        %150 = sbr.rel (%p148) target = $region20
      $region19: #{decoder_forward.3} parent=11 // pred_region
        _
      $region20: #{decoder_forward.3} parent=11 // pred_fallthru
        _
    $region12: #{decoder_forward.3} parent=5 // pred_fallthru
      _
    %p151 = scmp.lt.s32.totalorder %s10, 2
    // Predicated region
    $region21: #{decoder_forward.3} parent=5 // pred_check
      %p152 = pneg %p151
    $region22: #{decoder_forward.3} parent=5 // pred_check_branch
      %154 = sbr.rel (%p152) target = $region24
    $region23: #{decoder_forward.3} parent=5 // pred_region
      // Predicated region
      $region25: #{decoder_forward.3} parent=23 // pred_check
        %p155 = pneg %p30
      $region26: #{decoder_forward.3} parent=23 // pred_check_branch
        %157 = sbr.rel (%p155) target = $region28
      $region27: #{decoder_forward.3} parent=23 // pred_region
        %p158 = scmp.lt.s32.totalorder %s10, 1
        %s159 = scalar_select %p158, %s10, 1
        %s160 = smul.addr %s159, 8
        %s161 = scalar_lea.vmem %s0, %s160
      $region28: #{decoder_forward.3} parent=23 // pred_fallthru
        _
      // Predicated region
      $region29: #{decoder_forward.3} parent=23 // pred_check
        %p162 = pneg %p98
      $region30: #{decoder_forward.3} parent=23 // pred_check_branch
        %164 = sbr.rel (%p162) target = $region32
      $region31: #{decoder_forward.3} parent=23 // pred_region
        %p165 = scmp.lt.s32.totalorder %s10, 1
        %s166 = scalar_select %p165, %s10, 1
        %s167 = smul.addr %s166, 8
        %s168 = scalar_lea.vmem %s3, %s167
      $region32: #{decoder_forward.3} parent=23 // pred_fallthru
        _
    $region24: #{decoder_forward.3} parent=5 // pred_fallthru
      _
    %p169 = scmp.le.s32.totalorder 1, %s10
    %p170 = scmp.lt.s32.totalorder %s10, 3
    %p171 = pnand %p169, %p170
    %p172 = pneg %p171
    // Predicated region
    $region33: #{decoder_forward.3} parent=5 // pred_check
      _
    $region34: #{decoder_forward.3} parent=5 // pred_check_branch
      %174 = sbr.rel (%p171) target = $region36
    $region35: #{decoder_forward.3} parent=5 // pred_region
      %s175 = ssub.s32 %s10, 1
      %p176 = scmp.lt.s32.totalorder %s15, 1
      %s177 = scalar_select %p176, %s15, 1
      %s178 = smul.addr %s177, 8
      %s179 = scalar_lea.vmem %s0, %s178
      %p180 = pneg %p36
      %p181 = pneg %p33
      %p182 = pneg %p57
      %p183 = pneg %p54
      %p184 = pneg %p78
      %p185 = pneg %p75
      %p186 = scmp.lt.s32.totalorder %s15, 1
      %s187 = scalar_select %p186, %s15, 1
      %s188 = smul.addr %s187, 8
      %s189 = scalar_lea.vmem %s3, %s188
      %p190 = pneg %p104
      %p191 = pneg %p101
      %p192 = pneg %p130
      %p193 = pneg %p127
      %p194 = scmp.lt.s32.totalorder %s15, 1
      %s195 = scalar_select %p194, %s15, 1
      %s196 = smul.addr %s195, 8
      %s197 = scalar_lea.vmem %s4, %s196
      %p198 = scmp.lt.s32.totalorder %s15, 1
      %s199 = scalar_select %p198, %s15, 1
      %s200 = smul.addr %s199, 8
      %s201 = scalar_lea.vmem %s0, %s200
      %p202 = scmp.lt.s32.totalorder %s15, 1
      %s203 = scalar_select %p202, %s15, 1
      %s204 = smul.addr %s203, 8
      %s205 = scalar_lea.vmem %s3, %s204
      %p206 = scmp.lt.s32.totalorder %s15, 1
      %s207 = scalar_select %p206, %s15, 1
      %s208 = smul.addr %s207, 8
      %s209 = scalar_lea.vmem %s4, %s208
      %v211 = vld [vmem:[%s201] sm:$0xff]
      %v212 = vpack.c.bf16 %v211, %v211
      %v213 = vld [vmem:[%s1] sm:$0xf]
      %v214 = vld [vmem:[%s1 + $0x4] sm:$0xf]
      %v215 = vld [vmem:[%s1 + $0x8] sm:$0xf]
      %v216 = vld [vmem:[%s1 + $0xc] sm:$0xf]
      %v217 = vld [vmem:[%s2] sm:$0x1]
      %v219 = vlaneseq
      %v220 = vshrl.u32 %v219, 7
      %v221 = vsub.s32 0, %v220
      %v222 = vrot.slane %v217, %v221
      %v228 = vunpack.c.l.b16 %v213
      %v229 = vunpack.c.l.b16 %v214
      %v230 = vunpack.c.l.b16 %v215
      %v231 = vunpack.c.l.b16 %v216
      %v232 = vpack.c.b16 %v229, %v228
      %v233 = vpack.c.b16 %v231, %v230
      %vm236 = vcmask 261120
      %v238 = vsel %vm236, %v212, 0
      %240 = vmatprep.subr.bf16.mxu0 0
      %241 = vmatpush1.bf16.msra.mxu0 %v232
      %242 = vmatprep.subr.bf16.mxu0 0
      %243 = vmatpush1.bf16.msra.mxu0 %v233
      %244 = vmatprep.subr.bf16.mxu0 0
      %245 = vmatpush1.bf16.msra.mxu0 0
      %246 = vmatprep.subr.bf16.mxu0 0
      %247 = vmatpush1.bf16.msra.mxu0 0
      %248 = vmatprep.subr.bf16.mxu0 0
      %249 = vmatpush1.bf16.msra.mxu0 0
      %250 = vmatprep.subr.bf16.mxu0 0
      %251 = vmatpush1.bf16.msra.mxu0 0
      %252 = vmatprep.subr.bf16.mxu0 0
      %253 = vmatpush1.bf16.msra.mxu0 0
      %254 = vmatprep.subr.bf16.mxu0 0
      %255 = vmatpush1.bf16.msra.mxu0 0
      %256 = vmatprep.subr.bf16.mxu0 0
      %257 = vmatpush1.bf16.msra.mxu0 0
      %258 = vmatprep.subr.bf16.mxu0 0
      %259 = vmatpush1.bf16.msra.mxu0 0
      %260 = vmatprep.subr.bf16.mxu0 0
      %261 = vmatpush1.bf16.msra.mxu0 0
      %262 = vmatprep.subr.bf16.mxu0 0
      %263 = vmatpush1.bf16.msra.mxu0 0
      %264 = vmatprep.subr.bf16.mxu0 0
      %265 = vmatpush1.bf16.msra.mxu0 0
      %266 = vmatprep.subr.bf16.mxu0 0
      %267 = vmatpush1.bf16.msra.mxu0 0
      %268 = vmatprep.subr.bf16.mxu0 0
      %269 = vmatpush1.bf16.msra.mxu0 0
      %270 = vmatprep.subr.bf16.mxu0 0
      %271 = vmatpush1.bf16.msra.mxu0 0
      %272 = vmatprep.mubr.bf16.mxu0 0
      %273 = vmatmul.mubr.bf16.gmra.mrb[0].mxu0 %v238
      %v274 = vpop.f32.mrb[0].mxu0
      %v275 = vadd.f32 %v222, %v274
      %v276 = vpop.f32.mrb[0].mxu0
      %v277 = vpop.f32.mrb[0].mxu0
      %v278 = vpop.f32.mrb[0].mxu0
      %279 = vdwg.mxu0
      %v280 = vld [vmem:[%s205] sm:$0xff]
      %v281 = vadd.f32 %v275, %v280
      %282 = vst [vmem:[%s209] sm:$0xff] %v281
      %p283 = scmp.lt.s32.totalorder %s15, 1
      %s284 = scalar_select %p283, %s15, 1
      %s285 = smul.addr %s284, 8
      %s286 = scalar_lea.vmem %s4, %s285
      // Predicated region
      $region37: #{decoder_forward.3} parent=35 // pred_check
        %p287 = pneg %p127
      $region38: #{decoder_forward.3} parent=35 // pred_check_branch
        %289 = sbr.rel (%p287) target = $region40
      $region39: #{decoder_forward.3} parent=35 // pred_region
        _
      $region40: #{decoder_forward.3} parent=35 // pred_fallthru
        _
    $region36: #{decoder_forward.3} parent=5 // pred_fallthru
      _
    %p290 = scmp.le.s32.totalorder 2, %s10
    // Predicated region
    $region41: #{decoder_forward.3} parent=5 // pred_check
      %p291 = pneg %p290
    $region42: #{decoder_forward.3} parent=5 // pred_check_branch
      %293 = sbr.rel (%p291) target = $region44
    $region43: #{decoder_forward.3} parent=5 // pred_region
      %s294 = ssub.s32 %s10, 2
      // Predicated region
      $region45: #{decoder_forward.3} parent=43 // pred_check
        %p295 = pneg %p133
      $region46: #{decoder_forward.3} parent=43 // pred_check_branch
        %297 = sbr.rel (%p295) target = $region48
      $region47: #{decoder_forward.3} parent=43 // pred_region
        %p298 = scmp.lt.s32.totalorder %s16, 1
        %s299 = scalar_select %p298, %s16, 1
        %s300 = smul.addr %s299, 8
        %s301 = scalar_lea.vmem %s4, %s300
      $region48: #{decoder_forward.3} parent=43 // pred_fallthru
        _
    $region44: #{decoder_forward.3} parent=5 // pred_fallthru
      _
  $region6: #{decoder_forward.3} parent=0 // loop_footer
    %s14 = sadd.s32 1, %s10
  $region7: #{decoder_forward.3} parent=0 // loop_footer_branch
    %9 = sbr.rel target = $region3
  $region8: #{decoder_forward.3} parent=0 // loop_exit
    _

// kernel: decoder_forward.5
$region0: #{decoder_forward.5}
  #allocation0 [shape = 'u32[]', space=smem, size = 0x4, offset = 0x4, fixed_abs, tag = 'smem constant byte address 0x4 - core index']
  #allocation1 [shape = 'u32[144,128]{1,0:T(1,128)}', space=vmem, size = 0x12000, scoped, tag = 'internal scratch']
  %s0 = inlined_call_operand.vmem [shape: f32[16,32], index: 0, kind: input, shape index: {}]
  %s1 = inlined_call_operand.vmem [shape: bf16[32,128], index: 1, kind: input, shape index: {}]
  %s2 = inlined_call_operand.vmem [shape: f32[1,128], index: 2, kind: input, shape index: {}]
  %s3 = inlined_call_operand.vmem [shape: f32[16,128], index: 3, kind: output, shape index: {}]
  %s4 = sld [smem:[#allocation0]]
  $region45: #{decoder_forward.5} parent=0
    _
  %s6 = ssub.s32 1, %s4
  %s7 = scalar_select 0, %s6, %s4
  loop: start=0, step=1, limit=4
  $region2: #{decoder_forward.5} parent=0 // loop_pre_header
    _
  $region3: #{decoder_forward.5} parent=0 // loop_header
    %s9 = sphi 0, %s13
    %p10 = scmp.ge.s32.totalorder %s9, 4
    %s19 = sphi 0, %s21
    %s22 = sphi 0, %s19
    %s23 = sphi 0, %s22
    %s39 = sphi 0, %s23
    %s43 = sphi 0, %s43
    %s45 = sphi 0, %s43
    %s46 = sphi 0, %s45
    %s60 = sphi 0, %s46
    %s64 = sphi 0, %s64
    %s66 = sphi 0, %s64
    %s67 = sphi 0, %s66
    %s81 = sphi 0, %s67
    %s87 = sphi 0, %s89
    %s90 = sphi 0, %s87
    %s91 = sphi 0, %s90
    %s107 = sphi 0, %s91
  $region4: #{decoder_forward.5} parent=0 // loop_header_branch
    %12 = sbr.rel (%p10) target = $region8
  $region5: #{decoder_forward.5} parent=0 // loop_body
    %s14 = ssub.s32 %s9, 1
    %s15 = ssub.s32 %s9, 2
    %s16 = sadd.s32 %s9, 1
    %s17 = ssub.s32 %s9, %s16
    %p18 = scmp.eq.s32.totalorder %s17, 0
    %s20 = sadd.s32 %s19, 1
    %s21 = scalar_select %p18, %s19, %s20
    %p24 = pneg %p18
    %p25 = scmp.eq.s32.totalorder %s9, 1
    %p26 = por %p24, %p25
    %p27 = scmp.ne.s32.totalorder %s19, %s22
    %p28 = scmp.eq.s32.totalorder %s9, 0
    %p29 = por %p27, %p28
    %p30 = scmp.ne.s32.totalorder %s19, %s22
    %p31 = scmp.eq.s32.totalorder %s14, 1
    %p32 = por %p30, %p31
    %p33 = scmp.ne.s32.totalorder %s22, %s23
    %p34 = scmp.eq.s32.totalorder %s14, 0
    %p35 = por %p33, %p34
    %p36 = scmp.ne.s32.totalorder %s22, %s23
    %p37 = scmp.eq.s32.totalorder %s15, 1
    %p38 = por %p36, %p37
    %p40 = scmp.ne.s32.totalorder %s23, %s39
    %p41 = scmp.eq.s32.totalorder %s15, 0
    %p42 = por %p40, %p41
    %s44 = sadd.s32 %s43, 1
    %p47 = scmp.eq.s32.totalorder %s9, 1
    %p48 = scmp.ne.s32.totalorder %s43, %s45
    %p49 = scmp.eq.s32.totalorder %s9, 0
    %p50 = por %p48, %p49
    %p51 = scmp.ne.s32.totalorder %s43, %s45
    %p52 = scmp.eq.s32.totalorder %s14, 1
    %p53 = por %p51, %p52
    %p54 = scmp.ne.s32.totalorder %s45, %s46
    %p55 = scmp.eq.s32.totalorder %s14, 0
    %p56 = por %p54, %p55
    %p57 = scmp.ne.s32.totalorder %s45, %s46
    %p58 = scmp.eq.s32.totalorder %s15, 1
    %p59 = por %p57, %p58
    %p61 = scmp.ne.s32.totalorder %s46, %s60
    %p62 = scmp.eq.s32.totalorder %s15, 0
    %p63 = por %p61, %p62
    %s65 = sadd.s32 %s64, 1
    %p68 = scmp.eq.s32.totalorder %s9, 1
    %p69 = scmp.ne.s32.totalorder %s64, %s66
    %p70 = scmp.eq.s32.totalorder %s9, 0
    %p71 = por %p69, %p70
    %p72 = scmp.ne.s32.totalorder %s64, %s66
    %p73 = scmp.eq.s32.totalorder %s14, 1
    %p74 = por %p72, %p73
    %p75 = scmp.ne.s32.totalorder %s66, %s67
    %p76 = scmp.eq.s32.totalorder %s14, 0
    %p77 = por %p75, %p76
    %p78 = scmp.ne.s32.totalorder %s66, %s67
    %p79 = scmp.eq.s32.totalorder %s15, 1
    %p80 = por %p78, %p79
    %p82 = scmp.ne.s32.totalorder %s67, %s81
    %p83 = scmp.eq.s32.totalorder %s15, 0
    %p84 = por %p82, %p83
    %s85 = ssub.s32 %s9, %s16
    %p86 = scmp.eq.s32.totalorder %s85, 0
    %s88 = sadd.s32 %s87, 1
    %s89 = scalar_select %p86, %s87, %s88
    %p92 = pneg %p86
    %p93 = scmp.eq.s32.totalorder %s9, 1
    %p94 = por %p92, %p93
    %p95 = scmp.ne.s32.totalorder %s87, %s90
    %p96 = scmp.eq.s32.totalorder %s9, 0
    %p97 = por %p95, %p96
    %p98 = scmp.ne.s32.totalorder %s87, %s90
    %p99 = scmp.eq.s32.totalorder %s14, 1
    %p100 = por %p98, %p99
    %p101 = scmp.ne.s32.totalorder %s90, %s91
    %p102 = scmp.eq.s32.totalorder %s14, 0
    %p103 = por %p101, %p102
    %p104 = scmp.ne.s32.totalorder %s90, %s91
    %p105 = scmp.eq.s32.totalorder %s15, 1
    %p106 = por %p104, %p105
    %p108 = scmp.ne.s32.totalorder %s91, %s107
    %p109 = scmp.eq.s32.totalorder %s15, 0
    %p110 = por %p108, %p109
    %p111 = scmp.le.s32.totalorder 1, %s9
    %p112 = scmp.lt.s32.totalorder %s9, 3
    %p113 = pnand %p111, %p112
    %p114 = pneg %p113
    // Predicated region
    $region9: #{decoder_forward.5} parent=5 // pred_check
      _
    $region10: #{decoder_forward.5} parent=5 // pred_check_branch
      %116 = sbr.rel (%p113) target = $region12
    $region11: #{decoder_forward.5} parent=5 // pred_region
      %s117 = ssub.s32 %s9, 1
      // Predicated region
      $region13: #{decoder_forward.5} parent=11 // pred_check
        %p118 = pneg %p56
      $region14: #{decoder_forward.5} parent=11 // pred_check_branch
        %120 = sbr.rel (%p118) target = $region16
      $region15: #{decoder_forward.5} parent=11 // pred_region
        _
      $region16: #{decoder_forward.5} parent=11 // pred_fallthru
        _
      // Predicated region
      $region17: #{decoder_forward.5} parent=11 // pred_check
        %p121 = pneg %p77
      $region18: #{decoder_forward.5} parent=11 // pred_check_branch
        %123 = sbr.rel (%p121) target = $region20
      $region19: #{decoder_forward.5} parent=11 // pred_region
        _
      $region20: #{decoder_forward.5} parent=11 // pred_fallthru
        _
    $region12: #{decoder_forward.5} parent=5 // pred_fallthru
      _
    %p124 = scmp.lt.s32.totalorder %s9, 2
    // Predicated region
    $region21: #{decoder_forward.5} parent=5 // pred_check
      %p125 = pneg %p124
    $region22: #{decoder_forward.5} parent=5 // pred_check_branch
      %127 = sbr.rel (%p125) target = $region24
    $region23: #{decoder_forward.5} parent=5 // pred_region
      // Predicated region
      $region25: #{decoder_forward.5} parent=23 // pred_check
        %p128 = pneg %p29
      $region26: #{decoder_forward.5} parent=23 // pred_check_branch
        %130 = sbr.rel (%p128) target = $region28
      $region27: #{decoder_forward.5} parent=23 // pred_region
        %p131 = scmp.lt.s32.totalorder %s9, 1
        %s132 = scalar_select %p131, %s9, 1
        %s133 = smul.addr %s132, 8
        %s134 = scalar_lea.vmem %s0, %s133
      $region28: #{decoder_forward.5} parent=23 // pred_fallthru
        _
    $region24: #{decoder_forward.5} parent=5 // pred_fallthru
      _
    %p135 = scmp.le.s32.totalorder 1, %s9
    %p136 = scmp.lt.s32.totalorder %s9, 3
    %p137 = pnand %p135, %p136
    %p138 = pneg %p137
    // Predicated region
    $region29: #{decoder_forward.5} parent=5 // pred_check
      _
    $region30: #{decoder_forward.5} parent=5 // pred_check_branch
      %140 = sbr.rel (%p137) target = $region32
    $region31: #{decoder_forward.5} parent=5 // pred_region
      %s141 = ssub.s32 %s9, 1
      %p142 = scmp.lt.s32.totalorder %s14, 1
      %s143 = scalar_select %p142, %s14, 1
      %s144 = smul.addr %s143, 8
      %s145 = scalar_lea.vmem %s0, %s144
      %p146 = pneg %p35
      %p147 = pneg %p32
      %p148 = pneg %p56
      %p149 = pneg %p53
      %p150 = pneg %p77
      %p151 = pneg %p74
      %p152 = pneg %p103
      %p153 = pneg %p100
      %p154 = scmp.lt.s32.totalorder %s14, 1
      %s155 = scalar_select %p154, %s14, 1
      %s156 = smul.addr %s155, 8
      %s157 = scalar_lea.vmem %s3, %s156
      %p158 = scmp.lt.s32.totalorder %s14, 1
      %s159 = scalar_select %p158, %s14, 1
      %s160 = smul.addr %s159, 8
      %s161 = scalar_lea.vmem %s0, %s160
      %p162 = scmp.lt.s32.totalorder %s14, 1
      %s163 = scalar_select %p162, %s14, 1
      %s164 = smul.addr %s163, 8
      %s165 = scalar_lea.vmem %s3, %s164
      %v167 = vld [vmem:[%s161] sm:$0xff]
      %v168 = vpack.c.bf16 %v167, %v167
      %v169 = vld [vmem:[%s1] sm:$0xf]
      %v170 = vld [vmem:[%s1 + $0x4] sm:$0xf]
      %v171 = vld [vmem:[%s1 + $0x8] sm:$0xf]
      %v172 = vld [vmem:[%s1 + $0xc] sm:$0xf]
      %v173 = vld [vmem:[%s2] sm:$0x1]
      %v175 = vlaneseq
      %v176 = vshrl.u32 %v175, 7
      %v177 = vsub.s32 0, %v176
      %v178 = vrot.slane %v173, %v177
      %v184 = vunpack.c.l.b16 %v169
      %v185 = vunpack.c.l.b16 %v170
      %v186 = vunpack.c.l.b16 %v171
      %v187 = vunpack.c.l.b16 %v172
      %v188 = vpack.c.b16 %v185, %v184
      %v189 = vpack.c.b16 %v187, %v186
      %vm192 = vcmask 261120
      %v194 = vsel %vm192, %v168, 0
      %196 = vmatprep.subr.bf16.mxu0 0
      %197 = vmatpush1.bf16.msra.mxu0 %v188
      %198 = vmatprep.subr.bf16.mxu0 0
      %199 = vmatpush1.bf16.msra.mxu0 %v189
      %200 = vmatprep.subr.bf16.mxu0 0
      %201 = vmatpush1.bf16.msra.mxu0 0
      %202 = vmatprep.subr.bf16.mxu0 0
      %203 = vmatpush1.bf16.msra.mxu0 0
      %204 = vmatprep.subr.bf16.mxu0 0
      %205 = vmatpush1.bf16.msra.mxu0 0
      %206 = vmatprep.subr.bf16.mxu0 0
      %207 = vmatpush1.bf16.msra.mxu0 0
      %208 = vmatprep.subr.bf16.mxu0 0
      %209 = vmatpush1.bf16.msra.mxu0 0
      %210 = vmatprep.subr.bf16.mxu0 0
      %211 = vmatpush1.bf16.msra.mxu0 0
      %212 = vmatprep.subr.bf16.mxu0 0
      %213 = vmatpush1.bf16.msra.mxu0 0
      %214 = vmatprep.subr.bf16.mxu0 0
      %215 = vmatpush1.bf16.msra.mxu0 0
      %216 = vmatprep.subr.bf16.mxu0 0
      %217 = vmatpush1.bf16.msra.mxu0 0
      %218 = vmatprep.subr.bf16.mxu0 0
      %219 = vmatpush1.bf16.msra.mxu0 0
      %220 = vmatprep.subr.bf16.mxu0 0
      %221 = vmatpush1.bf16.msra.mxu0 0
      %222 = vmatprep.subr.bf16.mxu0 0
      %223 = vmatpush1.bf16.msra.mxu0 0
      %224 = vmatprep.subr.bf16.mxu0 0
      %225 = vmatpush1.bf16.msra.mxu0 0
      %226 = vmatprep.subr.bf16.mxu0 0
      %227 = vmatpush1.bf16.msra.mxu0 0
      %228 = vmatprep.mubr.bf16.mxu0 0
      %229 = vmatmul.mubr.bf16.gmra.mrb[0].mxu0 %v194
      %v230 = vpop.f32.mrb[0].mxu0
      %v231 = vadd.f32 %v178, %v230
      %v232 = vpop.f32.mrb[0].mxu0
      %v233 = vpop.f32.mrb[0].mxu0
      %v234 = vpop.f32.mrb[0].mxu0
      %235 = vdwg.mxu0
      %236 = vst [vmem:[%s165] sm:$0xff] %v231
      %p237 = scmp.lt.s32.totalorder %s14, 1
      %s238 = scalar_select %p237, %s14, 1
      %s239 = smul.addr %s238, 8
      %s240 = scalar_lea.vmem %s3, %s239
      // Predicated region
      $region33: #{decoder_forward.5} parent=31 // pred_check
        %p241 = pneg %p100
      $region34: #{decoder_forward.5} parent=31 // pred_check_branch
        %243 = sbr.rel (%p241) target = $region36
      $region35: #{decoder_forward.5} parent=31 // pred_region
        _
      $region36: #{decoder_forward.5} parent=31 // pred_fallthru
        _
    $region32: #{decoder_forward.5} parent=5 // pred_fallthru
      _
    %p244 = scmp.le.s32.totalorder 2, %s9
    // Predicated region
    $region37: #{decoder_forward.5} parent=5 // pred_check
      %p245 = pneg %p244
    $region38: #{decoder_forward.5} parent=5 // pred_check_branch
      %247 = sbr.rel (%p245) target = $region40
    $region39: #{decoder_forward.5} parent=5 // pred_region
      %s248 = ssub.s32 %s9, 2
      // Predicated region
      $region41: #{decoder_forward.5} parent=39 // pred_check
        %p249 = pneg %p106
      $region42: #{decoder_forward.5} parent=39 // pred_check_branch
        %251 = sbr.rel (%p249) target = $region44
      $region43: #{decoder_forward.5} parent=39 // pred_region
        %p252 = scmp.lt.s32.totalorder %s15, 1
        %s253 = scalar_select %p252, %s15, 1
        %s254 = smul.addr %s253, 8
        %s255 = scalar_lea.vmem %s3, %s254
      $region44: #{decoder_forward.5} parent=39 // pred_fallthru
        _
    $region40: #{decoder_forward.5} parent=5 // pred_fallthru
      _
  $region6: #{decoder_forward.5} parent=0 // loop_footer
    %s13 = sadd.s32 1, %s9
  $region7: #{decoder_forward.5} parent=0 // loop_footer_branch
    %8 = sbr.rel target = $region3
  $region8: #{decoder_forward.5} parent=0 // loop_exit
    _

// kernel: decoder_forward.4
$region0: #{decoder_forward.4}
  #allocation0 [shape = 'u32[]', space=smem, size = 0x4, offset = 0x4, fixed_abs, tag = 'smem constant byte address 0x4 - core index']
  #allocation1 [shape = 'u32[144,128]{1,0:T(1,128)}', space=vmem, size = 0x12000, scoped, tag = 'internal scratch']
  %s0 = inlined_call_operand.vmem [shape: f32[2,8,32], index: 0, kind: input, shape index: {}]
  %s1 = inlined_call_operand.vmem [shape: bf16[2,8,32], index: 1, kind: input, shape index: {}]
  %s2 = inlined_call_operand.vmem [shape: bf16[2,4,32,8], index: 2, kind: input, shape index: {}]
  %s3 = inlined_call_operand.vmem [shape: bf16[2,4,32,8], index: 3, kind: input, shape index: {}]
  %s4 = inlined_call_operand.vmem [shape: bf16[2,4,32,8], index: 4, kind: input, shape index: {}]
  %s5 = inlined_call_operand.vmem [shape: bf16[2,32,32], index: 5, kind: input, shape index: {}]
  %s6 = inlined_call_operand.vmem [shape: bf16[2,4,8,32], index: 6, kind: input, shape index: {}]
  %s7 = inlined_call_operand.vmem [shape: f32[2,1,32], index: 7, kind: input, shape index: {}]
  %s8 = inlined_call_operand.vmem [shape: f32[2,1,32], index: 8, kind: input, shape index: {}]
  %s9 = inlined_call_operand.vmem [shape: f32[2,1,32], index: 9, kind: input, shape index: {}]
  %s10 = inlined_call_operand.vmem [shape: bf16[2,4,32,8], index: 10, kind: input, shape index: {}]
  %s11 = inlined_call_operand.vmem [shape: bf16[2,4,32,8], index: 11, kind: input, shape index: {}]
  %s12 = inlined_call_operand.vmem [shape: bf16[2,4,32,8], index: 12, kind: input, shape index: {}]
  %s13 = inlined_call_operand.vmem [shape: bf16[2,32,32], index: 13, kind: input, shape index: {}]
  %s14 = inlined_call_operand.vmem [shape: bf16[2,4,8,32], index: 14, kind: input, shape index: {}]
  %s15 = inlined_call_operand.vmem [shape: f32[2,1,32], index: 15, kind: input, shape index: {}]
  %s16 = inlined_call_operand.vmem [shape: f32[2,1,32], index: 16, kind: input, shape index: {}]
  %s17 = inlined_call_operand.vmem [shape: f32[2,1,32], index: 17, kind: input, shape index: {}]
  %s18 = inlined_call_operand.vmem [shape: bf16[2,32,128], index: 18, kind: input, shape index: {}]
  %s19 = inlined_call_operand.vmem [shape: f32[2,1,128], index: 19, kind: input, shape index: {}]
  %s20 = inlined_call_operand.vmem [shape: bf16[2,128,32], index: 20, kind: input, shape index: {}]
  %s21 = inlined_call_operand.vmem [shape: f32[2,1,32], index: 21, kind: input, shape index: {}]
  %s22 = inlined_call_operand.vmem [shape: f32[2,1,32], index: 22, kind: input, shape index: {}]
  %s23 = inlined_call_operand.vmem [shape: f32[2,1,32], index: 23, kind: input, shape index: {}]
  %s24 = inlined_call_operand.vmem [shape: f32[2,8,32], index: 24, kind: output, shape index: {0}]
  %s25 = inlined_call_operand.vmem [shape: bf16[2,4,2,8,8], index: 25, kind: output, shape index: {1}]
  %s26 = inlined_call_operand.vmem [shape: bf16[2,4,2,8,8], index: 26, kind: output, shape index: {2}]
  %27 = xla_tuple %s24, %s25, %s26
  %s28 = sld [smem:[#allocation0]]
  $region237: #{decoder_forward.4} parent=0
    _
  %s30 = ssub.s32 1, %s28
  %s31 = scalar_select 0, %s30, %s28
  $region1: #{decoder_forward.4} parent=0
    #allocation2 [shape = 'u8[16384]{0}', space=vmem, size = 0x4000, scoped, tag = 'output window, operand 1']
    #allocation3 [shape = 'u8[16384]{0}', space=vmem, size = 0x4000, scoped, tag = 'output window, operand 2']
    loop: start=0, step=1, limit=6
    $region2: #{decoder_forward.4} parent=1 // loop_pre_header
      _
    $region3: #{decoder_forward.4} parent=1 // loop_header
      %s33 = sphi 0, %s37
      %p34 = scmp.ge.s32.totalorder %s33, 6
      %s40 = sphi 0, %s52
      %s41 = sphi 0, %s48
      %s42 = sphi 0, %s40
      %s43 = sphi 0, %s41
      %s44 = sphi 0, %s42
      %s45 = sphi 0, %s43
      %s55 = sphi 0, %s57
      %s58 = sphi 0, %s55
      %s59 = sphi 0, %s58
      %s75 = sphi 0, %s59
      %s81 = sphi 0, %s83
      %s84 = sphi 0, %s81
      %s85 = sphi 0, %s84
      %s101 = sphi 0, %s85
      %s107 = sphi 0, %s109
      %s110 = sphi 0, %s107
      %s111 = sphi 0, %s110
      %s127 = sphi 0, %s111
      %s133 = sphi 0, %s135
      %s136 = sphi 0, %s133
      %s137 = sphi 0, %s136
      %s153 = sphi 0, %s137
      %s159 = sphi 0, %s161
      %s162 = sphi 0, %s159
      %s163 = sphi 0, %s162
      %s179 = sphi 0, %s163
      %s185 = sphi 0, %s187
      %s188 = sphi 0, %s185
      %s189 = sphi 0, %s188
      %s205 = sphi 0, %s189
      %s211 = sphi 0, %s213
      %s214 = sphi 0, %s211
      %s215 = sphi 0, %s214
      %s231 = sphi 0, %s215
      %s237 = sphi 0, %s239
      %s240 = sphi 0, %s237
      %s241 = sphi 0, %s240
      %s257 = sphi 0, %s241
      %s263 = sphi 0, %s265
      %s266 = sphi 0, %s263
      %s267 = sphi 0, %s266
      %s283 = sphi 0, %s267
      %s289 = sphi 0, %s291
      %s292 = sphi 0, %s289
      %s293 = sphi 0, %s292
      %s309 = sphi 0, %s293
      %s315 = sphi 0, %s317
      %s318 = sphi 0, %s315
      %s319 = sphi 0, %s318
      %s335 = sphi 0, %s319
      %s341 = sphi 0, %s343
      %s344 = sphi 0, %s341
      %s345 = sphi 0, %s344
      %s361 = sphi 0, %s345
      %s367 = sphi 0, %s369
      %s370 = sphi 0, %s367
      %s371 = sphi 0, %s370
      %s387 = sphi 0, %s371
      %s393 = sphi 0, %s395
      %s396 = sphi 0, %s393
      %s397 = sphi 0, %s396
      %s413 = sphi 0, %s397
      %s419 = sphi 0, %s421
      %s422 = sphi 0, %s419
      %s423 = sphi 0, %s422
      %s439 = sphi 0, %s423
      %s445 = sphi 0, %s447
      %s448 = sphi 0, %s445
      %s449 = sphi 0, %s448
      %s465 = sphi 0, %s449
      %s471 = sphi 0, %s473
      %s474 = sphi 0, %s471
      %s475 = sphi 0, %s474
      %s491 = sphi 0, %s475
      %s497 = sphi 0, %s499
      %s500 = sphi 0, %s497
      %s501 = sphi 0, %s500
      %s517 = sphi 0, %s501
      %s523 = sphi 0, %s525
      %s526 = sphi 0, %s523
      %s527 = sphi 0, %s526
      %s543 = sphi 0, %s527
      %s549 = sphi 0, %s551
      %s552 = sphi 0, %s549
      %s553 = sphi 0, %s552
      %s569 = sphi 0, %s553
      %s575 = sphi 0, %s577
      %s578 = sphi 0, %s575
      %s579 = sphi 0, %s578
      %s595 = sphi 0, %s579
      %s601 = sphi 0, %s603
      %s604 = sphi 0, %s601
      %s605 = sphi 0, %s604
      %s621 = sphi 0, %s605
      %s627 = sphi 0, %s629
      %s630 = sphi 0, %s627
      %s631 = sphi 0, %s630
      %s647 = sphi 0, %s631
      %s653 = sphi 0, %s655
      %s656 = sphi 0, %s653
      %s657 = sphi 0, %s656
      %s673 = sphi 0, %s657
      %s679 = sphi 0, %s681
      %s682 = sphi 0, %s679
      %s683 = sphi 0, %s682
      %s699 = sphi 0, %s683
      %s707 = sphi 0, %s709
      %s710 = sphi 0, %s707
      %s711 = sphi 0, %s710
      %s727 = sphi 0, %s711
      %s735 = sphi 0, %s737
      %s738 = sphi 0, %s735
      %s739 = sphi 0, %s738
      %s755 = sphi 0, %s739
    $region4: #{decoder_forward.4} parent=1 // loop_header_branch
      %36 = sbr.rel (%p34) target = $region8
    $region5: #{decoder_forward.4} parent=1 // loop_body
      %s38 = ssub.s32 %s33, 1
      %s39 = ssub.s32 %s33, 2
      %s46 = sadd.s32 1, %s41
      %p47 = scmp.ge.s32.totalorder %s46, 2
      %s48 = scalar_select %p47, 0, %s46
      %s49 = sadd.s32 1, %s40
      %s50 = scalar_select %p47, %s49, %s40
      %p51 = scmp.ge.s32.totalorder %s50, 2
      %s52 = scalar_select %p51, 0, %s50
      %s53 = ssub.s32 %s40, %s52
      %p54 = scmp.eq.s32.totalorder %s53, 0
      %s56 = sadd.s32 %s55, 1
      %s57 = scalar_select %p54, %s55, %s56
      %p60 = pneg %p54
      %p61 = scmp.eq.s32.totalorder %s33, 3
      %p62 = por %p60, %p61
      %p63 = scmp.ne.s32.totalorder %s55, %s58
      %p64 = scmp.eq.s32.totalorder %s33, 0
      %p65 = por %p63, %p64
      %p66 = scmp.ne.s32.totalorder %s55, %s58
      %p67 = scmp.eq.s32.totalorder %s38, 3
      %p68 = por %p66, %p67
      %p69 = scmp.ne.s32.totalorder %s58, %s59
      %p70 = scmp.eq.s32.totalorder %s38, 0
      %p71 = por %p69, %p70
      %p72 = scmp.ne.s32.totalorder %s58, %s59
      %p73 = scmp.eq.s32.totalorder %s39, 3
      %p74 = por %p72, %p73
      %p76 = scmp.ne.s32.totalorder %s59, %s75
      %p77 = scmp.eq.s32.totalorder %s39, 0
      %p78 = por %p76, %p77
      %s79 = ssub.s32 %s40, %s52
      %p80 = scmp.eq.s32.totalorder %s79, 0
      %s82 = sadd.s32 %s81, 1
      %s83 = scalar_select %p80, %s81, %s82
      %p86 = pneg %p80
      %p87 = scmp.eq.s32.totalorder %s33, 3
      %p88 = por %p86, %p87
      %p89 = scmp.ne.s32.totalorder %s81, %s84
      %p90 = scmp.eq.s32.totalorder %s33, 0
      %p91 = por %p89, %p90
      %p92 = scmp.ne.s32.totalorder %s81, %s84
      %p93 = scmp.eq.s32.totalorder %s38, 3
      %p94 = por %p92, %p93
      %p95 = scmp.ne.s32.totalorder %s84, %s85
      %p96 = scmp.eq.s32.totalorder %s38, 0
      %p97 = por %p95, %p96
      %p98 = scmp.ne.s32.totalorder %s84, %s85
      %p99 = scmp.eq.s32.totalorder %s39, 3
      %p100 = por %p98, %p99
      %p102 = scmp.ne.s32.totalorder %s85, %s101
      %p103 = scmp.eq.s32.totalorder %s39, 0
      %p104 = por %p102, %p103
      %s105 = ssub.s32 %s41, %s48
      %p106 = scmp.eq.s32.totalorder %s105, 0
      %s108 = sadd.s32 %s107, 1
      %s109 = scalar_select %p106, %s107, %s108
      %p112 = pneg %p106
      %p113 = scmp.eq.s32.totalorder %s33, 3
      %p114 = por %p112, %p113
      %p115 = scmp.ne.s32.totalorder %s107, %s110
      %p116 = scmp.eq.s32.totalorder %s33, 0
      %p117 = por %p115, %p116
      %p118 = scmp.ne.s32.totalorder %s107, %s110
      %p119 = scmp.eq.s32.totalorder %s38, 3
      %p120 = por %p118, %p119
      %p121 = scmp.ne.s32.totalorder %s110, %s111
      %p122 = scmp.eq.s32.totalorder %s38, 0
      %p123 = por %p121, %p122
      %p124 = scmp.ne.s32.totalorder %s110, %s111
      %p125 = scmp.eq.s32.totalorder %s39, 3
      %p126 = por %p124, %p125
      %p128 = scmp.ne.s32.totalorder %s111, %s127
      %p129 = scmp.eq.s32.totalorder %s39, 0
      %p130 = por %p128, %p129
      %s131 = ssub.s32 %s41, %s48
      %p132 = scmp.eq.s32.totalorder %s131, 0
      %s134 = sadd.s32 %s133, 1
      %s135 = scalar_select %p132, %s133, %s134
      %p138 = pneg %p132
      %p139 = scmp.eq.s32.totalorder %s33, 3
      %p140 = por %p138, %p139
      %p141 = scmp.ne.s32.totalorder %s133, %s136
      %p142 = scmp.eq.s32.totalorder %s33, 0
      %p143 = por %p141, %p142
      %p144 = scmp.ne.s32.totalorder %s133, %s136
      %p145 = scmp.eq.s32.totalorder %s38, 3
      %p146 = por %p144, %p145
      %p147 = scmp.ne.s32.totalorder %s136, %s137
      %p148 = scmp.eq.s32.totalorder %s38, 0
      %p149 = por %p147, %p148
      %p150 = scmp.ne.s32.totalorder %s136, %s137
      %p151 = scmp.eq.s32.totalorder %s39, 3
      %p152 = por %p150, %p151
      %p154 = scmp.ne.s32.totalorder %s137, %s153
      %p155 = scmp.eq.s32.totalorder %s39, 0
      %p156 = por %p154, %p155
      %s157 = ssub.s32 %s41, %s48
      %p158 = scmp.eq.s32.totalorder %s157, 0
      %s160 = sadd.s32 %s159, 1
      %s161 = scalar_select %p158, %s159, %s160
      %p164 = pneg %p158
      %p165 = scmp.eq.s32.totalorder %s33, 3
      %p166 = por %p164, %p165
      %p167 = scmp.ne.s32.totalorder %s159, %s162
      %p168 = scmp.eq.s32.totalorder %s33, 0
      %p169 = por %p167, %p168
      %p170 = scmp.ne.s32.totalorder %s159, %s162
      %p171 = scmp.eq.s32.totalorder %s38, 3
      %p172 = por %p170, %p171
      %p173 = scmp.ne.s32.totalorder %s162, %s163
      %p174 = scmp.eq.s32.totalorder %s38, 0
      %p175 = por %p173, %p174
      %p176 = scmp.ne.s32.totalorder %s162, %s163
      %p177 = scmp.eq.s32.totalorder %s39, 3
      %p178 = por %p176, %p177
      %p180 = scmp.ne.s32.totalorder %s163, %s179
      %p181 = scmp.eq.s32.totalorder %s39, 0
      %p182 = por %p180, %p181
      %s183 = ssub.s32 %s41, %s48
      %p184 = scmp.eq.s32.totalorder %s183, 0
      %s186 = sadd.s32 %s185, 1
      %s187 = scalar_select %p184, %s185, %s186
      %p190 = pneg %p184
      %p191 = scmp.eq.s32.totalorder %s33, 3
      %p192 = por %p190, %p191
      %p193 = scmp.ne.s32.totalorder %s185, %s188
      %p194 = scmp.eq.s32.totalorder %s33, 0
      %p195 = por %p193, %p194
      %p196 = scmp.ne.s32.totalorder %s185, %s188
      %p197 = scmp.eq.s32.totalorder %s38, 3
      %p198 = por %p196, %p197
      %p199 = scmp.ne.s32.totalorder %s188, %s189
      %p200 = scmp.eq.s32.totalorder %s38, 0
      %p201 = por %p199, %p200
      %p202 = scmp.ne.s32.totalorder %s188, %s189
      %p203 = scmp.eq.s32.totalorder %s39, 3
      %p204 = por %p202, %p203
      %p206 = scmp.ne.s32.totalorder %s189, %s205
      %p207 = scmp.eq.s32.totalorder %s39, 0
      %p208 = por %p206, %p207
      %s209 = ssub.s32 %s41, %s48
      %p210 = scmp.eq.s32.totalorder %s209, 0
      %s212 = sadd.s32 %s211, 1
      %s213 = scalar_select %p210, %s211, %s212
      %p216 = pneg %p210
      %p217 = scmp.eq.s32.totalorder %s33, 3
      %p218 = por %p216, %p217
      %p219 = scmp.ne.s32.totalorder %s211, %s214
      %p220 = scmp.eq.s32.totalorder %s33, 0
      %p221 = por %p219, %p220
      %p222 = scmp.ne.s32.totalorder %s211, %s214
      %p223 = scmp.eq.s32.totalorder %s38, 3
      %p224 = por %p222, %p223
      %p225 = scmp.ne.s32.totalorder %s214, %s215
      %p226 = scmp.eq.s32.totalorder %s38, 0
      %p227 = por %p225, %p226
      %p228 = scmp.ne.s32.totalorder %s214, %s215
      %p229 = scmp.eq.s32.totalorder %s39, 3
      %p230 = por %p228, %p229
      %p232 = scmp.ne.s32.totalorder %s215, %s231
      %p233 = scmp.eq.s32.totalorder %s39, 0
      %p234 = por %p232, %p233
      %s235 = ssub.s32 %s41, %s48
      %p236 = scmp.eq.s32.totalorder %s235, 0
      %s238 = sadd.s32 %s237, 1
      %s239 = scalar_select %p236, %s237, %s238
      %p242 = pneg %p236
      %p243 = scmp.eq.s32.totalorder %s33, 3
      %p244 = por %p242, %p243
      %p245 = scmp.ne.s32.totalorder %s237, %s240
      %p246 = scmp.eq.s32.totalorder %s33, 0
      %p247 = por %p245, %p246
      %p248 = scmp.ne.s32.totalorder %s237, %s240
      %p249 = scmp.eq.s32.totalorder %s38, 3
      %p250 = por %p248, %p249
      %p251 = scmp.ne.s32.totalorder %s240, %s241
      %p252 = scmp.eq.s32.totalorder %s38, 0
      %p253 = por %p251, %p252
      %p254 = scmp.ne.s32.totalorder %s240, %s241
      %p255 = scmp.eq.s32.totalorder %s39, 3
      %p256 = por %p254, %p255
      %p258 = scmp.ne.s32.totalorder %s241, %s257
      %p259 = scmp.eq.s32.totalorder %s39, 0
      %p260 = por %p258, %p259
      %s261 = ssub.s32 %s41, %s48
      %p262 = scmp.eq.s32.totalorder %s261, 0
      %s264 = sadd.s32 %s263, 1
      %s265 = scalar_select %p262, %s263, %s264
      %p268 = pneg %p262
      %p269 = scmp.eq.s32.totalorder %s33, 3
      %p270 = por %p268, %p269
      %p271 = scmp.ne.s32.totalorder %s263, %s266
      %p272 = scmp.eq.s32.totalorder %s33, 0
      %p273 = por %p271, %p272
      %p274 = scmp.ne.s32.totalorder %s263, %s266
      %p275 = scmp.eq.s32.totalorder %s38, 3
      %p276 = por %p274, %p275
      %p277 = scmp.ne.s32.totalorder %s266, %s267
      %p278 = scmp.eq.s32.totalorder %s38, 0
      %p279 = por %p277, %p278
      %p280 = scmp.ne.s32.totalorder %s266, %s267
      %p281 = scmp.eq.s32.totalorder %s39, 3
      %p282 = por %p280, %p281
      %p284 = scmp.ne.s32.totalorder %s267, %s283
      %p285 = scmp.eq.s32.totalorder %s39, 0
      %p286 = por %p284, %p285
      %s287 = ssub.s32 %s41, %s48
      %p288 = scmp.eq.s32.totalorder %s287, 0
      %s290 = sadd.s32 %s289, 1
      %s291 = scalar_select %p288, %s289, %s290
      %p294 = pneg %p288
      %p295 = scmp.eq.s32.totalorder %s33, 3
      %p296 = por %p294, %p295
      %p297 = scmp.ne.s32.totalorder %s289, %s292
      %p298 = scmp.eq.s32.totalorder %s33, 0
      %p299 = por %p297, %p298
      %p300 = scmp.ne.s32.totalorder %s289, %s292
      %p301 = scmp.eq.s32.totalorder %s38, 3
      %p302 = por %p300, %p301
      %p303 = scmp.ne.s32.totalorder %s292, %s293
      %p304 = scmp.eq.s32.totalorder %s38, 0
      %p305 = por %p303, %p304
      %p306 = scmp.ne.s32.totalorder %s292, %s293
      %p307 = scmp.eq.s32.totalorder %s39, 3
      %p308 = por %p306, %p307
      %p310 = scmp.ne.s32.totalorder %s293, %s309
      %p311 = scmp.eq.s32.totalorder %s39, 0
      %p312 = por %p310, %p311
      %s313 = ssub.s32 %s41, %s48
      %p314 = scmp.eq.s32.totalorder %s313, 0
      %s316 = sadd.s32 %s315, 1
      %s317 = scalar_select %p314, %s315, %s316
      %p320 = pneg %p314
      %p321 = scmp.eq.s32.totalorder %s33, 3
      %p322 = por %p320, %p321
      %p323 = scmp.ne.s32.totalorder %s315, %s318
      %p324 = scmp.eq.s32.totalorder %s33, 0
      %p325 = por %p323, %p324
      %p326 = scmp.ne.s32.totalorder %s315, %s318
      %p327 = scmp.eq.s32.totalorder %s38, 3
      %p328 = por %p326, %p327
      %p329 = scmp.ne.s32.totalorder %s318, %s319
      %p330 = scmp.eq.s32.totalorder %s38, 0
      %p331 = por %p329, %p330
      %p332 = scmp.ne.s32.totalorder %s318, %s319
      %p333 = scmp.eq.s32.totalorder %s39, 3
      %p334 = por %p332, %p333
      %p336 = scmp.ne.s32.totalorder %s319, %s335
      %p337 = scmp.eq.s32.totalorder %s39, 0
      %p338 = por %p336, %p337
      %s339 = ssub.s32 %s41, %s48
      %p340 = scmp.eq.s32.totalorder %s339, 0
      %s342 = sadd.s32 %s341, 1
      %s343 = scalar_select %p340, %s341, %s342
      %p346 = pneg %p340
      %p347 = scmp.eq.s32.totalorder %s33, 3
      %p348 = por %p346, %p347
      %p349 = scmp.ne.s32.totalorder %s341, %s344
      %p350 = scmp.eq.s32.totalorder %s33, 0
      %p351 = por %p349, %p350
      %p352 = scmp.ne.s32.totalorder %s341, %s344
      %p353 = scmp.eq.s32.totalorder %s38, 3
      %p354 = por %p352, %p353
      %p355 = scmp.ne.s32.totalorder %s344, %s345
      %p356 = scmp.eq.s32.totalorder %s38, 0
      %p357 = por %p355, %p356
      %p358 = scmp.ne.s32.totalorder %s344, %s345
      %p359 = scmp.eq.s32.totalorder %s39, 3
      %p360 = por %p358, %p359
      %p362 = scmp.ne.s32.totalorder %s345, %s361
      %p363 = scmp.eq.s32.totalorder %s39, 0
      %p364 = por %p362, %p363
      %s365 = ssub.s32 %s41, %s48
      %p366 = scmp.eq.s32.totalorder %s365, 0
      %s368 = sadd.s32 %s367, 1
      %s369 = scalar_select %p366, %s367, %s368
      %p372 = pneg %p366
      %p373 = scmp.eq.s32.totalorder %s33, 3
      %p374 = por %p372, %p373
      %p375 = scmp.ne.s32.totalorder %s367, %s370
      %p376 = scmp.eq.s32.totalorder %s33, 0
      %p377 = por %p375, %p376
      %p378 = scmp.ne.s32.totalorder %s367, %s370
      %p379 = scmp.eq.s32.totalorder %s38, 3
      %p380 = por %p378, %p379
      %p381 = scmp.ne.s32.totalorder %s370, %s371
      %p382 = scmp.eq.s32.totalorder %s38, 0
      %p383 = por %p381, %p382
      %p384 = scmp.ne.s32.totalorder %s370, %s371
      %p385 = scmp.eq.s32.totalorder %s39, 3
      %p386 = por %p384, %p385
      %p388 = scmp.ne.s32.totalorder %s371, %s387
      %p389 = scmp.eq.s32.totalorder %s39, 0
      %p390 = por %p388, %p389
      %s391 = ssub.s32 %s41, %s48
      %p392 = scmp.eq.s32.totalorder %s391, 0
      %s394 = sadd.s32 %s393, 1
      %s395 = scalar_select %p392, %s393, %s394
      %p398 = pneg %p392
      %p399 = scmp.eq.s32.totalorder %s33, 3
      %p400 = por %p398, %p399
      %p401 = scmp.ne.s32.totalorder %s393, %s396
      %p402 = scmp.eq.s32.totalorder %s33, 0
      %p403 = por %p401, %p402
      %p404 = scmp.ne.s32.totalorder %s393, %s396
      %p405 = scmp.eq.s32.totalorder %s38, 3
      %p406 = por %p404, %p405
      %p407 = scmp.ne.s32.totalorder %s396, %s397
      %p408 = scmp.eq.s32.totalorder %s38, 0
      %p409 = por %p407, %p408
      %p410 = scmp.ne.s32.totalorder %s396, %s397
      %p411 = scmp.eq.s32.totalorder %s39, 3
      %p412 = por %p410, %p411
      %p414 = scmp.ne.s32.totalorder %s397, %s413
      %p415 = scmp.eq.s32.totalorder %s39, 0
      %p416 = por %p414, %p415
      %s417 = ssub.s32 %s41, %s48
      %p418 = scmp.eq.s32.totalorder %s417, 0
      %s420 = sadd.s32 %s419, 1
      %s421 = scalar_select %p418, %s419, %s420
      %p424 = pneg %p418
      %p425 = scmp.eq.s32.totalorder %s33, 3
      %p426 = por %p424, %p425
      %p427 = scmp.ne.s32.totalorder %s419, %s422
      %p428 = scmp.eq.s32.totalorder %s33, 0
      %p429 = por %p427, %p428
      %p430 = scmp.ne.s32.totalorder %s419, %s422
      %p431 = scmp.eq.s32.totalorder %s38, 3
      %p432 = por %p430, %p431
      %p433 = scmp.ne.s32.totalorder %s422, %s423
      %p434 = scmp.eq.s32.totalorder %s38, 0
      %p435 = por %p433, %p434
      %p436 = scmp.ne.s32.totalorder %s422, %s423
      %p437 = scmp.eq.s32.totalorder %s39, 3
      %p438 = por %p436, %p437
      %p440 = scmp.ne.s32.totalorder %s423, %s439
      %p441 = scmp.eq.s32.totalorder %s39, 0
      %p442 = por %p440, %p441
      %s443 = ssub.s32 %s41, %s48
      %p444 = scmp.eq.s32.totalorder %s443, 0
      %s446 = sadd.s32 %s445, 1
      %s447 = scalar_select %p444, %s445, %s446
      %p450 = pneg %p444
      %p451 = scmp.eq.s32.totalorder %s33, 3
      %p452 = por %p450, %p451
      %p453 = scmp.ne.s32.totalorder %s445, %s448
      %p454 = scmp.eq.s32.totalorder %s33, 0
      %p455 = por %p453, %p454
      %p456 = scmp.ne.s32.totalorder %s445, %s448
      %p457 = scmp.eq.s32.totalorder %s38, 3
      %p458 = por %p456, %p457
      %p459 = scmp.ne.s32.totalorder %s448, %s449
      %p460 = scmp.eq.s32.totalorder %s38, 0
      %p461 = por %p459, %p460
      %p462 = scmp.ne.s32.totalorder %s448, %s449
      %p463 = scmp.eq.s32.totalorder %s39, 3
      %p464 = por %p462, %p463
      %p466 = scmp.ne.s32.totalorder %s449, %s465
      %p467 = scmp.eq.s32.totalorder %s39, 0
      %p468 = por %p466, %p467
      %s469 = ssub.s32 %s41, %s48
      %p470 = scmp.eq.s32.totalorder %s469, 0
      %s472 = sadd.s32 %s471, 1
      %s473 = scalar_select %p470, %s471, %s472
      %p476 = pneg %p470
      %p477 = scmp.eq.s32.totalorder %s33, 3
      %p478 = por %p476, %p477
      %p479 = scmp.ne.s32.totalorder %s471, %s474
      %p480 = scmp.eq.s32.totalorder %s33, 0
      %p481 = por %p479, %p480
      %p482 = scmp.ne.s32.totalorder %s471, %s474
      %p483 = scmp.eq.s32.totalorder %s38, 3
      %p484 = por %p482, %p483
      %p485 = scmp.ne.s32.totalorder %s474, %s475
      %p486 = scmp.eq.s32.totalorder %s38, 0
      %p487 = por %p485, %p486
      %p488 = scmp.ne.s32.totalorder %s474, %s475
      %p489 = scmp.eq.s32.totalorder %s39, 3
      %p490 = por %p488, %p489
      %p492 = scmp.ne.s32.totalorder %s475, %s491
      %p493 = scmp.eq.s32.totalorder %s39, 0
      %p494 = por %p492, %p493
      %s495 = ssub.s32 %s41, %s48
      %p496 = scmp.eq.s32.totalorder %s495, 0
      %s498 = sadd.s32 %s497, 1
      %s499 = scalar_select %p496, %s497, %s498
      %p502 = pneg %p496
      %p503 = scmp.eq.s32.totalorder %s33, 3
      %p504 = por %p502, %p503
      %p505 = scmp.ne.s32.totalorder %s497, %s500
      %p506 = scmp.eq.s32.totalorder %s33, 0
      %p507 = por %p505, %p506
      %p508 = scmp.ne.s32.totalorder %s497, %s500
      %p509 = scmp.eq.s32.totalorder %s38, 3
      %p510 = por %p508, %p509
      %p511 = scmp.ne.s32.totalorder %s500, %s501
      %p512 = scmp.eq.s32.totalorder %s38, 0
      %p513 = por %p511, %p512
      %p514 = scmp.ne.s32.totalorder %s500, %s501
      %p515 = scmp.eq.s32.totalorder %s39, 3
      %p516 = por %p514, %p515
      %p518 = scmp.ne.s32.totalorder %s501, %s517
      %p519 = scmp.eq.s32.totalorder %s39, 0
      %p520 = por %p518, %p519
      %s521 = ssub.s32 %s41, %s48
      %p522 = scmp.eq.s32.totalorder %s521, 0
      %s524 = sadd.s32 %s523, 1
      %s525 = scalar_select %p522, %s523, %s524
      %p528 = pneg %p522
      %p529 = scmp.eq.s32.totalorder %s33, 3
      %p530 = por %p528, %p529
      %p531 = scmp.ne.s32.totalorder %s523, %s526
      %p532 = scmp.eq.s32.totalorder %s33, 0
      %p533 = por %p531, %p532
      %p534 = scmp.ne.s32.totalorder %s523, %s526
      %p535 = scmp.eq.s32.totalorder %s38, 3
      %p536 = por %p534, %p535
      %p537 = scmp.ne.s32.totalorder %s526, %s527
      %p538 = scmp.eq.s32.totalorder %s38, 0
      %p539 = por %p537, %p538
      %p540 = scmp.ne.s32.totalorder %s526, %s527
      %p541 = scmp.eq.s32.totalorder %s39, 3
      %p542 = por %p540, %p541
      %p544 = scmp.ne.s32.totalorder %s527, %s543
      %p545 = scmp.eq.s32.totalorder %s39, 0
      %p546 = por %p544, %p545
      %s547 = ssub.s32 %s41, %s48
      %p548 = scmp.eq.s32.totalorder %s547, 0
      %s550 = sadd.s32 %s549, 1
      %s551 = scalar_select %p548, %s549, %s550
      %p554 = pneg %p548
      %p555 = scmp.eq.s32.totalorder %s33, 3
      %p556 = por %p554, %p555
      %p557 = scmp.ne.s32.totalorder %s549, %s552
      %p558 = scmp.eq.s32.totalorder %s33, 0
      %p559 = por %p557, %p558
      %p560 = scmp.ne.s32.totalorder %s549, %s552
      %p561 = scmp.eq.s32.totalorder %s38, 3
      %p562 = por %p560, %p561
      %p563 = scmp.ne.s32.totalorder %s552, %s553
      %p564 = scmp.eq.s32.totalorder %s38, 0
      %p565 = por %p563, %p564
      %p566 = scmp.ne.s32.totalorder %s552, %s553
      %p567 = scmp.eq.s32.totalorder %s39, 3
      %p568 = por %p566, %p567
      %p570 = scmp.ne.s32.totalorder %s553, %s569
      %p571 = scmp.eq.s32.totalorder %s39, 0
      %p572 = por %p570, %p571
      %s573 = ssub.s32 %s41, %s48
      %p574 = scmp.eq.s32.totalorder %s573, 0
      %s576 = sadd.s32 %s575, 1
      %s577 = scalar_select %p574, %s575, %s576
      %p580 = pneg %p574
      %p581 = scmp.eq.s32.totalorder %s33, 3
      %p582 = por %p580, %p581
      %p583 = scmp.ne.s32.totalorder %s575, %s578
      %p584 = scmp.eq.s32.totalorder %s33, 0
      %p585 = por %p583, %p584
      %p586 = scmp.ne.s32.totalorder %s575, %s578
      %p587 = scmp.eq.s32.totalorder %s38, 3
      %p588 = por %p586, %p587
      %p589 = scmp.ne.s32.totalorder %s578, %s579
      %p590 = scmp.eq.s32.totalorder %s38, 0
      %p591 = por %p589, %p590
      %p592 = scmp.ne.s32.totalorder %s578, %s579
      %p593 = scmp.eq.s32.totalorder %s39, 3
      %p594 = por %p592, %p593
      %p596 = scmp.ne.s32.totalorder %s579, %s595
      %p597 = scmp.eq.s32.totalorder %s39, 0
      %p598 = por %p596, %p597
      %s599 = ssub.s32 %s41, %s48
      %p600 = scmp.eq.s32.totalorder %s599, 0
      %s602 = sadd.s32 %s601, 1
      %s603 = scalar_select %p600, %s601, %s602
      %p606 = pneg %p600
      %p607 = scmp.eq.s32.totalorder %s33, 3
      %p608 = por %p606, %p607
      %p609 = scmp.ne.s32.totalorder %s601, %s604
      %p610 = scmp.eq.s32.totalorder %s33, 0
      %p611 = por %p609, %p610
      %p612 = scmp.ne.s32.totalorder %s601, %s604
      %p613 = scmp.eq.s32.totalorder %s38, 3
      %p614 = por %p612, %p613
      %p615 = scmp.ne.s32.totalorder %s604, %s605
      %p616 = scmp.eq.s32.totalorder %s38, 0
      %p617 = por %p615, %p616
      %p618 = scmp.ne.s32.totalorder %s604, %s605
      %p619 = scmp.eq.s32.totalorder %s39, 3
      %p620 = por %p618, %p619
      %p622 = scmp.ne.s32.totalorder %s605, %s621
      %p623 = scmp.eq.s32.totalorder %s39, 0
      %p624 = por %p622, %p623
      %s625 = ssub.s32 %s41, %s48
      %p626 = scmp.eq.s32.totalorder %s625, 0
      %s628 = sadd.s32 %s627, 1
      %s629 = scalar_select %p626, %s627, %s628
      %p632 = pneg %p626
      %p633 = scmp.eq.s32.totalorder %s33, 3
      %p634 = por %p632, %p633
      %p635 = scmp.ne.s32.totalorder %s627, %s630
      %p636 = scmp.eq.s32.totalorder %s33, 0
      %p637 = por %p635, %p636
      %p638 = scmp.ne.s32.totalorder %s627, %s630
      %p639 = scmp.eq.s32.totalorder %s38, 3
      %p640 = por %p638, %p639
      %p641 = scmp.ne.s32.totalorder %s630, %s631
      %p642 = scmp.eq.s32.totalorder %s38, 0
      %p643 = por %p641, %p642
      %p644 = scmp.ne.s32.totalorder %s630, %s631
      %p645 = scmp.eq.s32.totalorder %s39, 3
      %p646 = por %p644, %p645
      %p648 = scmp.ne.s32.totalorder %s631, %s647
      %p649 = scmp.eq.s32.totalorder %s39, 0
      %p650 = por %p648, %p649
      %s651 = ssub.s32 %s41, %s48
      %p652 = scmp.eq.s32.totalorder %s651, 0
      %s654 = sadd.s32 %s653, 1
      %s655 = scalar_select %p652, %s653, %s654
      %p658 = pneg %p652
      %p659 = scmp.eq.s32.totalorder %s33, 3
      %p660 = por %p658, %p659
      %p661 = scmp.ne.s32.totalorder %s653, %s656
      %p662 = scmp.eq.s32.totalorder %s33, 0
      %p663 = por %p661, %p662
      %p664 = scmp.ne.s32.totalorder %s653, %s656
      %p665 = scmp.eq.s32.totalorder %s38, 3
      %p666 = por %p664, %p665
      %p667 = scmp.ne.s32.totalorder %s656, %s657
      %p668 = scmp.eq.s32.totalorder %s38, 0
      %p669 = por %p667, %p668
      %p670 = scmp.ne.s32.totalorder %s656, %s657
      %p671 = scmp.eq.s32.totalorder %s39, 3
      %p672 = por %p670, %p671
      %p674 = scmp.ne.s32.totalorder %s657, %s673
      %p675 = scmp.eq.s32.totalorder %s39, 0
      %p676 = por %p674, %p675
      %s677 = ssub.s32 %s40, %s52
      %p678 = scmp.eq.s32.totalorder %s677, 0
      %s680 = sadd.s32 %s679, 1
      %s681 = scalar_select %p678, %s679, %s680
      %p684 = pneg %p678
      %p685 = scmp.eq.s32.totalorder %s33, 3
      %p686 = por %p684, %p685
      %p687 = scmp.ne.s32.totalorder %s679, %s682
      %p688 = scmp.eq.s32.totalorder %s33, 0
      %p689 = por %p687, %p688
      %p690 = scmp.ne.s32.totalorder %s679, %s682
      %p691 = scmp.eq.s32.totalorder %s38, 3
      %p692 = por %p690, %p691
      %p693 = scmp.ne.s32.totalorder %s682, %s683
      %p694 = scmp.eq.s32.totalorder %s38, 0
      %p695 = por %p693, %p694
      %p696 = scmp.ne.s32.totalorder %s682, %s683
      %p697 = scmp.eq.s32.totalorder %s39, 3
      %p698 = por %p696, %p697
      %p700 = scmp.ne.s32.totalorder %s683, %s699
      %p701 = scmp.eq.s32.totalorder %s39, 0
      %p702 = por %p700, %p701
      %s703 = ssub.s32 %s41, %s48
      %s704 = ssub.s32 %s40, %s52
      %s705 = sor.u32 %s703, %s704
      %p706 = scmp.eq.s32.totalorder %s705, 0
      %s708 = sadd.s32 %s707, 1
      %s709 = scalar_select %p706, %s707, %s708
      %p712 = pneg %p706
      %p713 = scmp.eq.s32.totalorder %s33, 3
      %p714 = por %p712, %p713
      %p715 = scmp.ne.s32.totalorder %s707, %s710
      %p716 = scmp.eq.s32.totalorder %s33, 0
      %p717 = por %p715, %p716
      %p718 = scmp.ne.s32.totalorder %s707, %s710
      %p719 = scmp.eq.s32.totalorder %s38, 3
      %p720 = por %p718, %p719
      %p721 = scmp.ne.s32.totalorder %s710, %s711
      %p722 = scmp.eq.s32.totalorder %s38, 0
      %p723 = por %p721, %p722
      %p724 = scmp.ne.s32.totalorder %s710, %s711
      %p725 = scmp.eq.s32.totalorder %s39, 3
      %p726 = por %p724, %p725
      %p728 = scmp.ne.s32.totalorder %s711, %s727
      %p729 = scmp.eq.s32.totalorder %s39, 0
      %p730 = por %p728, %p729
      %s731 = ssub.s32 %s41, %s48
      %s732 = ssub.s32 %s40, %s52
      %s733 = sor.u32 %s731, %s732
      %p734 = scmp.eq.s32.totalorder %s733, 0
      %s736 = sadd.s32 %s735, 1
      %s737 = scalar_select %p734, %s735, %s736
      %p740 = pneg %p734
      %p741 = scmp.eq.s32.totalorder %s33, 3
      %p742 = por %p740, %p741
      %p743 = scmp.ne.s32.totalorder %s735, %s738
      %p744 = scmp.eq.s32.totalorder %s33, 0
      %p745 = por %p743, %p744
      %p746 = scmp.ne.s32.totalorder %s735, %s738
      %p747 = scmp.eq.s32.totalorder %s38, 3
      %p748 = por %p746, %p747
      %p749 = scmp.ne.s32.totalorder %s738, %s739
      %p750 = scmp.eq.s32.totalorder %s38, 0
      %p751 = por %p749, %p750
      %p752 = scmp.ne.s32.totalorder %s738, %s739
      %p753 = scmp.eq.s32.totalorder %s39, 3
      %p754 = por %p752, %p753
      %p756 = scmp.ne.s32.totalorder %s739, %s755
      %p757 = scmp.eq.s32.totalorder %s39, 0
      %p758 = por %p756, %p757
      %p759 = scmp.le.s32.totalorder 1, %s33
      %p760 = scmp.lt.s32.totalorder %s33, 5
      %p761 = pnand %p759, %p760
      %p762 = pneg %p761
      // Predicated region
      $region9: #{decoder_forward.4} parent=5 // pred_check
        _
      $region10: #{decoder_forward.4} parent=5 // pred_check_branch
        %764 = sbr.rel (%p761) target = $region12
      $region11: #{decoder_forward.4} parent=5 // pred_region
        %s765 = ssub.s32 %s33, 1
      $region12: #{decoder_forward.4} parent=5 // pred_fallthru
        _
      %p766 = scmp.lt.s32.totalorder %s33, 4
      // Predicated region
      $region13: #{decoder_forward.4} parent=5 // pred_check
        %p767 = pneg %p766
      $region14: #{decoder_forward.4} parent=5 // pred_check_branch
        %769 = sbr.rel (%p767) target = $region16
      $region15: #{decoder_forward.4} parent=5 // pred_region
        // Predicated region
        $region17: #{decoder_forward.4} parent=15 // pred_check
          %p770 = pneg %p65
        $region18: #{decoder_forward.4} parent=15 // pred_check_branch
          %772 = sbr.rel (%p770) target = $region20
        $region19: #{decoder_forward.4} parent=15 // pred_region
          %p773 = scmp.lt.s32.totalorder %s40, 1
          %s774 = scalar_select %p773, %s40, 1
          %s775 = smul.addr %s774, 8
          %s776 = scalar_lea.vmem %s0, %s775
        $region20: #{decoder_forward.4} parent=15 // pred_fallthru
          _
        // Predicated region
        $region21: #{decoder_forward.4} parent=15 // pred_check
          %p777 = pneg %p91
        $region22: #{decoder_forward.4} parent=15 // pred_check_branch
          %779 = sbr.rel (%p777) target = $region24
        $region23: #{decoder_forward.4} parent=15 // pred_region
          %p780 = scmp.lt.s32.totalorder %s40, 1
          %s781 = scalar_select %p780, %s40, 1
          %s782 = smul.addr %s781, 4
          %s783 = scalar_lea.vmem %s1, %s782
        $region24: #{decoder_forward.4} parent=15 // pred_fallthru
          _
        // Predicated region
        $region25: #{decoder_forward.4} parent=15 // pred_check
          %p784 = pneg %p117
        $region26: #{decoder_forward.4} parent=15 // pred_check_branch
          %786 = sbr.rel (%p784) target = $region28
        $region27: #{decoder_forward.4} parent=15 // pred_region
          %p787 = scmp.lt.s32.totalorder %s41, 1
          %s788 = scalar_select %p787, %s41, 1
          %s789 = smul.addr %s788, 16
          %s790 = smul.addr %s789, 4
          %s791 = scalar_lea.vmem %s2, %s790
        $region28: #{decoder_forward.4} parent=15 // pred_fallthru
          _
        // Predicated region
        $region29: #{decoder_forward.4} parent=15 // pred_check
          %p792 = pneg %p143
        $region30: #{decoder_forward.4} parent=15 // pred_check_branch
          %794 = sbr.rel (%p792) target = $region32
        $region31: #{decoder_forward.4} parent=15 // pred_region
          %p795 = scmp.lt.s32.totalorder %s41, 1
          %s796 = scalar_select %p795, %s41, 1
          %s797 = smul.addr %s796, 16
          %s798 = smul.addr %s797, 4
          %s799 = scalar_lea.vmem %s3, %s798
        $region32: #{decoder_forward.4} parent=15 // pred_fallthru
          _
        // Predicated region
        $region33: #{decoder_forward.4} parent=15 // pred_check
          %p800 = pneg %p169
        $region34: #{decoder_forward.4} parent=15 // pred_check_branch
          %802 = sbr.rel (%p800) target = $region36
        $region35: #{decoder_forward.4} parent=15 // pred_region
          %p803 = scmp.lt.s32.totalorder %s41, 1
          %s804 = scalar_select %p803, %s41, 1
          %s805 = smul.addr %s804, 16
          %s806 = smul.addr %s805, 4
          %s807 = scalar_lea.vmem %s4, %s806
        $region36: #{decoder_forward.4} parent=15 // pred_fallthru
          _
        // Predicated region
        $region37: #{decoder_forward.4} parent=15 // pred_check
          %p808 = pneg %p195
        $region38: #{decoder_forward.4} parent=15 // pred_check_branch
          %810 = sbr.rel (%p808) target = $region40
        $region39: #{decoder_forward.4} parent=15 // pred_region
          %p811 = scmp.lt.s32.totalorder %s41, 1
          %s812 = scalar_select %p811, %s41, 1
          %s813 = smul.addr %s812, 4
          %s814 = smul.addr %s813, 4
          %s815 = scalar_lea.vmem %s5, %s814
        $region40: #{decoder_forward.4} parent=15 // pred_fallthru
          _
        // Predicated region
        $region41: #{decoder_forward.4} parent=15 // pred_check
          %p816 = pneg %p221
        $region42: #{decoder_forward.4} parent=15 // pred_check_branch
          %818 = sbr.rel (%p816) target = $region44
        $region43: #{decoder_forward.4} parent=15 // pred_region
          %p819 = scmp.lt.s32.totalorder %s41, 1
          %s820 = scalar_select %p819, %s41, 1
          %s821 = smul.addr %s820, 4
          %s822 = smul.addr %s821, 4
          %s823 = scalar_lea.vmem %s6, %s822
        $region44: #{decoder_forward.4} parent=15 // pred_fallthru
          _
        // Predicated region
        $region45: #{decoder_forward.4} parent=15 // pred_check
          %p824 = pneg %p247
        $region46: #{decoder_forward.4} parent=15 // pred_check_branch
          %826 = sbr.rel (%p824) target = $region48
        $region47: #{decoder_forward.4} parent=15 // pred_region
          %p827 = scmp.lt.s32.totalorder %s41, 1
          %s828 = scalar_select %p827, %s41, 1
          %s829 = scalar_lea.vmem %s7, %s828
        $region48: #{decoder_forward.4} parent=15 // pred_fallthru
          _
        // Predicated region
        $region49: #{decoder_forward.4} parent=15 // pred_check
          %p830 = pneg %p273
        $region50: #{decoder_forward.4} parent=15 // pred_check_branch
          %832 = sbr.rel (%p830) target = $region52
        $region51: #{decoder_forward.4} parent=15 // pred_region
          %p833 = scmp.lt.s32.totalorder %s41, 1
          %s834 = scalar_select %p833, %s41, 1
          %s835 = scalar_lea.vmem %s8, %s834
        $region52: #{decoder_forward.4} parent=15 // pred_fallthru
          _
        // Predicated region
        $region53: #{decoder_forward.4} parent=15 // pred_check
          %p836 = pneg %p299
        $region54: #{decoder_forward.4} parent=15 // pred_check_branch
          %838 = sbr.rel (%p836) target = $region56
        $region55: #{decoder_forward.4} parent=15 // pred_region
          %p839 = scmp.lt.s32.totalorder %s41, 1
          %s840 = scalar_select %p839, %s41, 1
          %s841 = scalar_lea.vmem %s9, %s840
        $region56: #{decoder_forward.4} parent=15 // pred_fallthru
          _
        // Predicated region
        $region57: #{decoder_forward.4} parent=15 // pred_check
          %p842 = pneg %p325
        $region58: #{decoder_forward.4} parent=15 // pred_check_branch
          %844 = sbr.rel (%p842) target = $region60
        $region59: #{decoder_forward.4} parent=15 // pred_region
          %p845 = scmp.lt.s32.totalorder %s41, 1
          %s846 = scalar_select %p845, %s41, 1
          %s847 = smul.addr %s846, 16
          %s848 = smul.addr %s847, 4
          %s849 = scalar_lea.vmem %s10, %s848
        $region60: #{decoder_forward.4} parent=15 // pred_fallthru
          _
        // Predicated region
        $region61: #{decoder_forward.4} parent=15 // pred_check
          %p850 = pneg %p351
        $region62: #{decoder_forward.4} parent=15 // pred_check_branch
          %852 = sbr.rel (%p850) target = $region64
        $region63: #{decoder_forward.4} parent=15 // pred_region
          %p853 = scmp.lt.s32.totalorder %s41, 1
          %s854 = scalar_select %p853, %s41, 1
          %s855 = smul.addr %s854, 16
          %s856 = smul.addr %s855, 4
          %s857 = scalar_lea.vmem %s11, %s856
        $region64: #{decoder_forward.4} parent=15 // pred_fallthru
          _
        // Predicated region
        $region65: #{decoder_forward.4} parent=15 // pred_check
          %p858 = pneg %p377
        $region66: #{decoder_forward.4} parent=15 // pred_check_branch
          %860 = sbr.rel (%p858) target = $region68
        $region67: #{decoder_forward.4} parent=15 // pred_region
          %p861 = scmp.lt.s32.totalorder %s41, 1
          %s862 = scalar_select %p861, %s41, 1
          %s863 = smul.addr %s862, 16
          %s864 = smul.addr %s863, 4
          %s865 = scalar_lea.vmem %s12, %s864
        $region68: #{decoder_forward.4} parent=15 // pred_fallthru
          _
        // Predicated region
        $region69: #{decoder_forward.4} parent=15 // pred_check
          %p866 = pneg %p403
        $region70: #{decoder_forward.4} parent=15 // pred_check_branch
          %868 = sbr.rel (%p866) target = $region72
        $region71: #{decoder_forward.4} parent=15 // pred_region
          %p869 = scmp.lt.s32.totalorder %s41, 1
          %s870 = scalar_select %p869, %s41, 1
          %s871 = smul.addr %s870, 4
          %s872 = smul.addr %s871, 4
          %s873 = scalar_lea.vmem %s13, %s872
        $region72: #{decoder_forward.4} parent=15 // pred_fallthru
          _
        // Predicated region
        $region73: #{decoder_forward.4} parent=15 // pred_check
          %p874 = pneg %p429
        $region74: #{decoder_forward.4} parent=15 // pred_check_branch
          %876 = sbr.rel (%p874) target = $region76
        $region75: #{decoder_forward.4} parent=15 // pred_region
          %p877 = scmp.lt.s32.totalorder %s41, 1
          %s878 = scalar_select %p877, %s41, 1
          %s879 = smul.addr %s878, 4
          %s880 = smul.addr %s879, 4
          %s881 = scalar_lea.vmem %s14, %s880
        $region76: #{decoder_forward.4} parent=15 // pred_fallthru
          _
        // Predicated region
        $region77: #{decoder_forward.4} parent=15 // pred_check
          %p882 = pneg %p455
        $region78: #{decoder_forward.4} parent=15 // pred_check_branch
          %884 = sbr.rel (%p882) target = $region80
        $region79: #{decoder_forward.4} parent=15 // pred_region
          %p885 = scmp.lt.s32.totalorder %s41, 1
          %s886 = scalar_select %p885, %s41, 1
          %s887 = scalar_lea.vmem %s15, %s886
        $region80: #{decoder_forward.4} parent=15 // pred_fallthru
          _
        // Predicated region
        $region81: #{decoder_forward.4} parent=15 // pred_check
          %p888 = pneg %p481
        $region82: #{decoder_forward.4} parent=15 // pred_check_branch
          %890 = sbr.rel (%p888) target = $region84
        $region83: #{decoder_forward.4} parent=15 // pred_region
          %p891 = scmp.lt.s32.totalorder %s41, 1
          %s892 = scalar_select %p891, %s41, 1
          %s893 = scalar_lea.vmem %s16, %s892
        $region84: #{decoder_forward.4} parent=15 // pred_fallthru
          _
        // Predicated region
        $region85: #{decoder_forward.4} parent=15 // pred_check
          %p894 = pneg %p507
        $region86: #{decoder_forward.4} parent=15 // pred_check_branch
          %896 = sbr.rel (%p894) target = $region88
        $region87: #{decoder_forward.4} parent=15 // pred_region
          %p897 = scmp.lt.s32.totalorder %s41, 1
          %s898 = scalar_select %p897, %s41, 1
          %s899 = scalar_lea.vmem %s17, %s898
        $region88: #{decoder_forward.4} parent=15 // pred_fallthru
          _
        // Predicated region
        $region89: #{decoder_forward.4} parent=15 // pred_check
          %p900 = pneg %p533
        $region90: #{decoder_forward.4} parent=15 // pred_check_branch
          %902 = sbr.rel (%p900) target = $region92
        $region91: #{decoder_forward.4} parent=15 // pred_region
          %p903 = scmp.lt.s32.totalorder %s41, 1
          %s904 = scalar_select %p903, %s41, 1
          %s905 = smul.addr %s904, 4
          %s906 = smul.addr %s905, 4
          %s907 = scalar_lea.vmem %s18, %s906
        $region92: #{decoder_forward.4} parent=15 // pred_fallthru
          _
        // Predicated region
        $region93: #{decoder_forward.4} parent=15 // pred_check
          %p908 = pneg %p559
        $region94: #{decoder_forward.4} parent=15 // pred_check_branch
          %910 = sbr.rel (%p908) target = $region96
        $region95: #{decoder_forward.4} parent=15 // pred_region
          %p911 = scmp.lt.s32.totalorder %s41, 1
          %s912 = scalar_select %p911, %s41, 1
          %s913 = scalar_lea.vmem %s19, %s912
        $region96: #{decoder_forward.4} parent=15 // pred_fallthru
          _
        // Predicated region
        $region97: #{decoder_forward.4} parent=15 // pred_check
          %p914 = pneg %p585
        $region98: #{decoder_forward.4} parent=15 // pred_check_branch
          %916 = sbr.rel (%p914) target = $region100
        $region99: #{decoder_forward.4} parent=15 // pred_region
          %p917 = scmp.lt.s32.totalorder %s41, 1
          %s918 = scalar_select %p917, %s41, 1
          %s919 = smul.addr %s918, 16
          %s920 = smul.addr %s919, 4
          %s921 = scalar_lea.vmem %s20, %s920
        $region100: #{decoder_forward.4} parent=15 // pred_fallthru
          _
        // Predicated region
        $region101: #{decoder_forward.4} parent=15 // pred_check
          %p922 = pneg %p611
        $region102: #{decoder_forward.4} parent=15 // pred_check_branch
          %924 = sbr.rel (%p922) target = $region104
        $region103: #{decoder_forward.4} parent=15 // pred_region
          %p925 = scmp.lt.s32.totalorder %s41, 1
          %s926 = scalar_select %p925, %s41, 1
          %s927 = scalar_lea.vmem %s21, %s926
        $region104: #{decoder_forward.4} parent=15 // pred_fallthru
          _
        // Predicated region
        $region105: #{decoder_forward.4} parent=15 // pred_check
          %p928 = pneg %p637
        $region106: #{decoder_forward.4} parent=15 // pred_check_branch
          %930 = sbr.rel (%p928) target = $region108
        $region107: #{decoder_forward.4} parent=15 // pred_region
          %p931 = scmp.lt.s32.totalorder %s41, 1
          %s932 = scalar_select %p931, %s41, 1
          %s933 = scalar_lea.vmem %s22, %s932
        $region108: #{decoder_forward.4} parent=15 // pred_fallthru
          _
        // Predicated region
        $region109: #{decoder_forward.4} parent=15 // pred_check
          %p934 = pneg %p663
        $region110: #{decoder_forward.4} parent=15 // pred_check_branch
          %936 = sbr.rel (%p934) target = $region112
        $region111: #{decoder_forward.4} parent=15 // pred_region
          %p937 = scmp.lt.s32.totalorder %s41, 1
          %s938 = scalar_select %p937, %s41, 1
          %s939 = scalar_lea.vmem %s23, %s938
        $region112: #{decoder_forward.4} parent=15 // pred_fallthru
          _
      $region16: #{decoder_forward.4} parent=5 // pred_fallthru
        _
      %p940 = scmp.le.s32.totalorder 1, %s33
      %p941 = scmp.lt.s32.totalorder %s33, 5
      %p942 = pnand %p940, %p941
      %p943 = pneg %p942
      // Predicated region
      $region113: #{decoder_forward.4} parent=5 // pred_check
        _
      $region114: #{decoder_forward.4} parent=5 // pred_check_branch
        %945 = sbr.rel (%p942) target = $region116
      $region115: #{decoder_forward.4} parent=5 // pred_region
        %s946 = ssub.s32 %s33, 1
        %p947 = scmp.lt.s32.totalorder %s42, 1
        %s948 = scalar_select %p947, %s42, 1
        %s949 = smul.addr %s948, 8
        %s950 = scalar_lea.vmem %s0, %s949
        %p951 = pneg %p71
        %p952 = pneg %p68
        %p953 = scmp.lt.s32.totalorder %s42, 1
        %s954 = scalar_select %p953, %s42, 1
        %s955 = smul.addr %s954, 4
        %s956 = scalar_lea.vmem %s1, %s955
        %p957 = pneg %p97
        %p958 = pneg %p94
        %p959 = scmp.lt.s32.totalorder %s43, 1
        %s960 = scalar_select %p959, %s43, 1
        %s961 = smul.addr %s960, 16
        %s962 = smul.addr %s961, 4
        %s963 = scalar_lea.vmem %s2, %s962
        %p964 = pneg %p123
        %p965 = pneg %p120
        %p966 = scmp.lt.s32.totalorder %s43, 1
        %s967 = scalar_select %p966, %s43, 1
        %s968 = smul.addr %s967, 16
        %s969 = smul.addr %s968, 4
        %s970 = scalar_lea.vmem %s3, %s969
        %p971 = pneg %p149
        %p972 = pneg %p146
        %p973 = scmp.lt.s32.totalorder %s43, 1
        %s974 = scalar_select %p973, %s43, 1
        %s975 = smul.addr %s974, 16
        %s976 = smul.addr %s975, 4
        %s977 = scalar_lea.vmem %s4, %s976
        %p978 = pneg %p175
        %p979 = pneg %p172
        %p980 = scmp.lt.s32.totalorder %s43, 1
        %s981 = scalar_select %p980, %s43, 1
        %s982 = smul.addr %s981, 4
        %s983 = smul.addr %s982, 4
        %s984 = scalar_lea.vmem %s5, %s983
        %p985 = pneg %p201
        %p986 = pneg %p198
        %p987 = scmp.lt.s32.totalorder %s43, 1
        %s988 = scalar_select %p987, %s43, 1
        %s989 = smul.addr %s988, 4
        %s990 = smul.addr %s989, 4
        %s991 = scalar_lea.vmem %s6, %s990
        %p992 = pneg %p227
        %p993 = pneg %p224
        %p994 = scmp.lt.s32.totalorder %s43, 1
        %s995 = scalar_select %p994, %s43, 1
        %s996 = scalar_lea.vmem %s7, %s995
        %p997 = pneg %p253
        %p998 = pneg %p250
        %p999 = scmp.lt.s32.totalorder %s43, 1
        %s1000 = scalar_select %p999, %s43, 1
        %s1001 = scalar_lea.vmem %s8, %s1000
        %p1002 = pneg %p279
        %p1003 = pneg %p276
        %p1004 = scmp.lt.s32.totalorder %s43, 1
        %s1005 = scalar_select %p1004, %s43, 1
        %s1006 = scalar_lea.vmem %s9, %s1005
        %p1007 = pneg %p305
        %p1008 = pneg %p302
        %p1009 = scmp.lt.s32.totalorder %s43, 1
        %s1010 = scalar_select %p1009, %s43, 1
        %s1011 = smul.addr %s1010, 16
        %s1012 = smul.addr %s1011, 4
        %s1013 = scalar_lea.vmem %s10, %s1012
        %p1014 = pneg %p331
        %p1015 = pneg %p328
        %p1016 = scmp.lt.s32.totalorder %s43, 1
        %s1017 = scalar_select %p1016, %s43, 1
        %s1018 = smul.addr %s1017, 16
        %s1019 = smul.addr %s1018, 4
        %s1020 = scalar_lea.vmem %s11, %s1019
        %p1021 = pneg %p357
        %p1022 = pneg %p354
        %p1023 = scmp.lt.s32.totalorder %s43, 1
        %s1024 = scalar_select %p1023, %s43, 1
        %s1025 = smul.addr %s1024, 16
        %s1026 = smul.addr %s1025, 4
        %s1027 = scalar_lea.vmem %s12, %s1026
        %p1028 = pneg %p383
        %p1029 = pneg %p380
        %p1030 = scmp.lt.s32.totalorder %s43, 1
        %s1031 = scalar_select %p1030, %s43, 1
        %s1032 = smul.addr %s1031, 4
        %s1033 = smul.addr %s1032, 4
        %s1034 = scalar_lea.vmem %s13, %s1033
        %p1035 = pneg %p409
        %p1036 = pneg %p406
        %p1037 = scmp.lt.s32.totalorder %s43, 1
        %s1038 = scalar_select %p1037, %s43, 1
        %s1039 = smul.addr %s1038, 4
        %s1040 = smul.addr %s1039, 4
        %s1041 = scalar_lea.vmem %s14, %s1040
        %p1042 = pneg %p435
        %p1043 = pneg %p432
        %p1044 = scmp.lt.s32.totalorder %s43, 1
        %s1045 = scalar_select %p1044, %s43, 1
        %s1046 = scalar_lea.vmem %s15, %s1045
        %p1047 = pneg %p461
        %p1048 = pneg %p458
        %p1049 = scmp.lt.s32.totalorder %s43, 1
        %s1050 = scalar_select %p1049, %s43, 1
        %s1051 = scalar_lea.vmem %s16, %s1050
        %p1052 = pneg %p487
        %p1053 = pneg %p484
        %p1054 = scmp.lt.s32.totalorder %s43, 1
        %s1055 = scalar_select %p1054, %s43, 1
        %s1056 = scalar_lea.vmem %s17, %s1055
        %p1057 = pneg %p513
        %p1058 = pneg %p510
        %p1059 = scmp.lt.s32.totalorder %s43, 1
        %s1060 = scalar_select %p1059, %s43, 1
        %s1061 = smul.addr %s1060, 4
        %s1062 = smul.addr %s1061, 4
        %s1063 = scalar_lea.vmem %s18, %s1062
        %p1064 = pneg %p539
        %p1065 = pneg %p536
        %p1066 = scmp.lt.s32.totalorder %s43, 1
        %s1067 = scalar_select %p1066, %s43, 1
        %s1068 = scalar_lea.vmem %s19, %s1067
        %p1069 = pneg %p565
        %p1070 = pneg %p562
        %p1071 = scmp.lt.s32.totalorder %s43, 1
        %s1072 = scalar_select %p1071, %s43, 1
        %s1073 = smul.addr %s1072, 16
        %s1074 = smul.addr %s1073, 4
        %s1075 = scalar_lea.vmem %s20, %s1074
        %p1076 = pneg %p591
        %p1077 = pneg %p588
        %p1078 = scmp.lt.s32.totalorder %s43, 1
        %s1079 = scalar_select %p1078, %s43, 1
        %s1080 = scalar_lea.vmem %s21, %s1079
        %p1081 = pneg %p617
        %p1082 = pneg %p614
        %p1083 = scmp.lt.s32.totalorder %s43, 1
        %s1084 = scalar_select %p1083, %s43, 1
        %s1085 = scalar_lea.vmem %s22, %s1084
        %p1086 = pneg %p643
        %p1087 = pneg %p640
        %p1088 = scmp.lt.s32.totalorder %s43, 1
        %s1089 = scalar_select %p1088, %s43, 1
        %s1090 = scalar_lea.vmem %s23, %s1089
        %p1091 = pneg %p669
        %p1092 = pneg %p666
        %p1093 = pneg %p695
        %p1094 = pneg %p692
        %p1095 = scmp.lt.s32.totalorder %s42, 1
        %s1096 = scalar_select %p1095, %s42, 1
        %s1097 = smul.addr %s1096, 8
        %s1098 = scalar_lea.vmem %s24, %s1097
        %p1099 = pneg %p723
        %p1100 = pneg %p720
        %s1101 = sand.u32 %s710, 1
        %s1102 = sand.u32 %s710, 1
        %s1103 = smul.addr %s1102, 16
        %s1104 = scalar_lea.vmem [#allocation2], %s1103
        %p1105 = pneg %p751
        %p1106 = pneg %p748
        %s1107 = sand.u32 %s738, 1
        %s1108 = sand.u32 %s738, 1
        %s1109 = smul.addr %s1108, 16
        %s1110 = scalar_lea.vmem [#allocation3], %s1109
        %p1111 = scmp.lt.s32.totalorder %s42, 1
        %s1112 = scalar_select %p1111, %s42, 1
        %s1113 = smul.addr %s1112, 8
        %s1114 = scalar_lea.vmem %s0, %s1113
        %p1115 = scmp.lt.s32.totalorder %s42, 1
        %s1116 = scalar_select %p1115, %s42, 1
        %s1117 = smul.addr %s1116, 4
        %s1118 = scalar_lea.vmem %s1, %s1117
        %p1119 = scmp.lt.s32.totalorder %s43, 1
        %s1120 = scalar_select %p1119, %s43, 1
        %s1121 = smul.addr %s1120, 16
        %s1122 = smul.addr %s1121, 4
        %s1123 = scalar_lea.vmem %s2, %s1122
        %p1124 = scmp.lt.s32.totalorder %s43, 1
        %s1125 = scalar_select %p1124, %s43, 1
        %s1126 = smul.addr %s1125, 16
        %s1127 = smul.addr %s1126, 4
        %s1128 = scalar_lea.vmem %s3, %s1127
        %p1129 = scmp.lt.s32.totalorder %s43, 1
        %s1130 = scalar_select %p1129, %s43, 1
        %s1131 = smul.addr %s1130, 16
        %s1132 = smul.addr %s1131, 4
        %s1133 = scalar_lea.vmem %s4, %s1132
        %p1134 = scmp.lt.s32.totalorder %s43, 1
        %s1135 = scalar_select %p1134, %s43, 1
        %s1136 = smul.addr %s1135, 4
        %s1137 = smul.addr %s1136, 4
        %s1138 = scalar_lea.vmem %s5, %s1137
        %p1139 = scmp.lt.s32.totalorder %s43, 1
        %s1140 = scalar_select %p1139, %s43, 1
        %s1141 = smul.addr %s1140, 4
        %s1142 = smul.addr %s1141, 4
        %s1143 = scalar_lea.vmem %s6, %s1142
        %p1144 = scmp.lt.s32.totalorder %s43, 1
        %s1145 = scalar_select %p1144, %s43, 1
        %s1146 = scalar_lea.vmem %s7, %s1145
        %p1147 = scmp.lt.s32.totalorder %s43, 1
        %s1148 = scalar_select %p1147, %s43, 1
        %s1149 = scalar_lea.vmem %s8, %s1148
        %p1150 = scmp.lt.s32.totalorder %s43, 1
        %s1151 = scalar_select %p1150, %s43, 1
        %s1152 = scalar_lea.vmem %s9, %s1151
        %p1153 = scmp.lt.s32.totalorder %s43, 1
        %s1154 = scalar_select %p1153, %s43, 1
        %s1155 = smul.addr %s1154, 16
        %s1156 = smul.addr %s1155, 4
        %s1157 = scalar_lea.vmem %s10, %s1156
        %p1158 = scmp.lt.s32.totalorder %s43, 1
        %s1159 = scalar_select %p1158, %s43, 1
        %s1160 = smul.addr %s1159, 16
        %s1161 = smul.addr %s1160, 4
        %s1162 = scalar_lea.vmem %s11, %s1161
        %p1163 = scmp.lt.s32.totalorder %s43, 1
        %s1164 = scalar_select %p1163, %s43, 1
        %s1165 = smul.addr %s1164, 16
        %s1166 = smul.addr %s1165, 4
        %s1167 = scalar_lea.vmem %s12, %s1166
        %p1168 = scmp.lt.s32.totalorder %s43, 1
        %s1169 = scalar_select %p1168, %s43, 1
        %s1170 = smul.addr %s1169, 4
        %s1171 = smul.addr %s1170, 4
        %s1172 = scalar_lea.vmem %s13, %s1171
        %p1173 = scmp.lt.s32.totalorder %s43, 1
        %s1174 = scalar_select %p1173, %s43, 1
        %s1175 = smul.addr %s1174, 4
        %s1176 = smul.addr %s1175, 4
        %s1177 = scalar_lea.vmem %s14, %s1176
        %p1178 = scmp.lt.s32.totalorder %s43, 1
        %s1179 = scalar_select %p1178, %s43, 1
        %s1180 = scalar_lea.vmem %s15, %s1179
        %p1181 = scmp.lt.s32.totalorder %s43, 1
        %s1182 = scalar_select %p1181, %s43, 1
        %s1183 = scalar_lea.vmem %s16, %s1182
        %p1184 = scmp.lt.s32.totalorder %s43, 1
        %s1185 = scalar_select %p1184, %s43, 1
        %s1186 = scalar_lea.vmem %s17, %s1185
        %p1187 = scmp.lt.s32.totalorder %s43, 1
        %s1188 = scalar_select %p1187, %s43, 1
        %s1189 = smul.addr %s1188, 4
        %s1190 = smul.addr %s1189, 4
        %s1191 = scalar_lea.vmem %s18, %s1190
        %p1192 = scmp.lt.s32.totalorder %s43, 1
        %s1193 = scalar_select %p1192, %s43, 1
        %s1194 = scalar_lea.vmem %s19, %s1193
        %p1195 = scmp.lt.s32.totalorder %s43, 1
        %s1196 = scalar_select %p1195, %s43, 1
        %s1197 = smul.addr %s1196, 16
        %s1198 = smul.addr %s1197, 4
        %s1199 = scalar_lea.vmem %s20, %s1198
        %p1200 = scmp.lt.s32.totalorder %s43, 1
        %s1201 = scalar_select %p1200, %s43, 1
        %s1202 = scalar_lea.vmem %s21, %s1201
        %p1203 = scmp.lt.s32.totalorder %s43, 1
        %s1204 = scalar_select %p1203, %s43, 1
        %s1205 = scalar_lea.vmem %s22, %s1204
        %p1206 = scmp.lt.s32.totalorder %s43, 1
        %s1207 = scalar_select %p1206, %s43, 1
        %s1208 = scalar_lea.vmem %s23, %s1207
        %p1209 = scmp.lt.s32.totalorder %s42, 1
        %s1210 = scalar_select %p1209, %s42, 1
        %s1211 = smul.addr %s1210, 8
        %s1212 = scalar_lea.vmem %s24, %s1211
        %p1214 = scmp.eq.s32.totalorder %s43, 0
        // Predicated region
        $region117: #{decoder_forward.4} parent=115 // pred_check
          %p1215 = pneg %p1214
        $region118: #{decoder_forward.4} parent=115 // pred_check_branch
          %1217 = sbr.rel (%p1215) target = $region120
        $region119: #{decoder_forward.4} parent=115 // pred_region
          %v1218 = vld [vmem:[%s1114] sm:$0xff]
          %vm1219 = vcmask 261120
          %1220 = vst.msk [vmem:[%s1212] sm:$0xff] %vm1219, %v1218
        $region120: #{decoder_forward.4} parent=115 // pred_fallthru
          _
        %v1221 = vld [vmem:[%s1212] sm:$0xff]
        %v1222 = vpack.c.bf16 %v1221, %v1221
        %v1223 = vld [vmem:[%s1138] sm:$0xf]
        %v1224 = vld [vmem:[%s1138 + $0x4] sm:$0xf]
        %v1225 = vld [vmem:[%s1138 + $0x8] sm:$0xf]
        %v1226 = vld [vmem:[%s1138 + $0xc] sm:$0xf]
        %v1231 = vunpack.c.l.b16 %v1223
        %v1232 = vunpack.c.l.b16 %v1224
        %v1233 = vunpack.c.l.b16 %v1225
        %v1234 = vunpack.c.l.b16 %v1226
        %v1235 = vpack.c.b16 %v1232, %v1231
        %v1236 = vpack.c.b16 %v1234, %v1233
        %vm1239 = vcmask 261120
        %v1241 = vsel %vm1239, %v1222, 0
        %1243 = vmatprep.subr.bf16.mxu0 0
        %1244 = vmatpush1.bf16.msra.mxu0 %v1235
        %1245 = vmatprep.subr.bf16.mxu0 0
        %1246 = vmatpush1.bf16.msra.mxu0 %v1236
        %1247 = vmatprep.subr.bf16.mxu0 0
        %1248 = vmatpush1.bf16.msra.mxu0 0
        %1249 = vmatprep.subr.bf16.mxu0 0
        %1250 = vmatpush1.bf16.msra.mxu0 0
        %1251 = vmatprep.subr.bf16.mxu0 0
        %1252 = vmatpush1.bf16.msra.mxu0 0
        %1253 = vmatprep.subr.bf16.mxu0 0
        %1254 = vmatpush1.bf16.msra.mxu0 0
        %1255 = vmatprep.subr.bf16.mxu0 0
        %1256 = vmatpush1.bf16.msra.mxu0 0
        %1257 = vmatprep.subr.bf16.mxu0 0
        %1258 = vmatpush1.bf16.msra.mxu0 0
        %1259 = vmatprep.subr.bf16.mxu0 0
        %1260 = vmatpush1.bf16.msra.mxu0 0
        %1261 = vmatprep.subr.bf16.mxu0 0
        %1262 = vmatpush1.bf16.msra.mxu0 0
        %1263 = vmatprep.subr.bf16.mxu0 0
        %1264 = vmatpush1.bf16.msra.mxu0 0
        %1265 = vmatprep.subr.bf16.mxu0 0
        %1266 = vmatpush1.bf16.msra.mxu0 0
        %1267 = vmatprep.subr.bf16.mxu0 0
        %1268 = vmatpush1.bf16.msra.mxu0 0
        %1269 = vmatprep.subr.bf16.mxu0 0
        %1270 = vmatpush1.bf16.msra.mxu0 0
        %1271 = vmatprep.subr.bf16.mxu0 0
        %1272 = vmatpush1.bf16.msra.mxu0 0
        %1273 = vmatprep.subr.bf16.mxu0 0
        %1274 = vmatpush1.bf16.msra.mxu0 0
        %1275 = vmatprep.mubr.bf16.mxu0 0
        %1276 = vmatmul.mubr.bf16.gmra.mrb[0].mxu0 %v1241
        %v1277 = vpop.f32.mrb[0].mxu0
        %v1278 = vadd.f32 0.0, %v1277
        %v1279 = vpop.f32.mrb[0].mxu0
        %v1280 = vpop.f32.mrb[0].mxu0
        %v1281 = vpop.f32.mrb[0].mxu0
        %1282 = vdwg.mxu0
        loop: start=0, step=1, limit=4
        $region121: #{decoder_forward.4} parent=115 // loop_pre_header
          _
        $region122: #{decoder_forward.4} parent=115 // loop_header
          %s1284 = sphi 0, %s1288
          %p1285 = scmp.ge.s32.totalorder %s1284, 4
          %v1289 = vphi %v1278, %v1635
        $region123: #{decoder_forward.4} parent=115 // loop_header_branch
          %1287 = sbr.rel (%p1285) target = $region127
        $region124: #{decoder_forward.4} parent=115 // loop_body
          %s1290 = smul.u32 %s1284, 4
          %s1291 = smul.addr %s1290, 4
          %s1292 = scalar_lea.vmem %s1123, %s1291
          %v1293 = vld [vmem:[%s1292] sm:$0xf]
          %v1294 = vld [vmem:[%s1292 + $0x4] sm:$0xf]
          %v1295 = vld [vmem:[%s1292 + $0x8] sm:$0xf]
          %v1296 = vld [vmem:[%s1292 + $0xc] sm:$0xf]
          %v1301 = vunpack.c.l.b16 %v1293
          %v1302 = vunpack.c.l.b16 %v1294
          %v1303 = vunpack.c.l.b16 %v1295
          %v1304 = vunpack.c.l.b16 %v1296
          %v1305 = vpack.c.b16 %v1302, %v1301
          %v1306 = vpack.c.b16 %v1304, %v1303
          %1309 = vmatprep.subr.bf16.mxu0 0
          %1310 = vmatpush1.bf16.msra.mxu0 %v1305
          %1311 = vmatprep.subr.bf16.mxu0 0
          %1312 = vmatpush1.bf16.msra.mxu0 %v1306
          %1313 = vmatprep.subr.bf16.mxu0 0
          %1314 = vmatpush1.bf16.msra.mxu0 0
          %1315 = vmatprep.subr.bf16.mxu0 0
          %1316 = vmatpush1.bf16.msra.mxu0 0
          %1317 = vmatprep.subr.bf16.mxu0 0
          %1318 = vmatpush1.bf16.msra.mxu0 0
          %1319 = vmatprep.subr.bf16.mxu0 0
          %1320 = vmatpush1.bf16.msra.mxu0 0
          %1321 = vmatprep.subr.bf16.mxu0 0
          %1322 = vmatpush1.bf16.msra.mxu0 0
          %1323 = vmatprep.subr.bf16.mxu0 0
          %1324 = vmatpush1.bf16.msra.mxu0 0
          %1325 = vmatprep.subr.bf16.mxu0 0
          %1326 = vmatpush1.bf16.msra.mxu0 0
          %1327 = vmatprep.subr.bf16.mxu0 0
          %1328 = vmatpush1.bf16.msra.mxu0 0
          %1329 = vmatprep.subr.bf16.mxu0 0
          %1330 = vmatpush1.bf16.msra.mxu0 0
          %1331 = vmatprep.subr.bf16.mxu0 0
          %1332 = vmatpush1.bf16.msra.mxu0 0
          %1333 = vmatprep.subr.bf16.mxu0 0
          %1334 = vmatpush1.bf16.msra.mxu0 0
          %1335 = vmatprep.subr.bf16.mxu0 0
          %1336 = vmatpush1.bf16.msra.mxu0 0
          %1337 = vmatprep.subr.bf16.mxu0 0
          %1338 = vmatpush1.bf16.msra.mxu0 0
          %1339 = vmatprep.subr.bf16.mxu0 0
          %1340 = vmatpush1.bf16.msra.mxu0 0
          %1341 = vmatprep.mubr.bf16.mxu0 0
          %1342 = vmatmul.mubr.bf16.gmra.mrb[0].mxu0 %v1241
          %v1343 = vpop.f32.mrb[0].mxu0
          %v1344 = vadd.f32 0.0, %v1343
          %v1345 = vpop.f32.mrb[0].mxu0
          %v1346 = vpop.f32.mrb[0].mxu0
          %v1347 = vpop.f32.mrb[0].mxu0
          %1348 = vdwg.mxu0
          %v1349 = vpack.c.bf16 %v1344, %v1344
          %s1350 = smul.addr %s1290, 4
          %s1351 = scalar_lea.vmem %s1128, %s1350
          %v1352 = vld [vmem:[%s1351] sm:$0xf]
          %v1353 = vld [vmem:[%s1351 + $0x4] sm:$0xf]
          %v1354 = vld [vmem:[%s1351 + $0x8] sm:$0xf]
          %v1355 = vld [vmem:[%s1351 + $0xc] sm:$0xf]
          %v1360 = vunpack.c.l.b16 %v1352
          %v1361 = vunpack.c.l.b16 %v1353
          %v1362 = vunpack.c.l.b16 %v1354
          %v1363 = vunpack.c.l.b16 %v1355
          %v1364 = vpack.c.b16 %v1361, %v1360
          %v1365 = vpack.c.b16 %v1363, %v1362
          %1368 = vmatprep.subr.bf16.mxu0 0
          %1369 = vmatpush1.bf16.msra.mxu0 %v1364
          %1370 = vmatprep.subr.bf16.mxu0 0
          %1371 = vmatpush1.bf16.msra.mxu0 %v1365
          %1372 = vmatprep.subr.bf16.mxu0 0
          %1373 = vmatpush1.bf16.msra.mxu0 0
          %1374 = vmatprep.subr.bf16.mxu0 0
          %1375 = vmatpush1.bf16.msra.mxu0 0
          %1376 = vmatprep.subr.bf16.mxu0 0
          %1377 = vmatpush1.bf16.msra.mxu0 0
          %1378 = vmatprep.subr.bf16.mxu0 0
          %1379 = vmatpush1.bf16.msra.mxu0 0
          %1380 = vmatprep.subr.bf16.mxu0 0
          %1381 = vmatpush1.bf16.msra.mxu0 0
          %1382 = vmatprep.subr.bf16.mxu0 0
          %1383 = vmatpush1.bf16.msra.mxu0 0
          %1384 = vmatprep.subr.bf16.mxu0 0
          %1385 = vmatpush1.bf16.msra.mxu0 0
          %1386 = vmatprep.subr.bf16.mxu0 0
          %1387 = vmatpush1.bf16.msra.mxu0 0
          %1388 = vmatprep.subr.bf16.mxu0 0
          %1389 = vmatpush1.bf16.msra.mxu0 0
          %1390 = vmatprep.subr.bf16.mxu0 0
          %1391 = vmatpush1.bf16.msra.mxu0 0
          %1392 = vmatprep.subr.bf16.mxu0 0
          %1393 = vmatpush1.bf16.msra.mxu0 0
          %1394 = vmatprep.subr.bf16.mxu0 0
          %1395 = vmatpush1.bf16.msra.mxu0 0
          %1396 = vmatprep.subr.bf16.mxu0 0
          %1397 = vmatpush1.bf16.msra.mxu0 0
          %1398 = vmatprep.subr.bf16.mxu0 0
          %1399 = vmatpush1.bf16.msra.mxu0 0
          %1400 = vmatprep.mubr.bf16.mxu0 0
          %1401 = vmatmul.mubr.bf16.gmra.mrb[0].mxu0 %v1241
          %v1402 = vpop.f32.mrb[0].mxu0
          %v1403 = vadd.f32 0.0, %v1402
          %v1404 = vpop.f32.mrb[0].mxu0
          %v1405 = vpop.f32.mrb[0].mxu0
          %v1406 = vpop.f32.mrb[0].mxu0
          %1407 = vdwg.mxu0
          %v1408 = vpack.c.bf16 %v1403, %v1403
          %s1409 = smul.addr %s1290, 4
          %s1410 = scalar_lea.vmem %s1133, %s1409
          %v1411 = vld [vmem:[%s1410] sm:$0xf]
          %v1412 = vld [vmem:[%s1410 + $0x4] sm:$0xf]
          %v1413 = vld [vmem:[%s1410 + $0x8] sm:$0xf]
          %v1414 = vld [vmem:[%s1410 + $0xc] sm:$0xf]
          %v1419 = vunpack.c.l.b16 %v1411
          %v1420 = vunpack.c.l.b16 %v1412
          %v1421 = vunpack.c.l.b16 %v1413
          %v1422 = vunpack.c.l.b16 %v1414
          %v1423 = vpack.c.b16 %v1420, %v1419
          %v1424 = vpack.c.b16 %v1422, %v1421
          %1427 = vmatprep.subr.bf16.mxu0 0
          %1428 = vmatpush1.bf16.msra.mxu0 %v1423
          %1429 = vmatprep.subr.bf16.mxu0 0
          %1430 = vmatpush1.bf16.msra.mxu0 %v1424
          %1431 = vmatprep.subr.bf16.mxu0 0
          %1432 = vmatpush1.bf16.msra.mxu0 0
          %1433 = vmatprep.subr.bf16.mxu0 0
          %1434 = vmatpush1.bf16.msra.mxu0 0
          %1435 = vmatprep.subr.bf16.mxu0 0
          %1436 = vmatpush1.bf16.msra.mxu0 0
          %1437 = vmatprep.subr.bf16.mxu0 0
          %1438 = vmatpush1.bf16.msra.mxu0 0
          %1439 = vmatprep.subr.bf16.mxu0 0
          %1440 = vmatpush1.bf16.msra.mxu0 0
          %1441 = vmatprep.subr.bf16.mxu0 0
          %1442 = vmatpush1.bf16.msra.mxu0 0
          %1443 = vmatprep.subr.bf16.mxu0 0
          %1444 = vmatpush1.bf16.msra.mxu0 0
          %1445 = vmatprep.subr.bf16.mxu0 0
          %1446 = vmatpush1.bf16.msra.mxu0 0
          %1447 = vmatprep.subr.bf16.mxu0 0
          %1448 = vmatpush1.bf16.msra.mxu0 0
          %1449 = vmatprep.subr.bf16.mxu0 0
          %1450 = vmatpush1.bf16.msra.mxu0 0
          %1451 = vmatprep.subr.bf16.mxu0 0
          %1452 = vmatpush1.bf16.msra.mxu0 0
          %1453 = vmatprep.subr.bf16.mxu0 0
          %1454 = vmatpush1.bf16.msra.mxu0 0
          %1455 = vmatprep.subr.bf16.mxu0 0
          %1456 = vmatpush1.bf16.msra.mxu0 0
          %1457 = vmatprep.subr.bf16.mxu0 0
          %1458 = vmatpush1.bf16.msra.mxu0 0
          %1459 = vmatprep.mubr.bf16.mxu0 0
          %1460 = vmatmul.mubr.bf16.gmra.mrb[0].mxu0 %v1241
          %v1461 = vpop.f32.mrb[0].mxu0
          %v1462 = vadd.f32 0.0, %v1461
          %v1463 = vpop.f32.mrb[0].mxu0
          %v1464 = vpop.f32.mrb[0].mxu0
          %v1465 = vpop.f32.mrb[0].mxu0
          %1466 = vdwg.mxu0
          %v1467 = vpack.c.bf16 %v1462, %v1462
          %vm1468 = vcmask 64512
          %v1470 = vsel %vm1468, %v1349, 0
          %v1473 = vsel %vm1468, %v1408, 0
          %1475 = vmatprep.subr.bf16.mxu0 0
          %1476 = vmatpush1.bf16.xpose.msra.mxu0 %v1473
          %1477 = vmatprep.subr.bf16.mxu0 0
          %1478 = vmatpush1.bf16.xpose.msra.mxu0 0
          %1479 = vmatprep.subr.bf16.mxu0 0
          %1480 = vmatpush1.bf16.xpose.msra.mxu0 0
          %1481 = vmatprep.subr.bf16.mxu0 0
          %1482 = vmatpush1.bf16.xpose.msra.mxu0 0
          %1483 = vmatprep.subr.bf16.mxu0 0
          %1484 = vmatpush1.bf16.xpose.msra.mxu0 0
          %1485 = vmatprep.subr.bf16.mxu0 0
          %1486 = vmatpush1.bf16.xpose.msra.mxu0 0
          %1487 = vmatprep.subr.bf16.mxu0 0
          %1488 = vmatpush1.bf16.xpose.msra.mxu0 0
          %1489 = vmatprep.subr.bf16.mxu0 0
          %1490 = vmatpush1.bf16.xpose.msra.mxu0 0
          %1491 = vmatprep.subr.bf16.mxu0 0
          %1492 = vmatpush1.bf16.xpose.msra.mxu0 0
          %1493 = vmatprep.subr.bf16.mxu0 0
          %1494 = vmatpush1.bf16.xpose.msra.mxu0 0
          %1495 = vmatprep.subr.bf16.mxu0 0
          %1496 = vmatpush1.bf16.xpose.msra.mxu0 0
          %1497 = vmatprep.subr.bf16.mxu0 0
          %1498 = vmatpush1.bf16.xpose.msra.mxu0 0
          %1499 = vmatprep.subr.bf16.mxu0 0
          %1500 = vmatpush1.bf16.xpose.msra.mxu0 0
          %1501 = vmatprep.subr.bf16.mxu0 0
          %1502 = vmatpush1.bf16.xpose.msra.mxu0 0
          %1503 = vmatprep.subr.bf16.mxu0 0
          %1504 = vmatpush1.bf16.xpose.msra.mxu0 0
          %1505 = vmatprep.subr.bf16.mxu0 0
          %1506 = vmatpush1.bf16.xpose.msra.mxu0 0
          %1507 = vmatprep.mubr.bf16.mxu0 0
          %1508 = vmatmul.mubr.bf16.gmra.mrb[0].mxu0 %v1470
          %v1509 = vpop.f32.mrb[0].mxu0
          %v1510 = vadd.f32 0.0, %v1509
          %v1511 = vpop.f32.mrb[0].mxu0
          %v1512 = vpop.f32.mrb[0].mxu0
          %v1513 = vpop.f32.mrb[0].mxu0
          %1514 = vdwg.mxu0
          %v1515 = vmul.f32 %v1510, 0.35355338
          %v1516 = vlaneseq
          %v1517 = vshrl.u32 %v1516, 7
          %v1518 = vlaneseq
          %v1519 = vand.u32 %v1518, 127
          %vm1520 = vcmp.gt.s32.totalorder %v1519, %v1517
          %v1521 = vsel %vm1520, -4.2949673e+09, %v1515
          %v1522 = vsel %vm1468, %v1521, -inf
          %1523 = vmax.xlane.f32.xlu0 %v1522
          %v1524 = vpop.xlane.xlu0 %1523
          %v1525 = vsub.f32 %v1521, %v1524
          %v1526 = vmul.f32 %v1525, 1.442695
          %v1527 = vpow.pop %v1526
          %v1528 = vsel %vm1468, %v1527, 0.0
          %1529 = vadd.xlane.f32.xlu0 %v1528
          %v1530 = vpop.xlane.xlu0 %1529
          %v1531 = vrcp.pop %v1530
          %v1532 = vmul.f32 %v1527, %v1531
          %v1533 = vpack.c.bf16 %v1532, %v1532
          %s1534 = smul.addr %s1284, 4
          %s1535 = scalar_lea.vmem %s1104, %s1534 [#allocation2]
          %vm1536 = vcmask 60416
          %1537 = vst.msk [vmem:[%s1535] sm:$0xf] %vm1536, %v1533
          %v1539 = vsel %vm1468, %v1533, 0
          %vm1541 = vcmask 1043456
          %v1543 = vsel %vm1541, %v1467, 0
          %1545 = vmatprep.subr.bf16.mxu0 0
          %1546 = vmatpush1.bf16.msra.mxu0 %v1543
          %1547 = vmatprep.subr.bf16.mxu0 0
          %1548 = vmatpush1.bf16.msra.mxu0 0
          %1549 = vmatprep.subr.bf16.mxu0 0
          %1550 = vmatpush1.bf16.msra.mxu0 0
          %1551 = vmatprep.subr.bf16.mxu0 0
          %1552 = vmatpush1.bf16.msra.mxu0 0
          %1553 = vmatprep.subr.bf16.mxu0 0
          %1554 = vmatpush1.bf16.msra.mxu0 0
          %1555 = vmatprep.subr.bf16.mxu0 0
          %1556 = vmatpush1.bf16.msra.mxu0 0
          %1557 = vmatprep.subr.bf16.mxu0 0
          %1558 = vmatpush1.bf16.msra.mxu0 0
          %1559 = vmatprep.subr.bf16.mxu0 0
          %1560 = vmatpush1.bf16.msra.mxu0 0
          %1561 = vmatprep.subr.bf16.mxu0 0
          %1562 = vmatpush1.bf16.msra.mxu0 0
          %1563 = vmatprep.subr.bf16.mxu0 0
          %1564 = vmatpush1.bf16.msra.mxu0 0
          %1565 = vmatprep.subr.bf16.mxu0 0
          %1566 = vmatpush1.bf16.msra.mxu0 0
          %1567 = vmatprep.subr.bf16.mxu0 0
          %1568 = vmatpush1.bf16.msra.mxu0 0
          %1569 = vmatprep.subr.bf16.mxu0 0
          %1570 = vmatpush1.bf16.msra.mxu0 0
          %1571 = vmatprep.subr.bf16.mxu0 0
          %1572 = vmatpush1.bf16.msra.mxu0 0
          %1573 = vmatprep.subr.bf16.mxu0 0
          %1574 = vmatpush1.bf16.msra.mxu0 0
          %1575 = vmatprep.subr.bf16.mxu0 0
          %1576 = vmatpush1.bf16.msra.mxu0 0
          %1577 = vmatprep.mubr.bf16.mxu0 0
          %1578 = vmatmul.mubr.bf16.gmra.mrb[0].mxu0 %v1539
          %v1579 = vpop.f32.mrb[0].mxu0
          %v1580 = vadd.f32 0.0, %v1579
          %v1581 = vpop.f32.mrb[0].mxu0
          %v1582 = vpop.f32.mrb[0].mxu0
          %v1583 = vpop.f32.mrb[0].mxu0
          %1584 = vdwg.mxu0
          %v1585 = vpack.c.bf16 %v1580, %v1580
          %s1586 = smul.addr %s1284, 4
          %s1587 = scalar_lea.vmem %s1143, %s1586
          %v1588 = vld [vmem:[%s1587] sm:$0xf]
          %v1590 = vsel %vm1468, %v1585, 0
          %v1593 = vsel %vm1541, %v1588, 0
          %1595 = vmatprep.subr.bf16.mxu0 0
          %1596 = vmatpush1.bf16.msra.mxu0 %v1593
          %1597 = vmatprep.subr.bf16.mxu0 0
          %1598 = vmatpush1.bf16.msra.mxu0 0
          %1599 = vmatprep.subr.bf16.mxu0 0
          %1600 = vmatpush1.bf16.msra.mxu0 0
          %1601 = vmatprep.subr.bf16.mxu0 0
          %1602 = vmatpush1.bf16.msra.mxu0 0
          %1603 = vmatprep.subr.bf16.mxu0 0
          %1604 = vmatpush1.bf16.msra.mxu0 0
          %1605 = vmatprep.subr.bf16.mxu0 0
          %1606 = vmatpush1.bf16.msra.mxu0 0
          %1607 = vmatprep.subr.bf16.mxu0 0
          %1608 = vmatpush1.bf16.msra.mxu0 0
          %1609 = vmatprep.subr.bf16.mxu0 0
          %1610 = vmatpush1.bf16.msra.mxu0 0
          %1611 = vmatprep.subr.bf16.mxu0 0
          %1612 = vmatpush1.bf16.msra.mxu0 0
          %1613 = vmatprep.subr.bf16.mxu0 0
          %1614 = vmatpush1.bf16.msra.mxu0 0
          %1615 = vmatprep.subr.bf16.mxu0 0
          %1616 = vmatpush1.bf16.msra.mxu0 0
          %1617 = vmatprep.subr.bf16.mxu0 0
          %1618 = vmatpush1.bf16.msra.mxu0 0
          %1619 = vmatprep.subr.bf16.mxu0 0
          %1620 = vmatpush1.bf16.msra.mxu0 0
          %1621 = vmatprep.subr.bf16.mxu0 0
          %1622 = vmatpush1.bf16.msra.mxu0 0
          %1623 = vmatprep.subr.bf16.mxu0 0
          %1624 = vmatpush1.bf16.msra.mxu0 0
          %1625 = vmatprep.subr.bf16.mxu0 0
          %1626 = vmatpush1.bf16.msra.mxu0 0
          %1627 = vmatprep.mubr.bf16.mxu0 0
          %1628 = vmatmul.mubr.bf16.gmra.mrb[0].mxu0 %v1590
          %v1629 = vpop.f32.mrb[0].mxu0
          %v1630 = vadd.f32 0.0, %v1629
          %v1631 = vpop.f32.mrb[0].mxu0
          %v1632 = vpop.f32.mrb[0].mxu0
          %v1633 = vpop.f32.mrb[0].mxu0
          %1634 = vdwg.mxu0
          %v1635 = vadd.f32 %v1289, %v1630
        $region125: #{decoder_forward.4} parent=115 // loop_footer
          %s1288 = sadd.s32 1, %s1284
        $region126: #{decoder_forward.4} parent=115 // loop_footer_branch
          %1283 = sbr.rel target = $region122
        $region127: #{decoder_forward.4} parent=115 // loop_exit
          _
        %v1636 = vld [vmem:[%s1146] sm:$0x1]
        %v1638 = vlaneseq
        %v1639 = vshrl.u32 %v1638, 7
        %v1640 = vsub.s32 0, %v1639
        %v1641 = vrot.slane %v1636, %v1640
        %v1643 = vadd.f32 %v1289, %v1641
        %v1644 = vadd.f32 %v1643, %v1221
        %v1645 = vsel %vm1239, %v1644, 0.0
        %1646 = vadd.xlane.f32.xlu0 %v1645
        %v1647 = vpop.xlane.xlu0 %1646
        %v1648 = vrcp.pop 32.0
        %v1649 = vmul.f32 %v1647, %v1648
        %v1650 = vsub.f32 %v1644, %v1649
        %v1651 = vmul.f32 %v1650, %v1650
        %v1652 = vsel %vm1239, %v1651, 0.0
        %1653 = vadd.xlane.f32.xlu0 %v1652
        %v1654 = vpop.xlane.xlu0 %1653
        %v1655 = vmul.f32 %v1654, %v1648
        %v1656 = vadd.f32 %v1655, 1e-05
        %v1657 = vrsqrt.pop %v1656
        %v1658 = vmul.f32 %v1650, %v1657
        %v1659 = vld [vmem:[%s1149] sm:$0x1]
        %v1661 = vlaneseq
        %v1662 = vshrl.u32 %v1661, 7
        %v1663 = vsub.s32 0, %v1662
        %v1664 = vrot.slane %v1659, %v1663
        %v1666 = vmul.f32 %v1658, %v1664
        %v1667 = vld [vmem:[%s1152] sm:$0x1]
        %v1669 = vlaneseq
        %v1670 = vshrl.u32 %v1669, 7
        %v1671 = vsub.s32 0, %v1670
        %v1672 = vrot.slane %v1667, %v1671
        %v1674 = vadd.f32 %v1666, %v1672
        %v1675 = vpack.c.bf16 %v1674, %v1674
        %v1676 = vld [vmem:[%s1118] sm:$0xf]
        %v1677 = vld [vmem:[%s1172] sm:$0xf]
        %v1678 = vld [vmem:[%s1172 + $0x4] sm:$0xf]
        %v1679 = vld [vmem:[%s1172 + $0x8] sm:$0xf]
        %v1680 = vld [vmem:[%s1172 + $0xc] sm:$0xf]
        %v1685 = vunpack.c.l.b16 %v1677
        %v1686 = vunpack.c.l.b16 %v1678
        %v1687 = vunpack.c.l.b16 %v1679
        %v1688 = vunpack.c.l.b16 %v1680
        %v1689 = vpack.c.b16 %v1686, %v1685
        %v1690 = vpack.c.b16 %v1688, %v1687
        %v1694 = vsel %vm1239, %v1675, 0
        %1696 = vmatprep.subr.bf16.mxu0 0
        %1697 = vmatpush1.bf16.msra.mxu0 %v1689
        %1698 = vmatprep.subr.bf16.mxu0 0
        %1699 = vmatpush1.bf16.msra.mxu0 %v1690
        %1700 = vmatprep.subr.bf16.mxu0 0
        %1701 = vmatpush1.bf16.msra.mxu0 0
        %1702 = vmatprep.subr.bf16.mxu0 0
        %1703 = vmatpush1.bf16.msra.mxu0 0
        %1704 = vmatprep.subr.bf16.mxu0 0
        %1705 = vmatpush1.bf16.msra.mxu0 0
        %1706 = vmatprep.subr.bf16.mxu0 0
        %1707 = vmatpush1.bf16.msra.mxu0 0
        %1708 = vmatprep.subr.bf16.mxu0 0
        %1709 = vmatpush1.bf16.msra.mxu0 0
        %1710 = vmatprep.subr.bf16.mxu0 0
        %1711 = vmatpush1.bf16.msra.mxu0 0
        %1712 = vmatprep.subr.bf16.mxu0 0
        %1713 = vmatpush1.bf16.msra.mxu0 0
        %1714 = vmatprep.subr.bf16.mxu0 0
        %1715 = vmatpush1.bf16.msra.mxu0 0
        %1716 = vmatprep.subr.bf16.mxu0 0
        %1717 = vmatpush1.bf16.msra.mxu0 0
        %1718 = vmatprep.subr.bf16.mxu0 0
        %1719 = vmatpush1.bf16.msra.mxu0 0
        %1720 = vmatprep.subr.bf16.mxu0 0
        %1721 = vmatpush1.bf16.msra.mxu0 0
        %1722 = vmatprep.subr.bf16.mxu0 0
        %1723 = vmatpush1.bf16.msra.mxu0 0
        %1724 = vmatprep.subr.bf16.mxu0 0
        %1725 = vmatpush1.bf16.msra.mxu0 0
        %1726 = vmatprep.subr.bf16.mxu0 0
        %1727 = vmatpush1.bf16.msra.mxu0 0
        %1728 = vmatprep.mubr.bf16.mxu0 0
        %1729 = vmatmul.mubr.bf16.gmra.mrb[0].mxu0 %v1694
        %v1730 = vpop.f32.mrb[0].mxu0
        %v1731 = vadd.f32 0.0, %v1730
        %v1732 = vpop.f32.mrb[0].mxu0
        %v1733 = vpop.f32.mrb[0].mxu0
        %v1734 = vpop.f32.mrb[0].mxu0
        %1735 = vdwg.mxu0
        loop: start=0, step=1, limit=4
        $region128: #{decoder_forward.4} parent=115 // loop_pre_header
          _
        $region129: #{decoder_forward.4} parent=115 // loop_header
          %s1737 = sphi 0, %s1741
          %p1738 = scmp.ge.s32.totalorder %s1737, 4
          %v1742 = vphi %v1731, %v2085
        $region130: #{decoder_forward.4} parent=115 // loop_header_branch
          %1740 = sbr.rel (%p1738) target = $region134
        $region131: #{decoder_forward.4} parent=115 // loop_body
          %s1743 = smul.u32 %s1737, 4
          %s1744 = smul.addr %s1743, 4
          %s1745 = scalar_lea.vmem %s1157, %s1744
          %v1746 = vld [vmem:[%s1745] sm:$0xf]
          %v1747 = vld [vmem:[%s1745 + $0x4] sm:$0xf]
          %v1748 = vld [vmem:[%s1745 + $0x8] sm:$0xf]
          %v1749 = vld [vmem:[%s1745 + $0xc] sm:$0xf]
          %v1754 = vunpack.c.l.b16 %v1746
          %v1755 = vunpack.c.l.b16 %v1747
          %v1756 = vunpack.c.l.b16 %v1748
          %v1757 = vunpack.c.l.b16 %v1749
          %v1758 = vpack.c.b16 %v1755, %v1754
          %v1759 = vpack.c.b16 %v1757, %v1756
          %1762 = vmatprep.subr.bf16.mxu0 0
          %1763 = vmatpush1.bf16.msra.mxu0 %v1758
          %1764 = vmatprep.subr.bf16.mxu0 0
          %1765 = vmatpush1.bf16.msra.mxu0 %v1759
          %1766 = vmatprep.subr.bf16.mxu0 0
          %1767 = vmatpush1.bf16.msra.mxu0 0
          %1768 = vmatprep.subr.bf16.mxu0 0
          %1769 = vmatpush1.bf16.msra.mxu0 0
          %1770 = vmatprep.subr.bf16.mxu0 0
          %1771 = vmatpush1.bf16.msra.mxu0 0
          %1772 = vmatprep.subr.bf16.mxu0 0
          %1773 = vmatpush1.bf16.msra.mxu0 0
          %1774 = vmatprep.subr.bf16.mxu0 0
          %1775 = vmatpush1.bf16.msra.mxu0 0
          %1776 = vmatprep.subr.bf16.mxu0 0
          %1777 = vmatpush1.bf16.msra.mxu0 0
          %1778 = vmatprep.subr.bf16.mxu0 0
          %1779 = vmatpush1.bf16.msra.mxu0 0
          %1780 = vmatprep.subr.bf16.mxu0 0
          %1781 = vmatpush1.bf16.msra.mxu0 0
          %1782 = vmatprep.subr.bf16.mxu0 0
          %1783 = vmatpush1.bf16.msra.mxu0 0
          %1784 = vmatprep.subr.bf16.mxu0 0
          %1785 = vmatpush1.bf16.msra.mxu0 0
          %1786 = vmatprep.subr.bf16.mxu0 0
          %1787 = vmatpush1.bf16.msra.mxu0 0
          %1788 = vmatprep.subr.bf16.mxu0 0
          %1789 = vmatpush1.bf16.msra.mxu0 0
          %1790 = vmatprep.subr.bf16.mxu0 0
          %1791 = vmatpush1.bf16.msra.mxu0 0
          %1792 = vmatprep.subr.bf16.mxu0 0
          %1793 = vmatpush1.bf16.msra.mxu0 0
          %1794 = vmatprep.mubr.bf16.mxu0 0
          %1795 = vmatmul.mubr.bf16.gmra.mrb[0].mxu0 %v1694
          %v1796 = vpop.f32.mrb[0].mxu0
          %v1797 = vadd.f32 0.0, %v1796
          %v1798 = vpop.f32.mrb[0].mxu0
          %v1799 = vpop.f32.mrb[0].mxu0
          %v1800 = vpop.f32.mrb[0].mxu0
          %1801 = vdwg.mxu0
          %v1802 = vpack.c.bf16 %v1797, %v1797
          %s1803 = smul.addr %s1743, 4
          %s1804 = scalar_lea.vmem %s1162, %s1803
          %v1805 = vld [vmem:[%s1804] sm:$0xf]
          %v1806 = vld [vmem:[%s1804 + $0x4] sm:$0xf]
          %v1807 = vld [vmem:[%s1804 + $0x8] sm:$0xf]
          %v1808 = vld [vmem:[%s1804 + $0xc] sm:$0xf]
          %v1813 = vunpack.c.l.b16 %v1805
          %v1814 = vunpack.c.l.b16 %v1806
          %v1815 = vunpack.c.l.b16 %v1807
          %v1816 = vunpack.c.l.b16 %v1808
          %v1817 = vpack.c.b16 %v1814, %v1813
          %v1818 = vpack.c.b16 %v1816, %v1815
          %v1822 = vsel %vm1239, %v1676, 0
          %1824 = vmatprep.subr.bf16.mxu0 0
          %1825 = vmatpush1.bf16.msra.mxu0 %v1817
          %1826 = vmatprep.subr.bf16.mxu0 0
          %1827 = vmatpush1.bf16.msra.mxu0 %v1818
          %1828 = vmatprep.subr.bf16.mxu0 0
          %1829 = vmatpush1.bf16.msra.mxu0 0
          %1830 = vmatprep.subr.bf16.mxu0 0
          %1831 = vmatpush1.bf16.msra.mxu0 0
          %1832 = vmatprep.subr.bf16.mxu0 0
          %1833 = vmatpush1.bf16.msra.mxu0 0
          %1834 = vmatprep.subr.bf16.mxu0 0
          %1835 = vmatpush1.bf16.msra.mxu0 0
          %1836 = vmatprep.subr.bf16.mxu0 0
          %1837 = vmatpush1.bf16.msra.mxu0 0
          %1838 = vmatprep.subr.bf16.mxu0 0
          %1839 = vmatpush1.bf16.msra.mxu0 0
          %1840 = vmatprep.subr.bf16.mxu0 0
          %1841 = vmatpush1.bf16.msra.mxu0 0
          %1842 = vmatprep.subr.bf16.mxu0 0
          %1843 = vmatpush1.bf16.msra.mxu0 0
          %1844 = vmatprep.subr.bf16.mxu0 0
          %1845 = vmatpush1.bf16.msra.mxu0 0
          %1846 = vmatprep.subr.bf16.mxu0 0
          %1847 = vmatpush1.bf16.msra.mxu0 0
          %1848 = vmatprep.subr.bf16.mxu0 0
          %1849 = vmatpush1.bf16.msra.mxu0 0
          %1850 = vmatprep.subr.bf16.mxu0 0
          %1851 = vmatpush1.bf16.msra.mxu0 0
          %1852 = vmatprep.subr.bf16.mxu0 0
          %1853 = vmatpush1.bf16.msra.mxu0 0
          %1854 = vmatprep.subr.bf16.mxu0 0
          %1855 = vmatpush1.bf16.msra.mxu0 0
          %1856 = vmatprep.mubr.bf16.mxu0 0
          %1857 = vmatmul.mubr.bf16.gmra.mrb[0].mxu0 %v1822
          %v1858 = vpop.f32.mrb[0].mxu0
          %v1859 = vadd.f32 0.0, %v1858
          %v1860 = vpop.f32.mrb[0].mxu0
          %v1861 = vpop.f32.mrb[0].mxu0
          %v1862 = vpop.f32.mrb[0].mxu0
          %1863 = vdwg.mxu0
          %v1864 = vpack.c.bf16 %v1859, %v1859
          %s1865 = smul.addr %s1743, 4
          %s1866 = scalar_lea.vmem %s1167, %s1865
          %v1867 = vld [vmem:[%s1866] sm:$0xf]
          %v1868 = vld [vmem:[%s1866 + $0x4] sm:$0xf]
          %v1869 = vld [vmem:[%s1866 + $0x8] sm:$0xf]
          %v1870 = vld [vmem:[%s1866 + $0xc] sm:$0xf]
          %v1875 = vunpack.c.l.b16 %v1867
          %v1876 = vunpack.c.l.b16 %v1868
          %v1877 = vunpack.c.l.b16 %v1869
          %v1878 = vunpack.c.l.b16 %v1870
          %v1879 = vpack.c.b16 %v1876, %v1875
          %v1880 = vpack.c.b16 %v1878, %v1877
          %1883 = vmatprep.subr.bf16.mxu0 0
          %1884 = vmatpush1.bf16.msra.mxu0 %v1879
          %1885 = vmatprep.subr.bf16.mxu0 0
          %1886 = vmatpush1.bf16.msra.mxu0 %v1880
          %1887 = vmatprep.subr.bf16.mxu0 0
          %1888 = vmatpush1.bf16.msra.mxu0 0
          %1889 = vmatprep.subr.bf16.mxu0 0
          %1890 = vmatpush1.bf16.msra.mxu0 0
          %1891 = vmatprep.subr.bf16.mxu0 0
          %1892 = vmatpush1.bf16.msra.mxu0 0
          %1893 = vmatprep.subr.bf16.mxu0 0
          %1894 = vmatpush1.bf16.msra.mxu0 0
          %1895 = vmatprep.subr.bf16.mxu0 0
          %1896 = vmatpush1.bf16.msra.mxu0 0
          %1897 = vmatprep.subr.bf16.mxu0 0
          %1898 = vmatpush1.bf16.msra.mxu0 0
          %1899 = vmatprep.subr.bf16.mxu0 0
          %1900 = vmatpush1.bf16.msra.mxu0 0
          %1901 = vmatprep.subr.bf16.mxu0 0
          %1902 = vmatpush1.bf16.msra.mxu0 0
          %1903 = vmatprep.subr.bf16.mxu0 0
          %1904 = vmatpush1.bf16.msra.mxu0 0
          %1905 = vmatprep.subr.bf16.mxu0 0
          %1906 = vmatpush1.bf16.msra.mxu0 0
          %1907 = vmatprep.subr.bf16.mxu0 0
          %1908 = vmatpush1.bf16.msra.mxu0 0
          %1909 = vmatprep.subr.bf16.mxu0 0
          %1910 = vmatpush1.bf16.msra.mxu0 0
          %1911 = vmatprep.subr.bf16.mxu0 0
          %1912 = vmatpush1.bf16.msra.mxu0 0
          %1913 = vmatprep.subr.bf16.mxu0 0
          %1914 = vmatpush1.bf16.msra.mxu0 0
          %1915 = vmatprep.mubr.bf16.mxu0 0
          %1916 = vmatmul.mubr.bf16.gmra.mrb[0].mxu0 %v1822
          %v1917 = vpop.f32.mrb[0].mxu0
          %v1918 = vadd.f32 0.0, %v1917
          %v1919 = vpop.f32.mrb[0].mxu0
          %v1920 = vpop.f32.mrb[0].mxu0
          %v1921 = vpop.f32.mrb[0].mxu0
          %1922 = vdwg.mxu0
          %v1923 = vpack.c.bf16 %v1918, %v1918
          %vm1924 = vcmask 64512
          %v1926 = vsel %vm1924, %v1802, 0
          %v1929 = vsel %vm1924, %v1864, 0
          %1931 = vmatprep.subr.bf16.mxu0 0
          %1932 = vmatpush1.bf16.xpose.msra.mxu0 %v1929
          %1933 = vmatprep.subr.bf16.mxu0 0
          %1934 = vmatpush1.bf16.xpose.msra.mxu0 0
          %1935 = vmatprep.subr.bf16.mxu0 0
          %1936 = vmatpush1.bf16.xpose.msra.mxu0 0
          %1937 = vmatprep.subr.bf16.mxu0 0
          %1938 = vmatpush1.bf16.xpose.msra.mxu0 0
          %1939 = vmatprep.subr.bf16.mxu0 0
          %1940 = vmatpush1.bf16.xpose.msra.mxu0 0
          %1941 = vmatprep.subr.bf16.mxu0 0
          %1942 = vmatpush1.bf16.xpose.msra.mxu0 0
          %1943 = vmatprep.subr.bf16.mxu0 0
          %1944 = vmatpush1.bf16.xpose.msra.mxu0 0
          %1945 = vmatprep.subr.bf16.mxu0 0
          %1946 = vmatpush1.bf16.xpose.msra.mxu0 0
          %1947 = vmatprep.subr.bf16.mxu0 0
          %1948 = vmatpush1.bf16.xpose.msra.mxu0 0
          %1949 = vmatprep.subr.bf16.mxu0 0
          %1950 = vmatpush1.bf16.xpose.msra.mxu0 0
          %1951 = vmatprep.subr.bf16.mxu0 0
          %1952 = vmatpush1.bf16.xpose.msra.mxu0 0
          %1953 = vmatprep.subr.bf16.mxu0 0
          %1954 = vmatpush1.bf16.xpose.msra.mxu0 0
          %1955 = vmatprep.subr.bf16.mxu0 0
          %1956 = vmatpush1.bf16.xpose.msra.mxu0 0
          %1957 = vmatprep.subr.bf16.mxu0 0
          %1958 = vmatpush1.bf16.xpose.msra.mxu0 0
          %1959 = vmatprep.subr.bf16.mxu0 0
          %1960 = vmatpush1.bf16.xpose.msra.mxu0 0
          %1961 = vmatprep.subr.bf16.mxu0 0
          %1962 = vmatpush1.bf16.xpose.msra.mxu0 0
          %1963 = vmatprep.mubr.bf16.mxu0 0
          %1964 = vmatmul.mubr.bf16.gmra.mrb[0].mxu0 %v1926
          %v1965 = vpop.f32.mrb[0].mxu0
          %v1966 = vadd.f32 0.0, %v1965
          %v1967 = vpop.f32.mrb[0].mxu0
          %v1968 = vpop.f32.mrb[0].mxu0
          %v1969 = vpop.f32.mrb[0].mxu0
          %1970 = vdwg.mxu0
          %v1971 = vmul.f32 %v1966, 0.35355338
          %v1972 = vsel %vm1924, %v1971, -inf
          %1973 = vmax.xlane.f32.xlu0 %v1972
          %v1974 = vpop.xlane.xlu0 %1973
          %v1975 = vsub.f32 %v1971, %v1974
          %v1976 = vmul.f32 %v1975, 1.442695
          %v1977 = vpow.pop %v1976
          %v1978 = vsel %vm1924, %v1977, 0.0
          %1979 = vadd.xlane.f32.xlu0 %v1978
          %v1980 = vpop.xlane.xlu0 %1979
          %v1981 = vrcp.pop %v1980
          %v1982 = vmul.f32 %v1977, %v1981
          %v1983 = vpack.c.bf16 %v1982, %v1982
          %s1984 = smul.addr %s1737, 4
          %s1985 = scalar_lea.vmem %s1110, %s1984 [#allocation3]
          %vm1986 = vcmask 60416
          %1987 = vst.msk [vmem:[%s1985] sm:$0xf] %vm1986, %v1983
          %v1989 = vsel %vm1924, %v1983, 0
          %vm1991 = vcmask 1043456
          %v1993 = vsel %vm1991, %v1923, 0
          %1995 = vmatprep.subr.bf16.mxu0 0
          %1996 = vmatpush1.bf16.msra.mxu0 %v1993
          %1997 = vmatprep.subr.bf16.mxu0 0
          %1998 = vmatpush1.bf16.msra.mxu0 0
          %1999 = vmatprep.subr.bf16.mxu0 0
          %2000 = vmatpush1.bf16.msra.mxu0 0
          %2001 = vmatprep.subr.bf16.mxu0 0
          %2002 = vmatpush1.bf16.msra.mxu0 0
          %2003 = vmatprep.subr.bf16.mxu0 0
          %2004 = vmatpush1.bf16.msra.mxu0 0
          %2005 = vmatprep.subr.bf16.mxu0 0
          %2006 = vmatpush1.bf16.msra.mxu0 0
          %2007 = vmatprep.subr.bf16.mxu0 0
          %2008 = vmatpush1.bf16.msra.mxu0 0
          %2009 = vmatprep.subr.bf16.mxu0 0
          %2010 = vmatpush1.bf16.msra.mxu0 0
          %2011 = vmatprep.subr.bf16.mxu0 0
          %2012 = vmatpush1.bf16.msra.mxu0 0
          %2013 = vmatprep.subr.bf16.mxu0 0
          %2014 = vmatpush1.bf16.msra.mxu0 0
          %2015 = vmatprep.subr.bf16.mxu0 0
          %2016 = vmatpush1.bf16.msra.mxu0 0
          %2017 = vmatprep.subr.bf16.mxu0 0
          %2018 = vmatpush1.bf16.msra.mxu0 0
          %2019 = vmatprep.subr.bf16.mxu0 0
          %2020 = vmatpush1.bf16.msra.mxu0 0
          %2021 = vmatprep.subr.bf16.mxu0 0
          %2022 = vmatpush1.bf16.msra.mxu0 0
          %2023 = vmatprep.subr.bf16.mxu0 0
          %2024 = vmatpush1.bf16.msra.mxu0 0
          %2025 = vmatprep.subr.bf16.mxu0 0
          %2026 = vmatpush1.bf16.msra.mxu0 0
          %2027 = vmatprep.mubr.bf16.mxu0 0
          %2028 = vmatmul.mubr.bf16.gmra.mrb[0].mxu0 %v1989
          %v2029 = vpop.f32.mrb[0].mxu0
          %v2030 = vadd.f32 0.0, %v2029
          %v2031 = vpop.f32.mrb[0].mxu0
          %v2032 = vpop.f32.mrb[0].mxu0
          %v2033 = vpop.f32.mrb[0].mxu0
          %2034 = vdwg.mxu0
          %v2035 = vpack.c.bf16 %v2030, %v2030
          %s2036 = smul.addr %s1737, 4
          %s2037 = scalar_lea.vmem %s1177, %s2036
          %v2038 = vld [vmem:[%s2037] sm:$0xf]
          %v2040 = vsel %vm1924, %v2035, 0
          %v2043 = vsel %vm1991, %v2038, 0
          %2045 = vmatprep.subr.bf16.mxu0 0
          %2046 = vmatpush1.bf16.msra.mxu0 %v2043
          %2047 = vmatprep.subr.bf16.mxu0 0
          %2048 = vmatpush1.bf16.msra.mxu0 0
          %2049 = vmatprep.subr.bf16.mxu0 0
          %2050 = vmatpush1.bf16.msra.mxu0 0
          %2051 = vmatprep.subr.bf16.mxu0 0
          %2052 = vmatpush1.bf16.msra.mxu0 0
          %2053 = vmatprep.subr.bf16.mxu0 0
          %2054 = vmatpush1.bf16.msra.mxu0 0
          %2055 = vmatprep.subr.bf16.mxu0 0
          %2056 = vmatpush1.bf16.msra.mxu0 0
          %2057 = vmatprep.subr.bf16.mxu0 0
          %2058 = vmatpush1.bf16.msra.mxu0 0
          %2059 = vmatprep.subr.bf16.mxu0 0
          %2060 = vmatpush1.bf16.msra.mxu0 0
          %2061 = vmatprep.subr.bf16.mxu0 0
          %2062 = vmatpush1.bf16.msra.mxu0 0
          %2063 = vmatprep.subr.bf16.mxu0 0
          %2064 = vmatpush1.bf16.msra.mxu0 0
          %2065 = vmatprep.subr.bf16.mxu0 0
          %2066 = vmatpush1.bf16.msra.mxu0 0
          %2067 = vmatprep.subr.bf16.mxu0 0
          %2068 = vmatpush1.bf16.msra.mxu0 0
          %2069 = vmatprep.subr.bf16.mxu0 0
          %2070 = vmatpush1.bf16.msra.mxu0 0
          %2071 = vmatprep.subr.bf16.mxu0 0
          %2072 = vmatpush1.bf16.msra.mxu0 0
          %2073 = vmatprep.subr.bf16.mxu0 0
          %2074 = vmatpush1.bf16.msra.mxu0 0
          %2075 = vmatprep.subr.bf16.mxu0 0
          %2076 = vmatpush1.bf16.msra.mxu0 0
          %2077 = vmatprep.mubr.bf16.mxu0 0
          %2078 = vmatmul.mubr.bf16.gmra.mrb[0].mxu0 %v2040
          %v2079 = vpop.f32.mrb[0].mxu0
          %v2080 = vadd.f32 0.0, %v2079
          %v2081 = vpop.f32.mrb[0].mxu0
          %v2082 = vpop.f32.mrb[0].mxu0
          %v2083 = vpop.f32.mrb[0].mxu0
          %2084 = vdwg.mxu0
          %v2085 = vadd.f32 %v1742, %v2080
        $region132: #{decoder_forward.4} parent=115 // loop_footer
          %s1741 = sadd.s32 1, %s1737
        $region133: #{decoder_forward.4} parent=115 // loop_footer_branch
          %1736 = sbr.rel target = $region129
        $region134: #{decoder_forward.4} parent=115 // loop_exit
          _
        %v2086 = vld [vmem:[%s1180] sm:$0x1]
        %v2088 = vlaneseq
        %v2089 = vshrl.u32 %v2088, 7
        %v2090 = vsub.s32 0, %v2089
        %v2091 = vrot.slane %v2086, %v2090
        %v2093 = vadd.f32 %v1742, %v2091
        %v2094 = vadd.f32 %v2093, %v1674
        %v2095 = vsel %vm1239, %v2094, 0.0
        %2096 = vadd.xlane.f32.xlu0 %v2095
        %v2097 = vpop.xlane.xlu0 %2096
        %v2098 = vmul.f32 %v2097, %v1648
        %v2099 = vsub.f32 %v2094, %v2098
        %v2100 = vmul.f32 %v2099, %v2099
        %v2101 = vsel %vm1239, %v2100, 0.0
        %2102 = vadd.xlane.f32.xlu0 %v2101
        %v2103 = vpop.xlane.xlu0 %2102
        %v2104 = vmul.f32 %v2103, %v1648
        %v2105 = vadd.f32 %v2104, 1e-05
        %v2106 = vrsqrt.pop %v2105
        %v2107 = vmul.f32 %v2099, %v2106
        %v2108 = vld [vmem:[%s1183] sm:$0x1]
        %v2110 = vlaneseq
        %v2111 = vshrl.u32 %v2110, 7
        %v2112 = vsub.s32 0, %v2111
        %v2113 = vrot.slane %v2108, %v2112
        %v2115 = vmul.f32 %v2107, %v2113
        %v2116 = vld [vmem:[%s1186] sm:$0x1]
        %v2118 = vlaneseq
        %v2119 = vshrl.u32 %v2118, 7
        %v2120 = vsub.s32 0, %v2119
        %v2121 = vrot.slane %v2116, %v2120
        %v2123 = vadd.f32 %v2115, %v2121
        %2124 = vst.msk [vmem:[%s1212] sm:$0xff] %vm1239, %v2123
        %v2125 = vld [vmem:[%s1212] sm:$0xff]
        %v2126 = vpack.c.bf16 %v2125, %v2125
        %v2127 = vld [vmem:[%s1191] sm:$0xf]
        %v2128 = vld [vmem:[%s1191 + $0x4] sm:$0xf]
        %v2129 = vld [vmem:[%s1191 + $0x8] sm:$0xf]
        %v2130 = vld [vmem:[%s1191 + $0xc] sm:$0xf]
        %v2131 = vld [vmem:[%s1194] sm:$0x1]
        %v2133 = vlaneseq
        %v2134 = vshrl.u32 %v2133, 7
        %v2135 = vsub.s32 0, %v2134
        %v2136 = vrot.slane %v2131, %v2135
        %v2142 = vunpack.c.l.b16 %v2127
        %v2143 = vunpack.c.l.b16 %v2128
        %v2144 = vunpack.c.l.b16 %v2129
        %v2145 = vunpack.c.l.b16 %v2130
        %v2146 = vpack.c.b16 %v2143, %v2142
        %v2147 = vpack.c.b16 %v2145, %v2144
        %v2151 = vsel %vm1239, %v2126, 0
        %2153 = vmatprep.subr.bf16.mxu0 0
        %2154 = vmatpush1.bf16.msra.mxu0 %v2146
        %2155 = vmatprep.subr.bf16.mxu0 0
        %2156 = vmatpush1.bf16.msra.mxu0 %v2147
        %2157 = vmatprep.subr.bf16.mxu0 0
        %2158 = vmatpush1.bf16.msra.mxu0 0
        %2159 = vmatprep.subr.bf16.mxu0 0
        %2160 = vmatpush1.bf16.msra.mxu0 0
        %2161 = vmatprep.subr.bf16.mxu0 0
        %2162 = vmatpush1.bf16.msra.mxu0 0
        %2163 = vmatprep.subr.bf16.mxu0 0
        %2164 = vmatpush1.bf16.msra.mxu0 0
        %2165 = vmatprep.subr.bf16.mxu0 0
        %2166 = vmatpush1.bf16.msra.mxu0 0
        %2167 = vmatprep.subr.bf16.mxu0 0
        %2168 = vmatpush1.bf16.msra.mxu0 0
        %2169 = vmatprep.subr.bf16.mxu0 0
        %2170 = vmatpush1.bf16.msra.mxu0 0
        %2171 = vmatprep.subr.bf16.mxu0 0
        %2172 = vmatpush1.bf16.msra.mxu0 0
        %2173 = vmatprep.subr.bf16.mxu0 0
        %2174 = vmatpush1.bf16.msra.mxu0 0
        %2175 = vmatprep.subr.bf16.mxu0 0
        %2176 = vmatpush1.bf16.msra.mxu0 0
        %2177 = vmatprep.subr.bf16.mxu0 0
        %2178 = vmatpush1.bf16.msra.mxu0 0
        %2179 = vmatprep.subr.bf16.mxu0 0
        %2180 = vmatpush1.bf16.msra.mxu0 0
        %2181 = vmatprep.subr.bf16.mxu0 0
        %2182 = vmatpush1.bf16.msra.mxu0 0
        %2183 = vmatprep.subr.bf16.mxu0 0
        %2184 = vmatpush1.bf16.msra.mxu0 0
        %2185 = vmatprep.mubr.bf16.mxu0 0
        %2186 = vmatmul.mubr.bf16.gmra.mrb[0].mxu0 %v2151
        %v2187 = vpop.f32.mrb[0].mxu0
        %v2188 = vadd.f32 %v2136, %v2187
        %v2189 = vpop.f32.mrb[0].mxu0
        %v2190 = vpop.f32.mrb[0].mxu0
        %v2191 = vpop.f32.mrb[0].mxu0
        %2192 = vdwg.mxu0
        %v2193 = vmax.f32 %v2188, 0.0
        %v2194 = vpack.c.bf16 %v2193, %v2193
        %v2195 = vld [vmem:[%s1199] sm:$0xf]
        %v2196 = vld [vmem:[%s1199 + $0x4] sm:$0xf]
        %v2197 = vld [vmem:[%s1199 + $0x8] sm:$0xf]
        %v2198 = vld [vmem:[%s1199 + $0xc] sm:$0xf]
        %v2199 = vld [vmem:[%s1199 + $0x10] sm:$0xf]
        %v2200 = vld [vmem:[%s1199 + $0x14] sm:$0xf]
        %v2201 = vld [vmem:[%s1199 + $0x18] sm:$0xf]
        %v2202 = vld [vmem:[%s1199 + $0x1c] sm:$0xf]
        %v2203 = vld [vmem:[%s1199 + $0x20] sm:$0xf]
        %v2204 = vld [vmem:[%s1199 + $0x24] sm:$0xf]
        %v2205 = vld [vmem:[%s1199 + $0x28] sm:$0xf]
        %v2206 = vld [vmem:[%s1199 + $0x2c] sm:$0xf]
        %v2207 = vld [vmem:[%s1199 + $0x30] sm:$0xf]
        %v2208 = vld [vmem:[%s1199 + $0x34] sm:$0xf]
        %v2209 = vld [vmem:[%s1199 + $0x38] sm:$0xf]
        %v2210 = vld [vmem:[%s1199 + $0x3c] sm:$0xf]
        %v2211 = vld [vmem:[%s1202] sm:$0x1]
        %v2213 = vlaneseq
        %v2214 = vshrl.u32 %v2213, 7
        %v2215 = vsub.s32 0, %v2214
        %v2216 = vrot.slane %v2211, %v2215
        %v2234 = vunpack.c.l.b16 %v2195
        %v2235 = vunpack.c.l.b16 %v2196
        %v2236 = vunpack.c.l.b16 %v2197
        %v2237 = vunpack.c.l.b16 %v2198
        %v2238 = vunpack.c.l.b16 %v2199
        %v2239 = vunpack.c.l.b16 %v2200
        %v2240 = vunpack.c.l.b16 %v2201
        %v2241 = vunpack.c.l.b16 %v2202
        %v2242 = vunpack.c.l.b16 %v2203
        %v2243 = vunpack.c.l.b16 %v2204
        %v2244 = vunpack.c.l.b16 %v2205
        %v2245 = vunpack.c.l.b16 %v2206
        %v2246 = vunpack.c.l.b16 %v2207
        %v2247 = vunpack.c.l.b16 %v2208
        %v2248 = vunpack.c.l.b16 %v2209
        %v2249 = vunpack.c.l.b16 %v2210
        %v2250 = vpack.c.b16 %v2235, %v2234
        %v2251 = vpack.c.b16 %v2237, %v2236
        %v2252 = vpack.c.b16 %v2239, %v2238
        %v2253 = vpack.c.b16 %v2241, %v2240
        %v2254 = vpack.c.b16 %v2243, %v2242
        %v2255 = vpack.c.b16 %v2245, %v2244
        %v2256 = vpack.c.b16 %v2247, %v2246
        %v2257 = vpack.c.b16 %v2249, %v2248
        %2266 = vmatprep.subr.bf16.mxu0 0
        %2267 = vmatpush1.bf16.msra.mxu0 %v2250
        %2268 = vmatprep.subr.bf16.mxu0 0
        %2269 = vmatpush1.bf16.msra.mxu0 %v2251
        %2270 = vmatprep.subr.bf16.mxu0 0
        %2271 = vmatpush1.bf16.msra.mxu0 %v2252
        %2272 = vmatprep.subr.bf16.mxu0 0
        %2273 = vmatpush1.bf16.msra.mxu0 %v2253
        %2274 = vmatprep.subr.bf16.mxu0 0
        %2275 = vmatpush1.bf16.msra.mxu0 %v2254
        %2276 = vmatprep.subr.bf16.mxu0 0
        %2277 = vmatpush1.bf16.msra.mxu0 %v2255
        %2278 = vmatprep.subr.bf16.mxu0 0
        %2279 = vmatpush1.bf16.msra.mxu0 %v2256
        %2280 = vmatprep.subr.bf16.mxu0 0
        %2281 = vmatpush1.bf16.msra.mxu0 %v2257
        %2282 = vmatprep.subr.bf16.mxu0 0
        %2283 = vmatpush1.bf16.msra.mxu0 0
        %2284 = vmatprep.subr.bf16.mxu0 0
        %2285 = vmatpush1.bf16.msra.mxu0 0
        %2286 = vmatprep.subr.bf16.mxu0 0
        %2287 = vmatpush1.bf16.msra.mxu0 0
        %2288 = vmatprep.subr.bf16.mxu0 0
        %2289 = vmatpush1.bf16.msra.mxu0 0
        %2290 = vmatprep.subr.bf16.mxu0 0
        %2291 = vmatpush1.bf16.msra.mxu0 0
        %2292 = vmatprep.subr.bf16.mxu0 0
        %2293 = vmatpush1.bf16.msra.mxu0 0
        %2294 = vmatprep.subr.bf16.mxu0 0
        %2295 = vmatpush1.bf16.msra.mxu0 0
        %2296 = vmatprep.subr.bf16.mxu0 0
        %2297 = vmatpush1.bf16.msra.mxu0 0
        %2298 = vmatprep.mubr.bf16.mxu0 0
        %2299 = vmatmul.mubr.bf16.gmra.mrb[0].mxu0 %v2194
        %v2300 = vpop.f32.mrb[0].mxu0
        %v2301 = vadd.f32 %v2216, %v2300
        %v2302 = vpop.f32.mrb[0].mxu0
        %v2303 = vpop.f32.mrb[0].mxu0
        %v2304 = vpop.f32.mrb[0].mxu0
        %2305 = vdwg.mxu0
        %v2306 = vadd.f32 %v2301, %v2125
        %v2307 = vsel %vm1239, %v2306, 0.0
        %2308 = vadd.xlane.f32.xlu0 %v2307
        %v2309 = vpop.xlane.xlu0 %2308
        %v2310 = vmul.f32 %v2309, %v1648
        %v2311 = vsub.f32 %v2306, %v2310
        %v2312 = vmul.f32 %v2311, %v2311
        %v2313 = vsel %vm1239, %v2312, 0.0
        %2314 = vadd.xlane.f32.xlu0 %v2313
        %v2315 = vpop.xlane.xlu0 %2314
        %v2316 = vmul.f32 %v2315, %v1648
        %v2317 = vadd.f32 %v2316, 1e-05
        %v2318 = vrsqrt.pop %v2317
        %v2319 = vmul.f32 %v2311, %v2318
        %v2320 = vld [vmem:[%s1205] sm:$0x1]
        %v2322 = vlaneseq
        %v2323 = vshrl.u32 %v2322, 7
        %v2324 = vsub.s32 0, %v2323
        %v2325 = vrot.slane %v2320, %v2324
        %v2327 = vmul.f32 %v2319, %v2325
        %v2328 = vld [vmem:[%s1208] sm:$0x1]
        %v2330 = vlaneseq
        %v2331 = vshrl.u32 %v2330, 7
        %v2332 = vsub.s32 0, %v2331
        %v2333 = vrot.slane %v2328, %v2332
        %v2335 = vadd.f32 %v2327, %v2333
        %2336 = vst.msk [vmem:[%s1212] sm:$0xff] %vm1239, %v2335
        %p2337 = scmp.lt.s32.totalorder %s42, 1
        %s2338 = scalar_select %p2337, %s42, 1
        %s2339 = smul.addr %s2338, 8
        %s2340 = scalar_lea.vmem %s24, %s2339
        %s2341 = sand.u32 %s710, 1
        %s2342 = sand.u32 %s710, 1
        %s2343 = smul.addr %s2342, 16
        %s2344 = scalar_lea.vmem [#allocation2], %s2343
        %s2345 = sand.u32 %s738, 1
        %s2346 = sand.u32 %s738, 1
        %s2347 = smul.addr %s2346, 16
        %s2348 = scalar_lea.vmem [#allocation3], %s2347
        // Predicated region
        $region135: #{decoder_forward.4} parent=115 // pred_check
          %p2349 = pneg %p692
        $region136: #{decoder_forward.4} parent=115 // pred_check_branch
          %2351 = sbr.rel (%p2349) target = $region138
        $region137: #{decoder_forward.4} parent=115 // pred_region
          _
        $region138: #{decoder_forward.4} parent=115 // pred_fallthru
          _
        // Predicated region
        $region139: #{decoder_forward.4} parent=115 // pred_check
          %p2352 = pneg %p720
        $region140: #{decoder_forward.4} parent=115 // pred_check_branch
          %2354 = sbr.rel (%p2352) target = $region142
        $region141: #{decoder_forward.4} parent=115 // pred_region
          %s2355 = smul.addr %s43, 8
          %s2356 = sadd.s32 %s42, %s2355
          %s2357 = smul.addr %s2356, 4
          %s2358 = scalar_lea.vmem %s25, %s2357
          // Predicated region
          $region143: #{decoder_forward.4} parent=141 // pred_check
            _
          $region144: #{decoder_forward.4} parent=141 // pred_check_branch
            %2360 = sbr.rel (0) target = $region146
          $region145: #{decoder_forward.4} parent=141 // pred_region
            // Predicated region
            $region147: #{decoder_forward.4} parent=145 // pred_check
              _
            $region148: #{decoder_forward.4} parent=145 // pred_check_branch
              %2362 = sbr.rel target = $region150
            $region149: #{decoder_forward.4} parent=145 // pred_region
              // Predicated region
              $region162: #{decoder_forward.4} parent=149 // pred_check
                _
              $region163: #{decoder_forward.4} parent=149 // pred_check_branch
                %2383 = sbr.rel (0) target = $region165
              $region164: #{decoder_forward.4} parent=149 // pred_region
                loop: start=0, step=1, limit=1
                $region166: #{decoder_forward.4} parent=164 // loop_pre_header
                  _
                $region167: #{decoder_forward.4} parent=164 // loop_header
                  %s2385 = sphi 0, %s2389
                  %p2386 = scmp.ge.s32.totalorder %s2385, 1
                  %s2390 = sphi %s2344, %s2344
                  %s2391 = sphi %s2358, %s2358
                $region168: #{decoder_forward.4} parent=164 // loop_header_branch
                  %2388 = sbr.rel (%p2386) target = $region172
                $region169: #{decoder_forward.4} parent=164 // loop_body
                  _
                $region170: #{decoder_forward.4} parent=164 // loop_footer
                  %s2389 = sadd.s32 1, %s2385
                $region171: #{decoder_forward.4} parent=164 // loop_footer_branch
                  %2384 = sbr.rel target = $region167
                $region172: #{decoder_forward.4} parent=164 // loop_exit
                  _
                loop: start=0, step=1, limit=1
                $region173: #{decoder_forward.4} parent=164 // loop_pre_header
                  _
                $region174: #{decoder_forward.4} parent=164 // loop_header
                  %s2394 = sphi 0, %s2398
                  %p2395 = scmp.ge.s32.totalorder %s2394, 1
                  %s2399 = sphi %s2344, %s2344
                  %s2400 = sphi %s2358, %s2358
                $region175: #{decoder_forward.4} parent=164 // loop_header_branch
                  %2397 = sbr.rel (%p2395) target = $region179
                $region176: #{decoder_forward.4} parent=164 // loop_body
                  %v2401 = vld [vmem:[%s2399] sm:$0xf]
                  %2402 = vst [vmem:[%s2400] sm:$0xf] %v2401
                  %v2403 = vld [vmem:[%s2399 + $0x4] sm:$0xf]
                  %2404 = vst [vmem:[%s2400 + $0x8] sm:$0xf] %v2403
                  %v2405 = vld [vmem:[%s2399 + $0x8] sm:$0xf]
                  %2406 = vst [vmem:[%s2400 + $0x10] sm:$0xf] %v2405
                  %v2407 = vld [vmem:[%s2399 + $0xc] sm:$0xf]
                  %2408 = vst [vmem:[%s2400 + $0x18] sm:$0xf] %v2407
                $region177: #{decoder_forward.4} parent=164 // loop_footer
                  %s2398 = sadd.s32 1, %s2394
                $region178: #{decoder_forward.4} parent=164 // loop_footer_branch
                  %2393 = sbr.rel target = $region174
                $region179: #{decoder_forward.4} parent=164 // loop_exit
                  _
              $region165: #{decoder_forward.4} parent=149 // pred_fallthru
                _
            $region150: #{decoder_forward.4} parent=145 // pred_fallthru
              _
            // Predicated region
            $region151: #{decoder_forward.4} parent=145 // pred_check
              _
            $region152: #{decoder_forward.4} parent=145 // pred_check_branch
              %2364 = sbr.rel (0) target = $region154
            $region153: #{decoder_forward.4} parent=145 // pred_region
              loop: start=0, step=1, limit=1
              $region155: #{decoder_forward.4} parent=153 // loop_pre_header
                _
              $region156: #{decoder_forward.4} parent=153 // loop_header
                %s2367 = sphi 0, %s2371
                %p2368 = scmp.ge.s32.totalorder %s2367, 1
                %s2372 = sphi %s2344, %s2344
                %s2373 = sphi %s2358, %s2358
              $region157: #{decoder_forward.4} parent=153 // loop_header_branch
                %2370 = sbr.rel (%p2368) target = $region161
              $region158: #{decoder_forward.4} parent=153 // loop_body
                %v2374 = vld [vmem:[%s2372] sm:$0xf]
                %2375 = vst [vmem:[%s2373] sm:$0xf] %v2374
                %v2376 = vld [vmem:[%s2372 + $0x4] sm:$0xf]
                %2377 = vst [vmem:[%s2373 + $0x8] sm:$0xf] %v2376
                %v2378 = vld [vmem:[%s2372 + $0x8] sm:$0xf]
                %2379 = vst [vmem:[%s2373 + $0x10] sm:$0xf] %v2378
                %v2380 = vld [vmem:[%s2372 + $0xc] sm:$0xf]
                %2381 = vst [vmem:[%s2373 + $0x18] sm:$0xf] %v2380
              $region159: #{decoder_forward.4} parent=153 // loop_footer
                %s2371 = sadd.s32 1, %s2367
              $region160: #{decoder_forward.4} parent=153 // loop_footer_branch
                %2366 = sbr.rel target = $region156
              $region161: #{decoder_forward.4} parent=153 // loop_exit
                _
            $region154: #{decoder_forward.4} parent=145 // pred_fallthru
              _
          $region146: #{decoder_forward.4} parent=141 // pred_fallthru
            _
          %2409 = vnop
        $region142: #{decoder_forward.4} parent=115 // pred_fallthru
          _
        // Predicated region
        $region180: #{decoder_forward.4} parent=115 // pred_check
          %p2410 = pneg %p748
        $region181: #{decoder_forward.4} parent=115 // pred_check_branch
          %2412 = sbr.rel (%p2410) target = $region183
        $region182: #{decoder_forward.4} parent=115 // pred_region
          %s2413 = smul.addr %s43, 8
          %s2414 = sadd.s32 %s42, %s2413
          %s2415 = smul.addr %s2414, 4
          %s2416 = scalar_lea.vmem %s26, %s2415
          // Predicated region
          $region184: #{decoder_forward.4} parent=182 // pred_check
            _
          $region185: #{decoder_forward.4} parent=182 // pred_check_branch
            %2418 = sbr.rel (0) target = $region187
          $region186: #{decoder_forward.4} parent=182 // pred_region
            // Predicated region
            $region188: #{decoder_forward.4} parent=186 // pred_check
              _
            $region189: #{decoder_forward.4} parent=186 // pred_check_branch
              %2420 = sbr.rel target = $region191
            $region190: #{decoder_forward.4} parent=186 // pred_region
              // Predicated region
              $region203: #{decoder_forward.4} parent=190 // pred_check
                _
              $region204: #{decoder_forward.4} parent=190 // pred_check_branch
                %2441 = sbr.rel (0) target = $region206
              $region205: #{decoder_forward.4} parent=190 // pred_region
                loop: start=0, step=1, limit=1
                $region207: #{decoder_forward.4} parent=205 // loop_pre_header
                  _
                $region208: #{decoder_forward.4} parent=205 // loop_header
                  %s2443 = sphi 0, %s2447
                  %p2444 = scmp.ge.s32.totalorder %s2443, 1
                  %s2448 = sphi %s2348, %s2348
                  %s2449 = sphi %s2416, %s2416
                $region209: #{decoder_forward.4} parent=205 // loop_header_branch
                  %2446 = sbr.rel (%p2444) target = $region213
                $region210: #{decoder_forward.4} parent=205 // loop_body
                  _
                $region211: #{decoder_forward.4} parent=205 // loop_footer
                  %s2447 = sadd.s32 1, %s2443
                $region212: #{decoder_forward.4} parent=205 // loop_footer_branch
                  %2442 = sbr.rel target = $region208
                $region213: #{decoder_forward.4} parent=205 // loop_exit
                  _
                loop: start=0, step=1, limit=1
                $region214: #{decoder_forward.4} parent=205 // loop_pre_header
                  _
                $region215: #{decoder_forward.4} parent=205 // loop_header
                  %s2452 = sphi 0, %s2456
                  %p2453 = scmp.ge.s32.totalorder %s2452, 1
                  %s2457 = sphi %s2348, %s2348
                  %s2458 = sphi %s2416, %s2416
                $region216: #{decoder_forward.4} parent=205 // loop_header_branch
                  %2455 = sbr.rel (%p2453) target = $region220
                $region217: #{decoder_forward.4} parent=205 // loop_body
                  %v2459 = vld [vmem:[%s2457] sm:$0xf]
                  %2460 = vst [vmem:[%s2458] sm:$0xf] %v2459
                  %v2461 = vld [vmem:[%s2457 + $0x4] sm:$0xf]
                  %2462 = vst [vmem:[%s2458 + $0x8] sm:$0xf] %v2461
                  %v2463 = vld [vmem:[%s2457 + $0x8] sm:$0xf]
                  %2464 = vst [vmem:[%s2458 + $0x10] sm:$0xf] %v2463
                  %v2465 = vld [vmem:[%s2457 + $0xc] sm:$0xf]
                  %2466 = vst [vmem:[%s2458 + $0x18] sm:$0xf] %v2465
                $region218: #{decoder_forward.4} parent=205 // loop_footer
                  %s2456 = sadd.s32 1, %s2452
                $region219: #{decoder_forward.4} parent=205 // loop_footer_branch
                  %2451 = sbr.rel target = $region215
                $region220: #{decoder_forward.4} parent=205 // loop_exit
                  _
              $region206: #{decoder_forward.4} parent=190 // pred_fallthru
                _
            $region191: #{decoder_forward.4} parent=186 // pred_fallthru
              _
            // Predicated region
            $region192: #{decoder_forward.4} parent=186 // pred_check
              _
            $region193: #{decoder_forward.4} parent=186 // pred_check_branch
              %2422 = sbr.rel (0) target = $region195
            $region194: #{decoder_forward.4} parent=186 // pred_region
              loop: start=0, step=1, limit=1
              $region196: #{decoder_forward.4} parent=194 // loop_pre_header
                _
              $region197: #{decoder_forward.4} parent=194 // loop_header
                %s2425 = sphi 0, %s2429
                %p2426 = scmp.ge.s32.totalorder %s2425, 1
                %s2430 = sphi %s2348, %s2348
                %s2431 = sphi %s2416, %s2416
              $region198: #{decoder_forward.4} parent=194 // loop_header_branch
                %2428 = sbr.rel (%p2426) target = $region202
              $region199: #{decoder_forward.4} parent=194 // loop_body
                %v2432 = vld [vmem:[%s2430] sm:$0xf]
                %2433 = vst [vmem:[%s2431] sm:$0xf] %v2432
                %v2434 = vld [vmem:[%s2430 + $0x4] sm:$0xf]
                %2435 = vst [vmem:[%s2431 + $0x8] sm:$0xf] %v2434
                %v2436 = vld [vmem:[%s2430 + $0x8] sm:$0xf]
                %2437 = vst [vmem:[%s2431 + $0x10] sm:$0xf] %v2436
                %v2438 = vld [vmem:[%s2430 + $0xc] sm:$0xf]
                %2439 = vst [vmem:[%s2431 + $0x18] sm:$0xf] %v2438
              $region200: #{decoder_forward.4} parent=194 // loop_footer
                %s2429 = sadd.s32 1, %s2425
              $region201: #{decoder_forward.4} parent=194 // loop_footer_branch
                %2424 = sbr.rel target = $region197
              $region202: #{decoder_forward.4} parent=194 // loop_exit
                _
            $region195: #{decoder_forward.4} parent=186 // pred_fallthru
              _
          $region187: #{decoder_forward.4} parent=182 // pred_fallthru
            _
          %2467 = vnop
        $region183: #{decoder_forward.4} parent=115 // pred_fallthru
          _
      $region116: #{decoder_forward.4} parent=5 // pred_fallthru
        _
      %p2468 = scmp.le.s32.totalorder 2, %s33
      // Predicated region
      $region221: #{decoder_forward.4} parent=5 // pred_check
        %p2469 = pneg %p2468
      $region222: #{decoder_forward.4} parent=5 // pred_check_branch
        %2471 = sbr.rel (%p2469) target = $region224
      $region223: #{decoder_forward.4} parent=5 // pred_region
        %s2472 = ssub.s32 %s33, 2
        // Predicated region
        $region225: #{decoder_forward.4} parent=223 // pred_check
          %p2473 = pneg %p698
        $region226: #{decoder_forward.4} parent=223 // pred_check_branch
          %2475 = sbr.rel (%p2473) target = $region228
        $region227: #{decoder_forward.4} parent=223 // pred_region
          %p2476 = scmp.lt.s32.totalorder %s44, 1
          %s2477 = scalar_select %p2476, %s44, 1
          %s2478 = smul.addr %s2477, 8
          %s2479 = scalar_lea.vmem %s24, %s2478
        $region228: #{decoder_forward.4} parent=223 // pred_fallthru
          _
        // Predicated region
        $region229: #{decoder_forward.4} parent=223 // pred_check
          %p2480 = pneg %p726
        $region230: #{decoder_forward.4} parent=223 // pred_check_branch
          %2482 = sbr.rel (%p2480) target = $region232
        $region231: #{decoder_forward.4} parent=223 // pred_region
          %s2483 = sand.u32 %s711, 1
          %s2484 = sand.u32 %s711, 1
          %s2485 = smul.addr %s2484, 16
          %s2486 = scalar_lea.vmem [#allocation2], %s2485
        $region232: #{decoder_forward.4} parent=223 // pred_fallthru
          _
        // Predicated region
        $region233: #{decoder_forward.4} parent=223 // pred_check
          %p2487 = pneg %p754
        $region234: #{decoder_forward.4} parent=223 // pred_check_branch
          %2489 = sbr.rel (%p2487) target = $region236
        $region235: #{decoder_forward.4} parent=223 // pred_region
          %s2490 = sand.u32 %s739, 1
          %s2491 = sand.u32 %s739, 1
          %s2492 = smul.addr %s2491, 16
          %s2493 = scalar_lea.vmem [#allocation3], %s2492
        $region236: #{decoder_forward.4} parent=223 // pred_fallthru
          _
      $region224: #{decoder_forward.4} parent=5 // pred_fallthru
        _
    $region6: #{decoder_forward.4} parent=1 // loop_footer
      %s37 = sadd.s32 1, %s33
    $region7: #{decoder_forward.4} parent=1 // loop_footer_branch
      %32 = sbr.rel target = $region3
    $region8: #{decoder_forward.4} parent=1 // loop_exit
      _

</llo_original>
